<compile_context>
chip_gen: v7x
topology: tpu7x:2x2x1
jax: 0.10.0
libtpu: 0.0.40
codegen_flags: <defaults>
</compile_context>

<pallas_src>
import functools

import jax
import jax.numpy as jnp
from jax.experimental import pallas as pl
from jax.experimental.pallas import tpu as pltpu

FILTERING_SIZE = 64
ENVELOPE_SIZE = 64
BN_EPS = 1e-5
ENV_SCALE = 1.0 / FILTERING_SIZE  # conv_envelope weight is fixed to ones/64 by the module


def _round_up(x, m):
    return ((x + m - 1) // m) * m


def _shift_left(v, k):
    """v[..., i] -> v[..., i + k] on a constant-width buffer (XLU rotate).

    Wrap-around only affects the trailing k lanes, which are masked out of the
    BatchNorm statistics or sliced off the final output.
    """
    if k == 0:
        return v
    n = v.shape[-1]
    return pltpu.roll(v, n - k, axis=v.ndim - 1)


def _envelope_kernel(x_ref, wf_ref, bias_ref, o_ref, *, L1, L_out, cpc):
    """One channel group -> its cb * cpc output channels (fused forward).

    x_ref    : (B, 1, cb, LP)            zero-padded input channels (LP % 128 == 0)
    wf_ref   : (1, 32*cpc, cb, 1)        paired symmetric filter taps, tap-major
    bias_ref : (1, cpc, cb, 1)           conv_envelope bias
    o_ref    : (B, 1, cb, cpc*L_out)     lane-dense output block (valid prefix L2)
    """
    B = x_ref.shape[0]
    cb = x_ref.shape[2]
    LP = x_ref.shape[3]

    xc = x_ref[:, 0, :, :]                                   # (B, cb, LP)

    # ---- conv_filtering: depthwise symmetric 'valid' conv via paired taps ----
    # acc_c[b, ch, j] = sum_k w[ch, c, k] * (x[b, ch, j+k] + x[b, ch, j+63-k])
    # Fixed-width rolls run on the XLU and co-issue with the VPU mul-adds.
    # NOTE: static unroll keeps the roll amounts constant; per-iteration
    # temporaries die into the accumulators immediately.
    accs = [jnp.zeros((B, cb, LP), jnp.float32) for _ in range(cpc)]
    for k in range(FILTERING_SIZE // 2):
        pair = _shift_left(xc, k) + _shift_left(xc, FILTERING_SIZE - 1 - k)
        for c in range(cpc):
            wcol = wf_ref[0, k * cpc + c][None]              # (1, cb, 1) aligned load
            accs[c] = accs[c] + wcol * pair

    # ---- BatchNorm1d(affine=False, training) + abs + box-filter envelope ----
    lane = jax.lax.broadcasted_iota(jnp.int32, (1, 1, LP), 2)
    valid = lane < L1                                        # stats over first L1 lanes only
    inv_n = 1.0 / float(B * L1)

    for c in range(cpc):
        acc = accs[c]
        masked = jnp.where(valid, acc, 0.0)
        mean = jnp.sum(jnp.sum(masked, axis=2, keepdims=True),
                       axis=0, keepdims=True) * inv_n        # (1, cb, 1)
        cent = acc - mean
        sq = jnp.where(valid, cent * cent, 0.0)
        var = jnp.sum(jnp.sum(sq, axis=2, keepdims=True),
                      axis=0, keepdims=True) * inv_n         # (1, cb, 1)
        y = jnp.abs(cent) * jax.lax.rsqrt(var + BN_EPS)      # (B, cb, LP)

        # conv_envelope: uniform 64-wide box filter == sliding sum via doubling
        # (6 roll+add steps instead of 64 mul+add taps).
        s = y
        d = 1
        while d < ENVELOPE_SIZE:
            s = s + _shift_left(s, d)
            d *= 2

        env = s[:, :, :L_out] * ENV_SCALE + bias_ref[0, c][None]     # (B, cb, L_out)
        o_ref[:, 0, :, c * L_out:(c + 1) * L_out] = env              # 128-aligned dense store


def _vmem_limit_bytes():
    """Generation-aware scoped-VMEM limit (~75% of physical, capped at 96 MiB)."""
    try:
        cap = int(pltpu.get_tpu_info().vmem_capacity_bytes)
    except Exception:
        cap = 64 * 1024 * 1024                 # conservative (v7x-sized) fallback
    return min(96 * 1024 * 1024, (cap * 3) // 4)


def _pick_channel_block(c_in, cpc, n_batch, lp, budget_bytes):
    """Pick channels-per-grid-step: smallest divisor of c_in that fills the 8
    sublanes (keeps the parallel grid as long as possible for megacore / 2-TC),
    else the biggest divisor whose working set fits the VMEM budget."""
    divisors = [d for d in range(1, c_in + 1) if c_in % d == 0]

    def step_bytes(cb):
        work = (cpc + 4) * n_batch * cb * lp * 4          # accumulators + temporaries
        io = 2 * n_batch * cb * (1 + cpc) * lp * 4        # double-buffered in/out blocks
        return work + io

    ok = [d for d in divisors if step_bytes(d) <= budget_bytes]
    if not ok:
        return 1
    full = [d for d in ok if d >= 8]
    if full:
        return full[0]
    return ok[-1]


def envelope_detector(x, w_filt_raw, w_env, b_env, channels_per_channel):
    """x: (B, C_in, L) float32 -> (B, C_in*cpc, L - 126) float32.

    `w_env` is accepted for API parity with the module but the kernel uses the
    module's fixed uniform envelope weight (ones / FILTERING_SIZE).
    """
    del w_env  # frozen to 1/FILTERING_SIZE by the module spec
    B, c_in, L = x.shape
    cpc = int(channels_per_channel)
    out_ch = c_in * cpc
    L1 = L - FILTERING_SIZE + 1
    L2 = L1 - ENVELOPE_SIZE + 1
    if L2 < 1:
        raise ValueError("input length must be at least 127")
    half = FILTERING_SIZE // 2

    L_out = _round_up(L2, 128)     # lane-dense output length
    LP = _round_up(L, 128)         # lane-dense working width (>= L_out since L2 < L)

    vmem_limit = _vmem_limit_bytes()
    cb = _pick_channel_block(c_in, cpc, B, LP, vmem_limit // 2)
    n_groups = c_in // cb

    # (B, groups, cb, LP): zero-padded, NO transpose and NO cpc-fold repeat in HBM.
    x_pad = jnp.pad(x.astype(jnp.float32), ((0, 0), (0, 0), (0, LP - L)))
    x_pad = x_pad.reshape(B, n_groups, cb, LP)

    # Symmetric() parametrization: w_full[k] == w_full[63-k] == w_raw[k] for k < 32.
    # Lay taps out as (group, k*cpc + c, cb, 1) so each tap is one aligned (cb,1) load.
    wf = w_filt_raw[:, 0, :half].astype(jnp.float32).reshape(n_groups, cb, cpc, half)
    wf = jnp.transpose(wf, (0, 3, 2, 1)).reshape(n_groups, half * cpc, cb)[..., None]

    bias = b_env.astype(jnp.float32).reshape(n_groups, cb, cpc)
    bias = jnp.transpose(bias, (0, 2, 1))[..., None]          # (groups, cpc, cb, 1)

    kernel = functools.partial(_envelope_kernel, L1=L1, L_out=L_out, cpc=cpc)

    out = pl.pallas_call(
        kernel,
        out_shape=jax.ShapeDtypeStruct((B, n_groups, cb, cpc * L_out), jnp.float32),
        grid=(n_groups,),
        in_specs=[
            pl.BlockSpec((B, 1, cb, LP), lambda g: (0, g, 0, 0)),
            pl.BlockSpec((1, half * cpc, cb, 1), lambda g: (g, 0, 0, 0)),
            pl.BlockSpec((1, cpc, cb, 1), lambda g: (g, 0, 0, 0)),
        ],
        out_specs=pl.BlockSpec((B, 1, cb, cpc * L_out), lambda g: (0, g, 0, 0)),
        compiler_params=pltpu.CompilerParams(
            dimension_semantics=("parallel",),
            vmem_limit_bytes=vmem_limit,
        ),
        cost_estimate=pl.CostEstimate(
            flops=2 * B * out_ch * (FILTERING_SIZE * L1 + ENVELOPE_SIZE * L2),
            transcendentals=out_ch,
            bytes_accessed=4 * (x_pad.size + wf.size + bias.size + B * out_ch * L_out),
        ),
    )(x_pad, wf, bias)

    # Row-major (B, groups, cb, cpc*L_out) is exactly PyTorch channel order:
    # the reshape is free (no epilogue transpose).
    out = out.reshape(B, out_ch, L_out)
    return out[:, :, :L2]


# ----------------------------- reference path ------------------------------ #
def apply_symmetric(w_raw):
    """Symmetric parametrization: concat(first half, flipped first half)."""
    k = w_raw.shape[-1]
    left_size = k // 2 + (k % 2)
    right_size = k // 2
    left = w_raw[..., :left_size]
    right = w_raw[..., :right_size][..., ::-1]
    return jnp.concatenate([left, right], axis=-1)


def ref_forward(x, w_filt_raw, w_env, b_env, in_ch, cpc):
    """Pure-JAX reference (lax grouped convs) for correctness check."""
    out_ch = in_ch * cpc
    w_eff = apply_symmetric(w_filt_raw)                                 # (OUT, 1, 64)
    dn = jax.lax.conv_dimension_numbers(x.shape, w_eff.shape, ('NCH', 'OIH', 'NCH'))
    y = jax.lax.conv_general_dilated(x, w_eff, (1,), 'VALID',
                                     dimension_numbers=dn,
                                     feature_group_count=in_ch)
    mean = y.mean(axis=(0, 2), keepdims=True)
    var = ((y - mean) ** 2).mean(axis=(0, 2), keepdims=True)
    y = jnp.abs((y - mean) * jax.lax.rsqrt(var + BN_EPS))
    dn2 = jax.lax.conv_dimension_numbers(y.shape, w_env.shape, ('NCH', 'OIH', 'NCH'))
    z = jax.lax.conv_general_dilated(y, w_env, (1,), 'VALID',
                                     dimension_numbers=dn2,
                                     feature_group_count=out_ch)
    return z + b_env[None, :, None]


if __name__ == "__main__":
    key = jax.random.PRNGKey(0)
    B, C_IN, CPC, L = 2, 4, 2, 256     # small shapes; L >= 127 needed by the two K=64 convs
    OUT = C_IN * CPC

    k1, k2, k3 = jax.random.split(key, 3)
    x = jax.random.normal(k1, (B, C_IN, L), jnp.float32)
    # conv_filtering raw weight (before Symmetric parametrization): (OUT, 1, 64)
    w_filt_raw = 0.1 * jax.random.normal(k2, (OUT, 1, FILTERING_SIZE), jnp.float32)
    # conv_envelope weight is set to ones / FILTERING_SIZE in __init__
    w_env = jnp.ones((OUT, 1, ENVELOPE_SIZE), jnp.float32) / FILTERING_SIZE
    # conv_envelope bias (deterministic synthetic init)
    b_env = 0.01 * jax.random.normal(k3, (OUT,), jnp.float32)

    out = envelope_detector(x, w_filt_raw, w_env, b_env, CPC)
    out = jax.block_until_ready(out)

    ref = ref_forward(x, w_filt_raw, w_env, b_env, C_IN, CPC)
    assert out.shape == (B, OUT, L - FILTERING_SIZE - ENVELOPE_SIZE + 2), out.shape
    err = float(jnp.max(jnp.abs(out - ref)))
    assert jnp.allclose(out, ref, atol=1e-4, rtol=1e-4), err

    print("KERNEL_OK")
</pallas_src>

<mosaic_0001>
module attributes {stable_mosaic.version = 11 : i64} {
  func.func @_envelope_kernel(%arg0: i32, %arg1: memref<2x1x4x256xf32, #tpu.memory_space<vmem>>, %arg2: memref<1x64x4x1xf32, #tpu.memory_space<vmem>>, %arg3: memref<1x2x4x1xf32, #tpu.memory_space<vmem>>, %arg4: memref<2x1x4x512xf32, #tpu.memory_space<vmem>>) attributes {dimension_semantics = [#tpu.dimension_semantics<parallel>], iteration_bounds = array<i64: 1>, scalar_prefetch = 0 : i64, scratch_operands = 0 : i64, tpu.core_type = #tpu.core_type<tc>, window_params = [{transform_indices = @transform_0, window_bounds = array<i64: 2, 1, 4, 256>}, {transform_indices = @transform_1, window_bounds = array<i64: 1, 64, 4, 1>}, {transform_indices = @transform_2, window_bounds = array<i64: 1, 2, 4, 1>}, {transform_indices = @transform_3, window_bounds = array<i64: 2, 1, 4, 512>}]} {
    %c0 = arith.constant 0 : index
    %c0_0 = arith.constant 0 : index
    %c0_1 = arith.constant 0 : index
    %c0_2 = arith.constant 0 : index
    %0 = vector.load %arg1[%c0, %c0_0, %c0_1, %c0_2] : memref<2x1x4x256xf32, #tpu.memory_space<vmem>>, vector<2x1x4x256xf32>
    %1 = vector.shape_cast %0 : vector<2x1x4x256xf32> to vector<2x4x256xf32>
    %cst = arith.constant 0.000000e+00 : f32
    %2 = vector.broadcast %cst : f32 to vector<2x4x256xf32>
    %cst_3 = arith.constant 0.000000e+00 : f32
    %3 = vector.broadcast %cst_3 : f32 to vector<2x4x256xf32>
    %c193_i32 = arith.constant 193 : i32
    %4 = tpu.dynamic_rotate %1 by %c193_i32 dim 2 : vector<2x4x256xf32>, i32 -> vector<2x4x256xf32>
    %5 = arith.addf %1, %4 : vector<2x4x256xf32>
    %c0_4 = arith.constant 0 : index
    %c0_5 = arith.constant 0 : index
    %c0_6 = arith.constant 0 : index
    %c0_7 = arith.constant 0 : index
    %6 = vector.load %arg2[%c0_4, %c0_5, %c0_6, %c0_7] : memref<1x64x4x1xf32, #tpu.memory_space<vmem>>, vector<1x1x4x1xf32>
    %7 = vector.shape_cast %6 : vector<1x1x4x1xf32> to vector<4x1xf32>
    %8 = vector.shape_cast %7 : vector<4x1xf32> to vector<1x4x1xf32>
    %9 = vector.broadcast %8 : vector<1x4x1xf32> to vector<2x4x256xf32>
    %10 = arith.mulf %9, %5 : vector<2x4x256xf32>
    %11 = arith.addf %2, %10 : vector<2x4x256xf32>
    %c0_8 = arith.constant 0 : index
    %c1 = arith.constant 1 : index
    %c0_9 = arith.constant 0 : index
    %c0_10 = arith.constant 0 : index
    %12 = vector.load %arg2[%c0_8, %c1, %c0_9, %c0_10] : memref<1x64x4x1xf32, #tpu.memory_space<vmem>>, vector<1x1x4x1xf32>
    %13 = vector.shape_cast %12 : vector<1x1x4x1xf32> to vector<4x1xf32>
    %14 = vector.shape_cast %13 : vector<4x1xf32> to vector<1x4x1xf32>
    %15 = vector.broadcast %14 : vector<1x4x1xf32> to vector<2x4x256xf32>
    %16 = arith.mulf %15, %5 : vector<2x4x256xf32>
    %17 = arith.addf %3, %16 : vector<2x4x256xf32>
    %c255_i32 = arith.constant 255 : i32
    %18 = tpu.dynamic_rotate %1 by %c255_i32 dim 2 : vector<2x4x256xf32>, i32 -> vector<2x4x256xf32>
    %c194_i32 = arith.constant 194 : i32
    %19 = tpu.dynamic_rotate %1 by %c194_i32 dim 2 : vector<2x4x256xf32>, i32 -> vector<2x4x256xf32>
    %20 = arith.addf %18, %19 : vector<2x4x256xf32>
    %c0_11 = arith.constant 0 : index
    %c2 = arith.constant 2 : index
    %c0_12 = arith.constant 0 : index
    %c0_13 = arith.constant 0 : index
    %21 = vector.load %arg2[%c0_11, %c2, %c0_12, %c0_13] : memref<1x64x4x1xf32, #tpu.memory_space<vmem>>, vector<1x1x4x1xf32>
    %22 = vector.shape_cast %21 : vector<1x1x4x1xf32> to vector<4x1xf32>
    %23 = vector.shape_cast %22 : vector<4x1xf32> to vector<1x4x1xf32>
    %24 = vector.broadcast %23 : vector<1x4x1xf32> to vector<2x4x256xf32>
    %25 = arith.mulf %24, %20 : vector<2x4x256xf32>
    %26 = arith.addf %11, %25 : vector<2x4x256xf32>
    %c0_14 = arith.constant 0 : index
    %c3 = arith.constant 3 : index
    %c0_15 = arith.constant 0 : index
    %c0_16 = arith.constant 0 : index
    %27 = vector.load %arg2[%c0_14, %c3, %c0_15, %c0_16] : memref<1x64x4x1xf32, #tpu.memory_space<vmem>>, vector<1x1x4x1xf32>
    %28 = vector.shape_cast %27 : vector<1x1x4x1xf32> to vector<4x1xf32>
    %29 = vector.shape_cast %28 : vector<4x1xf32> to vector<1x4x1xf32>
    %30 = vector.broadcast %29 : vector<1x4x1xf32> to vector<2x4x256xf32>
    %31 = arith.mulf %30, %20 : vector<2x4x256xf32>
    %32 = arith.addf %17, %31 : vector<2x4x256xf32>
    %c254_i32 = arith.constant 254 : i32
    %33 = tpu.dynamic_rotate %1 by %c254_i32 dim 2 : vector<2x4x256xf32>, i32 -> vector<2x4x256xf32>
    %c195_i32 = arith.constant 195 : i32
    %34 = tpu.dynamic_rotate %1 by %c195_i32 dim 2 : vector<2x4x256xf32>, i32 -> vector<2x4x256xf32>
    %35 = arith.addf %33, %34 : vector<2x4x256xf32>
    %c0_17 = arith.constant 0 : index
    %c4 = arith.constant 4 : index
    %c0_18 = arith.constant 0 : index
    %c0_19 = arith.constant 0 : index
    %36 = vector.load %arg2[%c0_17, %c4, %c0_18, %c0_19] : memref<1x64x4x1xf32, #tpu.memory_space<vmem>>, vector<1x1x4x1xf32>
    %37 = vector.shape_cast %36 : vector<1x1x4x1xf32> to vector<4x1xf32>
    %38 = vector.shape_cast %37 : vector<4x1xf32> to vector<1x4x1xf32>
    %39 = vector.broadcast %38 : vector<1x4x1xf32> to vector<2x4x256xf32>
    %40 = arith.mulf %39, %35 : vector<2x4x256xf32>
    %41 = arith.addf %26, %40 : vector<2x4x256xf32>
    %c0_20 = arith.constant 0 : index
    %c5 = arith.constant 5 : index
    %c0_21 = arith.constant 0 : index
    %c0_22 = arith.constant 0 : index
    %42 = vector.load %arg2[%c0_20, %c5, %c0_21, %c0_22] : memref<1x64x4x1xf32, #tpu.memory_space<vmem>>, vector<1x1x4x1xf32>
    %43 = vector.shape_cast %42 : vector<1x1x4x1xf32> to vector<4x1xf32>
    %44 = vector.shape_cast %43 : vector<4x1xf32> to vector<1x4x1xf32>
    %45 = vector.broadcast %44 : vector<1x4x1xf32> to vector<2x4x256xf32>
    %46 = arith.mulf %45, %35 : vector<2x4x256xf32>
    %47 = arith.addf %32, %46 : vector<2x4x256xf32>
    %c253_i32 = arith.constant 253 : i32
    %48 = tpu.dynamic_rotate %1 by %c253_i32 dim 2 : vector<2x4x256xf32>, i32 -> vector<2x4x256xf32>
    %c196_i32 = arith.constant 196 : i32
    %49 = tpu.dynamic_rotate %1 by %c196_i32 dim 2 : vector<2x4x256xf32>, i32 -> vector<2x4x256xf32>
    %50 = arith.addf %48, %49 : vector<2x4x256xf32>
    %c0_23 = arith.constant 0 : index
    %c6 = arith.constant 6 : index
    %c0_24 = arith.constant 0 : index
    %c0_25 = arith.constant 0 : index
    %51 = vector.load %arg2[%c0_23, %c6, %c0_24, %c0_25] : memref<1x64x4x1xf32, #tpu.memory_space<vmem>>, vector<1x1x4x1xf32>
    %52 = vector.shape_cast %51 : vector<1x1x4x1xf32> to vector<4x1xf32>
    %53 = vector.shape_cast %52 : vector<4x1xf32> to vector<1x4x1xf32>
    %54 = vector.broadcast %53 : vector<1x4x1xf32> to vector<2x4x256xf32>
    %55 = arith.mulf %54, %50 : vector<2x4x256xf32>
    %56 = arith.addf %41, %55 : vector<2x4x256xf32>
    %c0_26 = arith.constant 0 : index
    %c7 = arith.constant 7 : index
    %c0_27 = arith.constant 0 : index
    %c0_28 = arith.constant 0 : index
    %57 = vector.load %arg2[%c0_26, %c7, %c0_27, %c0_28] : memref<1x64x4x1xf32, #tpu.memory_space<vmem>>, vector<1x1x4x1xf32>
    %58 = vector.shape_cast %57 : vector<1x1x4x1xf32> to vector<4x1xf32>
    %59 = vector.shape_cast %58 : vector<4x1xf32> to vector<1x4x1xf32>
    %60 = vector.broadcast %59 : vector<1x4x1xf32> to vector<2x4x256xf32>
    %61 = arith.mulf %60, %50 : vector<2x4x256xf32>
    %62 = arith.addf %47, %61 : vector<2x4x256xf32>
    %c252_i32 = arith.constant 252 : i32
    %63 = tpu.dynamic_rotate %1 by %c252_i32 dim 2 : vector<2x4x256xf32>, i32 -> vector<2x4x256xf32>
    %c197_i32 = arith.constant 197 : i32
    %64 = tpu.dynamic_rotate %1 by %c197_i32 dim 2 : vector<2x4x256xf32>, i32 -> vector<2x4x256xf32>
    %65 = arith.addf %63, %64 : vector<2x4x256xf32>
    %c0_29 = arith.constant 0 : index
    %c8 = arith.constant 8 : index
    %c0_30 = arith.constant 0 : index
    %c0_31 = arith.constant 0 : index
    %66 = vector.load %arg2[%c0_29, %c8, %c0_30, %c0_31] : memref<1x64x4x1xf32, #tpu.memory_space<vmem>>, vector<1x1x4x1xf32>
    %67 = vector.shape_cast %66 : vector<1x1x4x1xf32> to vector<4x1xf32>
    %68 = vector.shape_cast %67 : vector<4x1xf32> to vector<1x4x1xf32>
    %69 = vector.broadcast %68 : vector<1x4x1xf32> to vector<2x4x256xf32>
    %70 = arith.mulf %69, %65 : vector<2x4x256xf32>
    %71 = arith.addf %56, %70 : vector<2x4x256xf32>
    %c0_32 = arith.constant 0 : index
    %c9 = arith.constant 9 : index
    %c0_33 = arith.constant 0 : index
    %c0_34 = arith.constant 0 : index
    %72 = vector.load %arg2[%c0_32, %c9, %c0_33, %c0_34] : memref<1x64x4x1xf32, #tpu.memory_space<vmem>>, vector<1x1x4x1xf32>
    %73 = vector.shape_cast %72 : vector<1x1x4x1xf32> to vector<4x1xf32>
    %74 = vector.shape_cast %73 : vector<4x1xf32> to vector<1x4x1xf32>
    %75 = vector.broadcast %74 : vector<1x4x1xf32> to vector<2x4x256xf32>
    %76 = arith.mulf %75, %65 : vector<2x4x256xf32>
    %77 = arith.addf %62, %76 : vector<2x4x256xf32>
    %c251_i32 = arith.constant 251 : i32
    %78 = tpu.dynamic_rotate %1 by %c251_i32 dim 2 : vector<2x4x256xf32>, i32 -> vector<2x4x256xf32>
    %c198_i32 = arith.constant 198 : i32
    %79 = tpu.dynamic_rotate %1 by %c198_i32 dim 2 : vector<2x4x256xf32>, i32 -> vector<2x4x256xf32>
    %80 = arith.addf %78, %79 : vector<2x4x256xf32>
    %c0_35 = arith.constant 0 : index
    %c10 = arith.constant 10 : index
    %c0_36 = arith.constant 0 : index
    %c0_37 = arith.constant 0 : index
    %81 = vector.load %arg2[%c0_35, %c10, %c0_36, %c0_37] : memref<1x64x4x1xf32, #tpu.memory_space<vmem>>, vector<1x1x4x1xf32>
    %82 = vector.shape_cast %81 : vector<1x1x4x1xf32> to vector<4x1xf32>
    %83 = vector.shape_cast %82 : vector<4x1xf32> to vector<1x4x1xf32>
    %84 = vector.broadcast %83 : vector<1x4x1xf32> to vector<2x4x256xf32>
    %85 = arith.mulf %84, %80 : vector<2x4x256xf32>
    %86 = arith.addf %71, %85 : vector<2x4x256xf32>
    %c0_38 = arith.constant 0 : index
    %c11 = arith.constant 11 : index
    %c0_39 = arith.constant 0 : index
    %c0_40 = arith.constant 0 : index
    %87 = vector.load %arg2[%c0_38, %c11, %c0_39, %c0_40] : memref<1x64x4x1xf32, #tpu.memory_space<vmem>>, vector<1x1x4x1xf32>
    %88 = vector.shape_cast %87 : vector<1x1x4x1xf32> to vector<4x1xf32>
    %89 = vector.shape_cast %88 : vector<4x1xf32> to vector<1x4x1xf32>
    %90 = vector.broadcast %89 : vector<1x4x1xf32> to vector<2x4x256xf32>
    %91 = arith.mulf %90, %80 : vector<2x4x256xf32>
    %92 = arith.addf %77, %91 : vector<2x4x256xf32>
    %c250_i32 = arith.constant 250 : i32
    %93 = tpu.dynamic_rotate %1 by %c250_i32 dim 2 : vector<2x4x256xf32>, i32 -> vector<2x4x256xf32>
    %c199_i32 = arith.constant 199 : i32
    %94 = tpu.dynamic_rotate %1 by %c199_i32 dim 2 : vector<2x4x256xf32>, i32 -> vector<2x4x256xf32>
    %95 = arith.addf %93, %94 : vector<2x4x256xf32>
    %c0_41 = arith.constant 0 : index
    %c12 = arith.constant 12 : index
    %c0_42 = arith.constant 0 : index
    %c0_43 = arith.constant 0 : index
    %96 = vector.load %arg2[%c0_41, %c12, %c0_42, %c0_43] : memref<1x64x4x1xf32, #tpu.memory_space<vmem>>, vector<1x1x4x1xf32>
    %97 = vector.shape_cast %96 : vector<1x1x4x1xf32> to vector<4x1xf32>
    %98 = vector.shape_cast %97 : vector<4x1xf32> to vector<1x4x1xf32>
    %99 = vector.broadcast %98 : vector<1x4x1xf32> to vector<2x4x256xf32>
    %100 = arith.mulf %99, %95 : vector<2x4x256xf32>
    %101 = arith.addf %86, %100 : vector<2x4x256xf32>
    %c0_44 = arith.constant 0 : index
    %c13 = arith.constant 13 : index
    %c0_45 = arith.constant 0 : index
    %c0_46 = arith.constant 0 : index
    %102 = vector.load %arg2[%c0_44, %c13, %c0_45, %c0_46] : memref<1x64x4x1xf32, #tpu.memory_space<vmem>>, vector<1x1x4x1xf32>
    %103 = vector.shape_cast %102 : vector<1x1x4x1xf32> to vector<4x1xf32>
    %104 = vector.shape_cast %103 : vector<4x1xf32> to vector<1x4x1xf32>
    %105 = vector.broadcast %104 : vector<1x4x1xf32> to vector<2x4x256xf32>
    %106 = arith.mulf %105, %95 : vector<2x4x256xf32>
    %107 = arith.addf %92, %106 : vector<2x4x256xf32>
    %c249_i32 = arith.constant 249 : i32
    %108 = tpu.dynamic_rotate %1 by %c249_i32 dim 2 : vector<2x4x256xf32>, i32 -> vector<2x4x256xf32>
    %c200_i32 = arith.constant 200 : i32
    %109 = tpu.dynamic_rotate %1 by %c200_i32 dim 2 : vector<2x4x256xf32>, i32 -> vector<2x4x256xf32>
    %110 = arith.addf %108, %109 : vector<2x4x256xf32>
    %c0_47 = arith.constant 0 : index
    %c14 = arith.constant 14 : index
    %c0_48 = arith.constant 0 : index
    %c0_49 = arith.constant 0 : index
    %111 = vector.load %arg2[%c0_47, %c14, %c0_48, %c0_49] : memref<1x64x4x1xf32, #tpu.memory_space<vmem>>, vector<1x1x4x1xf32>
    %112 = vector.shape_cast %111 : vector<1x1x4x1xf32> to vector<4x1xf32>
    %113 = vector.shape_cast %112 : vector<4x1xf32> to vector<1x4x1xf32>
    %114 = vector.broadcast %113 : vector<1x4x1xf32> to vector<2x4x256xf32>
    %115 = arith.mulf %114, %110 : vector<2x4x256xf32>
    %116 = arith.addf %101, %115 : vector<2x4x256xf32>
    %c0_50 = arith.constant 0 : index
    %c15 = arith.constant 15 : index
    %c0_51 = arith.constant 0 : index
    %c0_52 = arith.constant 0 : index
    %117 = vector.load %arg2[%c0_50, %c15, %c0_51, %c0_52] : memref<1x64x4x1xf32, #tpu.memory_space<vmem>>, vector<1x1x4x1xf32>
    %118 = vector.shape_cast %117 : vector<1x1x4x1xf32> to vector<4x1xf32>
    %119 = vector.shape_cast %118 : vector<4x1xf32> to vector<1x4x1xf32>
    %120 = vector.broadcast %119 : vector<1x4x1xf32> to vector<2x4x256xf32>
    %121 = arith.mulf %120, %110 : vector<2x4x256xf32>
    %122 = arith.addf %107, %121 : vector<2x4x256xf32>
    %c248_i32 = arith.constant 248 : i32
    %123 = tpu.dynamic_rotate %1 by %c248_i32 dim 2 : vector<2x4x256xf32>, i32 -> vector<2x4x256xf32>
    %c201_i32 = arith.constant 201 : i32
    %124 = tpu.dynamic_rotate %1 by %c201_i32 dim 2 : vector<2x4x256xf32>, i32 -> vector<2x4x256xf32>
    %125 = arith.addf %123, %124 : vector<2x4x256xf32>
    %c0_53 = arith.constant 0 : index
    %c16 = arith.constant 16 : index
    %c0_54 = arith.constant 0 : index
    %c0_55 = arith.constant 0 : index
    %126 = vector.load %arg2[%c0_53, %c16, %c0_54, %c0_55] : memref<1x64x4x1xf32, #tpu.memory_space<vmem>>, vector<1x1x4x1xf32>
    %127 = vector.shape_cast %126 : vector<1x1x4x1xf32> to vector<4x1xf32>
    %128 = vector.shape_cast %127 : vector<4x1xf32> to vector<1x4x1xf32>
    %129 = vector.broadcast %128 : vector<1x4x1xf32> to vector<2x4x256xf32>
    %130 = arith.mulf %129, %125 : vector<2x4x256xf32>
    %131 = arith.addf %116, %130 : vector<2x4x256xf32>
    %c0_56 = arith.constant 0 : index
    %c17 = arith.constant 17 : index
    %c0_57 = arith.constant 0 : index
    %c0_58 = arith.constant 0 : index
    %132 = vector.load %arg2[%c0_56, %c17, %c0_57, %c0_58] : memref<1x64x4x1xf32, #tpu.memory_space<vmem>>, vector<1x1x4x1xf32>
    %133 = vector.shape_cast %132 : vector<1x1x4x1xf32> to vector<4x1xf32>
    %134 = vector.shape_cast %133 : vector<4x1xf32> to vector<1x4x1xf32>
    %135 = vector.broadcast %134 : vector<1x4x1xf32> to vector<2x4x256xf32>
    %136 = arith.mulf %135, %125 : vector<2x4x256xf32>
    %137 = arith.addf %122, %136 : vector<2x4x256xf32>
    %c247_i32 = arith.constant 247 : i32
    %138 = tpu.dynamic_rotate %1 by %c247_i32 dim 2 : vector<2x4x256xf32>, i32 -> vector<2x4x256xf32>
    %c202_i32 = arith.constant 202 : i32
    %139 = tpu.dynamic_rotate %1 by %c202_i32 dim 2 : vector<2x4x256xf32>, i32 -> vector<2x4x256xf32>
    %140 = arith.addf %138, %139 : vector<2x4x256xf32>
    %c0_59 = arith.constant 0 : index
    %c18 = arith.constant 18 : index
    %c0_60 = arith.constant 0 : index
    %c0_61 = arith.constant 0 : index
    %141 = vector.load %arg2[%c0_59, %c18, %c0_60, %c0_61] : memref<1x64x4x1xf32, #tpu.memory_space<vmem>>, vector<1x1x4x1xf32>
    %142 = vector.shape_cast %141 : vector<1x1x4x1xf32> to vector<4x1xf32>
    %143 = vector.shape_cast %142 : vector<4x1xf32> to vector<1x4x1xf32>
    %144 = vector.broadcast %143 : vector<1x4x1xf32> to vector<2x4x256xf32>
    %145 = arith.mulf %144, %140 : vector<2x4x256xf32>
    %146 = arith.addf %131, %145 : vector<2x4x256xf32>
    %c0_62 = arith.constant 0 : index
    %c19 = arith.constant 19 : index
    %c0_63 = arith.constant 0 : index
    %c0_64 = arith.constant 0 : index
    %147 = vector.load %arg2[%c0_62, %c19, %c0_63, %c0_64] : memref<1x64x4x1xf32, #tpu.memory_space<vmem>>, vector<1x1x4x1xf32>
    %148 = vector.shape_cast %147 : vector<1x1x4x1xf32> to vector<4x1xf32>
    %149 = vector.shape_cast %148 : vector<4x1xf32> to vector<1x4x1xf32>
    %150 = vector.broadcast %149 : vector<1x4x1xf32> to vector<2x4x256xf32>
    %151 = arith.mulf %150, %140 : vector<2x4x256xf32>
    %152 = arith.addf %137, %151 : vector<2x4x256xf32>
    %c246_i32 = arith.constant 246 : i32
    %153 = tpu.dynamic_rotate %1 by %c246_i32 dim 2 : vector<2x4x256xf32>, i32 -> vector<2x4x256xf32>
    %c203_i32 = arith.constant 203 : i32
    %154 = tpu.dynamic_rotate %1 by %c203_i32 dim 2 : vector<2x4x256xf32>, i32 -> vector<2x4x256xf32>
    %155 = arith.addf %153, %154 : vector<2x4x256xf32>
    %c0_65 = arith.constant 0 : index
    %c20 = arith.constant 20 : index
    %c0_66 = arith.constant 0 : index
    %c0_67 = arith.constant 0 : index
    %156 = vector.load %arg2[%c0_65, %c20, %c0_66, %c0_67] : memref<1x64x4x1xf32, #tpu.memory_space<vmem>>, vector<1x1x4x1xf32>
    %157 = vector.shape_cast %156 : vector<1x1x4x1xf32> to vector<4x1xf32>
    %158 = vector.shape_cast %157 : vector<4x1xf32> to vector<1x4x1xf32>
    %159 = vector.broadcast %158 : vector<1x4x1xf32> to vector<2x4x256xf32>
    %160 = arith.mulf %159, %155 : vector<2x4x256xf32>
    %161 = arith.addf %146, %160 : vector<2x4x256xf32>
    %c0_68 = arith.constant 0 : index
    %c21 = arith.constant 21 : index
    %c0_69 = arith.constant 0 : index
    %c0_70 = arith.constant 0 : index
    %162 = vector.load %arg2[%c0_68, %c21, %c0_69, %c0_70] : memref<1x64x4x1xf32, #tpu.memory_space<vmem>>, vector<1x1x4x1xf32>
    %163 = vector.shape_cast %162 : vector<1x1x4x1xf32> to vector<4x1xf32>
    %164 = vector.shape_cast %163 : vector<4x1xf32> to vector<1x4x1xf32>
    %165 = vector.broadcast %164 : vector<1x4x1xf32> to vector<2x4x256xf32>
    %166 = arith.mulf %165, %155 : vector<2x4x256xf32>
    %167 = arith.addf %152, %166 : vector<2x4x256xf32>
    %c245_i32 = arith.constant 245 : i32
    %168 = tpu.dynamic_rotate %1 by %c245_i32 dim 2 : vector<2x4x256xf32>, i32 -> vector<2x4x256xf32>
    %c204_i32 = arith.constant 204 : i32
    %169 = tpu.dynamic_rotate %1 by %c204_i32 dim 2 : vector<2x4x256xf32>, i32 -> vector<2x4x256xf32>
    %170 = arith.addf %168, %169 : vector<2x4x256xf32>
    %c0_71 = arith.constant 0 : index
    %c22 = arith.constant 22 : index
    %c0_72 = arith.constant 0 : index
    %c0_73 = arith.constant 0 : index
    %171 = vector.load %arg2[%c0_71, %c22, %c0_72, %c0_73] : memref<1x64x4x1xf32, #tpu.memory_space<vmem>>, vector<1x1x4x1xf32>
    %172 = vector.shape_cast %171 : vector<1x1x4x1xf32> to vector<4x1xf32>
    %173 = vector.shape_cast %172 : vector<4x1xf32> to vector<1x4x1xf32>
    %174 = vector.broadcast %173 : vector<1x4x1xf32> to vector<2x4x256xf32>
    %175 = arith.mulf %174, %170 : vector<2x4x256xf32>
    %176 = arith.addf %161, %175 : vector<2x4x256xf32>
    %c0_74 = arith.constant 0 : index
    %c23 = arith.constant 23 : index
    %c0_75 = arith.constant 0 : index
    %c0_76 = arith.constant 0 : index
    %177 = vector.load %arg2[%c0_74, %c23, %c0_75, %c0_76] : memref<1x64x4x1xf32, #tpu.memory_space<vmem>>, vector<1x1x4x1xf32>
    %178 = vector.shape_cast %177 : vector<1x1x4x1xf32> to vector<4x1xf32>
    %179 = vector.shape_cast %178 : vector<4x1xf32> to vector<1x4x1xf32>
    %180 = vector.broadcast %179 : vector<1x4x1xf32> to vector<2x4x256xf32>
    %181 = arith.mulf %180, %170 : vector<2x4x256xf32>
    %182 = arith.addf %167, %181 : vector<2x4x256xf32>
    %c244_i32 = arith.constant 244 : i32
    %183 = tpu.dynamic_rotate %1 by %c244_i32 dim 2 : vector<2x4x256xf32>, i32 -> vector<2x4x256xf32>
    %c205_i32 = arith.constant 205 : i32
    %184 = tpu.dynamic_rotate %1 by %c205_i32 dim 2 : vector<2x4x256xf32>, i32 -> vector<2x4x256xf32>
    %185 = arith.addf %183, %184 : vector<2x4x256xf32>
    %c0_77 = arith.constant 0 : index
    %c24 = arith.constant 24 : index
    %c0_78 = arith.constant 0 : index
    %c0_79 = arith.constant 0 : index
    %186 = vector.load %arg2[%c0_77, %c24, %c0_78, %c0_79] : memref<1x64x4x1xf32, #tpu.memory_space<vmem>>, vector<1x1x4x1xf32>
    %187 = vector.shape_cast %186 : vector<1x1x4x1xf32> to vector<4x1xf32>
    %188 = vector.shape_cast %187 : vector<4x1xf32> to vector<1x4x1xf32>
    %189 = vector.broadcast %188 : vector<1x4x1xf32> to vector<2x4x256xf32>
    %190 = arith.mulf %189, %185 : vector<2x4x256xf32>
    %191 = arith.addf %176, %190 : vector<2x4x256xf32>
    %c0_80 = arith.constant 0 : index
    %c25 = arith.constant 25 : index
    %c0_81 = arith.constant 0 : index
    %c0_82 = arith.constant 0 : index
    %192 = vector.load %arg2[%c0_80, %c25, %c0_81, %c0_82] : memref<1x64x4x1xf32, #tpu.memory_space<vmem>>, vector<1x1x4x1xf32>
    %193 = vector.shape_cast %192 : vector<1x1x4x1xf32> to vector<4x1xf32>
    %194 = vector.shape_cast %193 : vector<4x1xf32> to vector<1x4x1xf32>
    %195 = vector.broadcast %194 : vector<1x4x1xf32> to vector<2x4x256xf32>
    %196 = arith.mulf %195, %185 : vector<2x4x256xf32>
    %197 = arith.addf %182, %196 : vector<2x4x256xf32>
    %c243_i32 = arith.constant 243 : i32
    %198 = tpu.dynamic_rotate %1 by %c243_i32 dim 2 : vector<2x4x256xf32>, i32 -> vector<2x4x256xf32>
    %c206_i32 = arith.constant 206 : i32
    %199 = tpu.dynamic_rotate %1 by %c206_i32 dim 2 : vector<2x4x256xf32>, i32 -> vector<2x4x256xf32>
    %200 = arith.addf %198, %199 : vector<2x4x256xf32>
    %c0_83 = arith.constant 0 : index
    %c26 = arith.constant 26 : index
    %c0_84 = arith.constant 0 : index
    %c0_85 = arith.constant 0 : index
    %201 = vector.load %arg2[%c0_83, %c26, %c0_84, %c0_85] : memref<1x64x4x1xf32, #tpu.memory_space<vmem>>, vector<1x1x4x1xf32>
    %202 = vector.shape_cast %201 : vector<1x1x4x1xf32> to vector<4x1xf32>
    %203 = vector.shape_cast %202 : vector<4x1xf32> to vector<1x4x1xf32>
    %204 = vector.broadcast %203 : vector<1x4x1xf32> to vector<2x4x256xf32>
    %205 = arith.mulf %204, %200 : vector<2x4x256xf32>
    %206 = arith.addf %191, %205 : vector<2x4x256xf32>
    %c0_86 = arith.constant 0 : index
    %c27 = arith.constant 27 : index
    %c0_87 = arith.constant 0 : index
    %c0_88 = arith.constant 0 : index
    %207 = vector.load %arg2[%c0_86, %c27, %c0_87, %c0_88] : memref<1x64x4x1xf32, #tpu.memory_space<vmem>>, vector<1x1x4x1xf32>
    %208 = vector.shape_cast %207 : vector<1x1x4x1xf32> to vector<4x1xf32>
    %209 = vector.shape_cast %208 : vector<4x1xf32> to vector<1x4x1xf32>
    %210 = vector.broadcast %209 : vector<1x4x1xf32> to vector<2x4x256xf32>
    %211 = arith.mulf %210, %200 : vector<2x4x256xf32>
    %212 = arith.addf %197, %211 : vector<2x4x256xf32>
    %c242_i32 = arith.constant 242 : i32
    %213 = tpu.dynamic_rotate %1 by %c242_i32 dim 2 : vector<2x4x256xf32>, i32 -> vector<2x4x256xf32>
    %c207_i32 = arith.constant 207 : i32
    %214 = tpu.dynamic_rotate %1 by %c207_i32 dim 2 : vector<2x4x256xf32>, i32 -> vector<2x4x256xf32>
    %215 = arith.addf %213, %214 : vector<2x4x256xf32>
    %c0_89 = arith.constant 0 : index
    %c28 = arith.constant 28 : index
    %c0_90 = arith.constant 0 : index
    %c0_91 = arith.constant 0 : index
    %216 = vector.load %arg2[%c0_89, %c28, %c0_90, %c0_91] : memref<1x64x4x1xf32, #tpu.memory_space<vmem>>, vector<1x1x4x1xf32>
    %217 = vector.shape_cast %216 : vector<1x1x4x1xf32> to vector<4x1xf32>
    %218 = vector.shape_cast %217 : vector<4x1xf32> to vector<1x4x1xf32>
    %219 = vector.broadcast %218 : vector<1x4x1xf32> to vector<2x4x256xf32>
    %220 = arith.mulf %219, %215 : vector<2x4x256xf32>
    %221 = arith.addf %206, %220 : vector<2x4x256xf32>
    %c0_92 = arith.constant 0 : index
    %c29 = arith.constant 29 : index
    %c0_93 = arith.constant 0 : index
    %c0_94 = arith.constant 0 : index
    %222 = vector.load %arg2[%c0_92, %c29, %c0_93, %c0_94] : memref<1x64x4x1xf32, #tpu.memory_space<vmem>>, vector<1x1x4x1xf32>
    %223 = vector.shape_cast %222 : vector<1x1x4x1xf32> to vector<4x1xf32>
    %224 = vector.shape_cast %223 : vector<4x1xf32> to vector<1x4x1xf32>
    %225 = vector.broadcast %224 : vector<1x4x1xf32> to vector<2x4x256xf32>
    %226 = arith.mulf %225, %215 : vector<2x4x256xf32>
    %227 = arith.addf %212, %226 : vector<2x4x256xf32>
    %c241_i32 = arith.constant 241 : i32
    %228 = tpu.dynamic_rotate %1 by %c241_i32 dim 2 : vector<2x4x256xf32>, i32 -> vector<2x4x256xf32>
    %c208_i32 = arith.constant 208 : i32
    %229 = tpu.dynamic_rotate %1 by %c208_i32 dim 2 : vector<2x4x256xf32>, i32 -> vector<2x4x256xf32>
    %230 = arith.addf %228, %229 : vector<2x4x256xf32>
    %c0_95 = arith.constant 0 : index
    %c30 = arith.constant 30 : index
    %c0_96 = arith.constant 0 : index
    %c0_97 = arith.constant 0 : index
    %231 = vector.load %arg2[%c0_95, %c30, %c0_96, %c0_97] : memref<1x64x4x1xf32, #tpu.memory_space<vmem>>, vector<1x1x4x1xf32>
    %232 = vector.shape_cast %231 : vector<1x1x4x1xf32> to vector<4x1xf32>
    %233 = vector.shape_cast %232 : vector<4x1xf32> to vector<1x4x1xf32>
    %234 = vector.broadcast %233 : vector<1x4x1xf32> to vector<2x4x256xf32>
    %235 = arith.mulf %234, %230 : vector<2x4x256xf32>
    %236 = arith.addf %221, %235 : vector<2x4x256xf32>
    %c0_98 = arith.constant 0 : index
    %c31 = arith.constant 31 : index
    %c0_99 = arith.constant 0 : index
    %c0_100 = arith.constant 0 : index
    %237 = vector.load %arg2[%c0_98, %c31, %c0_99, %c0_100] : memref<1x64x4x1xf32, #tpu.memory_space<vmem>>, vector<1x1x4x1xf32>
    %238 = vector.shape_cast %237 : vector<1x1x4x1xf32> to vector<4x1xf32>
    %239 = vector.shape_cast %238 : vector<4x1xf32> to vector<1x4x1xf32>
    %240 = vector.broadcast %239 : vector<1x4x1xf32> to vector<2x4x256xf32>
    %241 = arith.mulf %240, %230 : vector<2x4x256xf32>
    %242 = arith.addf %227, %241 : vector<2x4x256xf32>
    %c240_i32 = arith.constant 240 : i32
    %243 = tpu.dynamic_rotate %1 by %c240_i32 dim 2 : vector<2x4x256xf32>, i32 -> vector<2x4x256xf32>
    %c209_i32 = arith.constant 209 : i32
    %244 = tpu.dynamic_rotate %1 by %c209_i32 dim 2 : vector<2x4x256xf32>, i32 -> vector<2x4x256xf32>
    %245 = arith.addf %243, %244 : vector<2x4x256xf32>
    %c0_101 = arith.constant 0 : index
    %c32 = arith.constant 32 : index
    %c0_102 = arith.constant 0 : index
    %c0_103 = arith.constant 0 : index
    %246 = vector.load %arg2[%c0_101, %c32, %c0_102, %c0_103] : memref<1x64x4x1xf32, #tpu.memory_space<vmem>>, vector<1x1x4x1xf32>
    %247 = vector.shape_cast %246 : vector<1x1x4x1xf32> to vector<4x1xf32>
    %248 = vector.shape_cast %247 : vector<4x1xf32> to vector<1x4x1xf32>
    %249 = vector.broadcast %248 : vector<1x4x1xf32> to vector<2x4x256xf32>
    %250 = arith.mulf %249, %245 : vector<2x4x256xf32>
    %251 = arith.addf %236, %250 : vector<2x4x256xf32>
    %c0_104 = arith.constant 0 : index
    %c33 = arith.constant 33 : index
    %c0_105 = arith.constant 0 : index
    %c0_106 = arith.constant 0 : index
    %252 = vector.load %arg2[%c0_104, %c33, %c0_105, %c0_106] : memref<1x64x4x1xf32, #tpu.memory_space<vmem>>, vector<1x1x4x1xf32>
    %253 = vector.shape_cast %252 : vector<1x1x4x1xf32> to vector<4x1xf32>
    %254 = vector.shape_cast %253 : vector<4x1xf32> to vector<1x4x1xf32>
    %255 = vector.broadcast %254 : vector<1x4x1xf32> to vector<2x4x256xf32>
    %256 = arith.mulf %255, %245 : vector<2x4x256xf32>
    %257 = arith.addf %242, %256 : vector<2x4x256xf32>
    %c239_i32 = arith.constant 239 : i32
    %258 = tpu.dynamic_rotate %1 by %c239_i32 dim 2 : vector<2x4x256xf32>, i32 -> vector<2x4x256xf32>
    %c210_i32 = arith.constant 210 : i32
    %259 = tpu.dynamic_rotate %1 by %c210_i32 dim 2 : vector<2x4x256xf32>, i32 -> vector<2x4x256xf32>
    %260 = arith.addf %258, %259 : vector<2x4x256xf32>
    %c0_107 = arith.constant 0 : index
    %c34 = arith.constant 34 : index
    %c0_108 = arith.constant 0 : index
    %c0_109 = arith.constant 0 : index
    %261 = vector.load %arg2[%c0_107, %c34, %c0_108, %c0_109] : memref<1x64x4x1xf32, #tpu.memory_space<vmem>>, vector<1x1x4x1xf32>
    %262 = vector.shape_cast %261 : vector<1x1x4x1xf32> to vector<4x1xf32>
    %263 = vector.shape_cast %262 : vector<4x1xf32> to vector<1x4x1xf32>
    %264 = vector.broadcast %263 : vector<1x4x1xf32> to vector<2x4x256xf32>
    %265 = arith.mulf %264, %260 : vector<2x4x256xf32>
    %266 = arith.addf %251, %265 : vector<2x4x256xf32>
    %c0_110 = arith.constant 0 : index
    %c35 = arith.constant 35 : index
    %c0_111 = arith.constant 0 : index
    %c0_112 = arith.constant 0 : index
    %267 = vector.load %arg2[%c0_110, %c35, %c0_111, %c0_112] : memref<1x64x4x1xf32, #tpu.memory_space<vmem>>, vector<1x1x4x1xf32>
    %268 = vector.shape_cast %267 : vector<1x1x4x1xf32> to vector<4x1xf32>
    %269 = vector.shape_cast %268 : vector<4x1xf32> to vector<1x4x1xf32>
    %270 = vector.broadcast %269 : vector<1x4x1xf32> to vector<2x4x256xf32>
    %271 = arith.mulf %270, %260 : vector<2x4x256xf32>
    %272 = arith.addf %257, %271 : vector<2x4x256xf32>
    %c238_i32 = arith.constant 238 : i32
    %273 = tpu.dynamic_rotate %1 by %c238_i32 dim 2 : vector<2x4x256xf32>, i32 -> vector<2x4x256xf32>
    %c211_i32 = arith.constant 211 : i32
    %274 = tpu.dynamic_rotate %1 by %c211_i32 dim 2 : vector<2x4x256xf32>, i32 -> vector<2x4x256xf32>
    %275 = arith.addf %273, %274 : vector<2x4x256xf32>
    %c0_113 = arith.constant 0 : index
    %c36 = arith.constant 36 : index
    %c0_114 = arith.constant 0 : index
    %c0_115 = arith.constant 0 : index
    %276 = vector.load %arg2[%c0_113, %c36, %c0_114, %c0_115] : memref<1x64x4x1xf32, #tpu.memory_space<vmem>>, vector<1x1x4x1xf32>
    %277 = vector.shape_cast %276 : vector<1x1x4x1xf32> to vector<4x1xf32>
    %278 = vector.shape_cast %277 : vector<4x1xf32> to vector<1x4x1xf32>
    %279 = vector.broadcast %278 : vector<1x4x1xf32> to vector<2x4x256xf32>
    %280 = arith.mulf %279, %275 : vector<2x4x256xf32>
    %281 = arith.addf %266, %280 : vector<2x4x256xf32>
    %c0_116 = arith.constant 0 : index
    %c37 = arith.constant 37 : index
    %c0_117 = arith.constant 0 : index
    %c0_118 = arith.constant 0 : index
    %282 = vector.load %arg2[%c0_116, %c37, %c0_117, %c0_118] : memref<1x64x4x1xf32, #tpu.memory_space<vmem>>, vector<1x1x4x1xf32>
    %283 = vector.shape_cast %282 : vector<1x1x4x1xf32> to vector<4x1xf32>
    %284 = vector.shape_cast %283 : vector<4x1xf32> to vector<1x4x1xf32>
    %285 = vector.broadcast %284 : vector<1x4x1xf32> to vector<2x4x256xf32>
    %286 = arith.mulf %285, %275 : vector<2x4x256xf32>
    %287 = arith.addf %272, %286 : vector<2x4x256xf32>
    %c237_i32 = arith.constant 237 : i32
    %288 = tpu.dynamic_rotate %1 by %c237_i32 dim 2 : vector<2x4x256xf32>, i32 -> vector<2x4x256xf32>
    %c212_i32 = arith.constant 212 : i32
    %289 = tpu.dynamic_rotate %1 by %c212_i32 dim 2 : vector<2x4x256xf32>, i32 -> vector<2x4x256xf32>
    %290 = arith.addf %288, %289 : vector<2x4x256xf32>
    %c0_119 = arith.constant 0 : index
    %c38 = arith.constant 38 : index
    %c0_120 = arith.constant 0 : index
    %c0_121 = arith.constant 0 : index
    %291 = vector.load %arg2[%c0_119, %c38, %c0_120, %c0_121] : memref<1x64x4x1xf32, #tpu.memory_space<vmem>>, vector<1x1x4x1xf32>
    %292 = vector.shape_cast %291 : vector<1x1x4x1xf32> to vector<4x1xf32>
    %293 = vector.shape_cast %292 : vector<4x1xf32> to vector<1x4x1xf32>
    %294 = vector.broadcast %293 : vector<1x4x1xf32> to vector<2x4x256xf32>
    %295 = arith.mulf %294, %290 : vector<2x4x256xf32>
    %296 = arith.addf %281, %295 : vector<2x4x256xf32>
    %c0_122 = arith.constant 0 : index
    %c39 = arith.constant 39 : index
    %c0_123 = arith.constant 0 : index
    %c0_124 = arith.constant 0 : index
    %297 = vector.load %arg2[%c0_122, %c39, %c0_123, %c0_124] : memref<1x64x4x1xf32, #tpu.memory_space<vmem>>, vector<1x1x4x1xf32>
    %298 = vector.shape_cast %297 : vector<1x1x4x1xf32> to vector<4x1xf32>
    %299 = vector.shape_cast %298 : vector<4x1xf32> to vector<1x4x1xf32>
    %300 = vector.broadcast %299 : vector<1x4x1xf32> to vector<2x4x256xf32>
    %301 = arith.mulf %300, %290 : vector<2x4x256xf32>
    %302 = arith.addf %287, %301 : vector<2x4x256xf32>
    %c236_i32 = arith.constant 236 : i32
    %303 = tpu.dynamic_rotate %1 by %c236_i32 dim 2 : vector<2x4x256xf32>, i32 -> vector<2x4x256xf32>
    %c213_i32 = arith.constant 213 : i32
    %304 = tpu.dynamic_rotate %1 by %c213_i32 dim 2 : vector<2x4x256xf32>, i32 -> vector<2x4x256xf32>
    %305 = arith.addf %303, %304 : vector<2x4x256xf32>
    %c0_125 = arith.constant 0 : index
    %c40 = arith.constant 40 : index
    %c0_126 = arith.constant 0 : index
    %c0_127 = arith.constant 0 : index
    %306 = vector.load %arg2[%c0_125, %c40, %c0_126, %c0_127] : memref<1x64x4x1xf32, #tpu.memory_space<vmem>>, vector<1x1x4x1xf32>
    %307 = vector.shape_cast %306 : vector<1x1x4x1xf32> to vector<4x1xf32>
    %308 = vector.shape_cast %307 : vector<4x1xf32> to vector<1x4x1xf32>
    %309 = vector.broadcast %308 : vector<1x4x1xf32> to vector<2x4x256xf32>
    %310 = arith.mulf %309, %305 : vector<2x4x256xf32>
    %311 = arith.addf %296, %310 : vector<2x4x256xf32>
    %c0_128 = arith.constant 0 : index
    %c41 = arith.constant 41 : index
    %c0_129 = arith.constant 0 : index
    %c0_130 = arith.constant 0 : index
    %312 = vector.load %arg2[%c0_128, %c41, %c0_129, %c0_130] : memref<1x64x4x1xf32, #tpu.memory_space<vmem>>, vector<1x1x4x1xf32>
    %313 = vector.shape_cast %312 : vector<1x1x4x1xf32> to vector<4x1xf32>
    %314 = vector.shape_cast %313 : vector<4x1xf32> to vector<1x4x1xf32>
    %315 = vector.broadcast %314 : vector<1x4x1xf32> to vector<2x4x256xf32>
    %316 = arith.mulf %315, %305 : vector<2x4x256xf32>
    %317 = arith.addf %302, %316 : vector<2x4x256xf32>
    %c235_i32 = arith.constant 235 : i32
    %318 = tpu.dynamic_rotate %1 by %c235_i32 dim 2 : vector<2x4x256xf32>, i32 -> vector<2x4x256xf32>
    %c214_i32 = arith.constant 214 : i32
    %319 = tpu.dynamic_rotate %1 by %c214_i32 dim 2 : vector<2x4x256xf32>, i32 -> vector<2x4x256xf32>
    %320 = arith.addf %318, %319 : vector<2x4x256xf32>
    %c0_131 = arith.constant 0 : index
    %c42 = arith.constant 42 : index
    %c0_132 = arith.constant 0 : index
    %c0_133 = arith.constant 0 : index
    %321 = vector.load %arg2[%c0_131, %c42, %c0_132, %c0_133] : memref<1x64x4x1xf32, #tpu.memory_space<vmem>>, vector<1x1x4x1xf32>
    %322 = vector.shape_cast %321 : vector<1x1x4x1xf32> to vector<4x1xf32>
    %323 = vector.shape_cast %322 : vector<4x1xf32> to vector<1x4x1xf32>
    %324 = vector.broadcast %323 : vector<1x4x1xf32> to vector<2x4x256xf32>
    %325 = arith.mulf %324, %320 : vector<2x4x256xf32>
    %326 = arith.addf %311, %325 : vector<2x4x256xf32>
    %c0_134 = arith.constant 0 : index
    %c43 = arith.constant 43 : index
    %c0_135 = arith.constant 0 : index
    %c0_136 = arith.constant 0 : index
    %327 = vector.load %arg2[%c0_134, %c43, %c0_135, %c0_136] : memref<1x64x4x1xf32, #tpu.memory_space<vmem>>, vector<1x1x4x1xf32>
    %328 = vector.shape_cast %327 : vector<1x1x4x1xf32> to vector<4x1xf32>
    %329 = vector.shape_cast %328 : vector<4x1xf32> to vector<1x4x1xf32>
    %330 = vector.broadcast %329 : vector<1x4x1xf32> to vector<2x4x256xf32>
    %331 = arith.mulf %330, %320 : vector<2x4x256xf32>
    %332 = arith.addf %317, %331 : vector<2x4x256xf32>
    %c234_i32 = arith.constant 234 : i32
    %333 = tpu.dynamic_rotate %1 by %c234_i32 dim 2 : vector<2x4x256xf32>, i32 -> vector<2x4x256xf32>
    %c215_i32 = arith.constant 215 : i32
    %334 = tpu.dynamic_rotate %1 by %c215_i32 dim 2 : vector<2x4x256xf32>, i32 -> vector<2x4x256xf32>
    %335 = arith.addf %333, %334 : vector<2x4x256xf32>
    %c0_137 = arith.constant 0 : index
    %c44 = arith.constant 44 : index
    %c0_138 = arith.constant 0 : index
    %c0_139 = arith.constant 0 : index
    %336 = vector.load %arg2[%c0_137, %c44, %c0_138, %c0_139] : memref<1x64x4x1xf32, #tpu.memory_space<vmem>>, vector<1x1x4x1xf32>
    %337 = vector.shape_cast %336 : vector<1x1x4x1xf32> to vector<4x1xf32>
    %338 = vector.shape_cast %337 : vector<4x1xf32> to vector<1x4x1xf32>
    %339 = vector.broadcast %338 : vector<1x4x1xf32> to vector<2x4x256xf32>
    %340 = arith.mulf %339, %335 : vector<2x4x256xf32>
    %341 = arith.addf %326, %340 : vector<2x4x256xf32>
    %c0_140 = arith.constant 0 : index
    %c45 = arith.constant 45 : index
    %c0_141 = arith.constant 0 : index
    %c0_142 = arith.constant 0 : index
    %342 = vector.load %arg2[%c0_140, %c45, %c0_141, %c0_142] : memref<1x64x4x1xf32, #tpu.memory_space<vmem>>, vector<1x1x4x1xf32>
    %343 = vector.shape_cast %342 : vector<1x1x4x1xf32> to vector<4x1xf32>
    %344 = vector.shape_cast %343 : vector<4x1xf32> to vector<1x4x1xf32>
    %345 = vector.broadcast %344 : vector<1x4x1xf32> to vector<2x4x256xf32>
    %346 = arith.mulf %345, %335 : vector<2x4x256xf32>
    %347 = arith.addf %332, %346 : vector<2x4x256xf32>
    %c233_i32 = arith.constant 233 : i32
    %348 = tpu.dynamic_rotate %1 by %c233_i32 dim 2 : vector<2x4x256xf32>, i32 -> vector<2x4x256xf32>
    %c216_i32 = arith.constant 216 : i32
    %349 = tpu.dynamic_rotate %1 by %c216_i32 dim 2 : vector<2x4x256xf32>, i32 -> vector<2x4x256xf32>
    %350 = arith.addf %348, %349 : vector<2x4x256xf32>
    %c0_143 = arith.constant 0 : index
    %c46 = arith.constant 46 : index
    %c0_144 = arith.constant 0 : index
    %c0_145 = arith.constant 0 : index
    %351 = vector.load %arg2[%c0_143, %c46, %c0_144, %c0_145] : memref<1x64x4x1xf32, #tpu.memory_space<vmem>>, vector<1x1x4x1xf32>
    %352 = vector.shape_cast %351 : vector<1x1x4x1xf32> to vector<4x1xf32>
    %353 = vector.shape_cast %352 : vector<4x1xf32> to vector<1x4x1xf32>
    %354 = vector.broadcast %353 : vector<1x4x1xf32> to vector<2x4x256xf32>
    %355 = arith.mulf %354, %350 : vector<2x4x256xf32>
    %356 = arith.addf %341, %355 : vector<2x4x256xf32>
    %c0_146 = arith.constant 0 : index
    %c47 = arith.constant 47 : index
    %c0_147 = arith.constant 0 : index
    %c0_148 = arith.constant 0 : index
    %357 = vector.load %arg2[%c0_146, %c47, %c0_147, %c0_148] : memref<1x64x4x1xf32, #tpu.memory_space<vmem>>, vector<1x1x4x1xf32>
    %358 = vector.shape_cast %357 : vector<1x1x4x1xf32> to vector<4x1xf32>
    %359 = vector.shape_cast %358 : vector<4x1xf32> to vector<1x4x1xf32>
    %360 = vector.broadcast %359 : vector<1x4x1xf32> to vector<2x4x256xf32>
    %361 = arith.mulf %360, %350 : vector<2x4x256xf32>
    %362 = arith.addf %347, %361 : vector<2x4x256xf32>
    %c232_i32 = arith.constant 232 : i32
    %363 = tpu.dynamic_rotate %1 by %c232_i32 dim 2 : vector<2x4x256xf32>, i32 -> vector<2x4x256xf32>
    %c217_i32 = arith.constant 217 : i32
    %364 = tpu.dynamic_rotate %1 by %c217_i32 dim 2 : vector<2x4x256xf32>, i32 -> vector<2x4x256xf32>
    %365 = arith.addf %363, %364 : vector<2x4x256xf32>
    %c0_149 = arith.constant 0 : index
    %c48 = arith.constant 48 : index
    %c0_150 = arith.constant 0 : index
    %c0_151 = arith.constant 0 : index
    %366 = vector.load %arg2[%c0_149, %c48, %c0_150, %c0_151] : memref<1x64x4x1xf32, #tpu.memory_space<vmem>>, vector<1x1x4x1xf32>
    %367 = vector.shape_cast %366 : vector<1x1x4x1xf32> to vector<4x1xf32>
    %368 = vector.shape_cast %367 : vector<4x1xf32> to vector<1x4x1xf32>
    %369 = vector.broadcast %368 : vector<1x4x1xf32> to vector<2x4x256xf32>
    %370 = arith.mulf %369, %365 : vector<2x4x256xf32>
    %371 = arith.addf %356, %370 : vector<2x4x256xf32>
    %c0_152 = arith.constant 0 : index
    %c49 = arith.constant 49 : index
    %c0_153 = arith.constant 0 : index
    %c0_154 = arith.constant 0 : index
    %372 = vector.load %arg2[%c0_152, %c49, %c0_153, %c0_154] : memref<1x64x4x1xf32, #tpu.memory_space<vmem>>, vector<1x1x4x1xf32>
    %373 = vector.shape_cast %372 : vector<1x1x4x1xf32> to vector<4x1xf32>
    %374 = vector.shape_cast %373 : vector<4x1xf32> to vector<1x4x1xf32>
    %375 = vector.broadcast %374 : vector<1x4x1xf32> to vector<2x4x256xf32>
    %376 = arith.mulf %375, %365 : vector<2x4x256xf32>
    %377 = arith.addf %362, %376 : vector<2x4x256xf32>
    %c231_i32 = arith.constant 231 : i32
    %378 = tpu.dynamic_rotate %1 by %c231_i32 dim 2 : vector<2x4x256xf32>, i32 -> vector<2x4x256xf32>
    %c218_i32 = arith.constant 218 : i32
    %379 = tpu.dynamic_rotate %1 by %c218_i32 dim 2 : vector<2x4x256xf32>, i32 -> vector<2x4x256xf32>
    %380 = arith.addf %378, %379 : vector<2x4x256xf32>
    %c0_155 = arith.constant 0 : index
    %c50 = arith.constant 50 : index
    %c0_156 = arith.constant 0 : index
    %c0_157 = arith.constant 0 : index
    %381 = vector.load %arg2[%c0_155, %c50, %c0_156, %c0_157] : memref<1x64x4x1xf32, #tpu.memory_space<vmem>>, vector<1x1x4x1xf32>
    %382 = vector.shape_cast %381 : vector<1x1x4x1xf32> to vector<4x1xf32>
    %383 = vector.shape_cast %382 : vector<4x1xf32> to vector<1x4x1xf32>
    %384 = vector.broadcast %383 : vector<1x4x1xf32> to vector<2x4x256xf32>
    %385 = arith.mulf %384, %380 : vector<2x4x256xf32>
    %386 = arith.addf %371, %385 : vector<2x4x256xf32>
    %c0_158 = arith.constant 0 : index
    %c51 = arith.constant 51 : index
    %c0_159 = arith.constant 0 : index
    %c0_160 = arith.constant 0 : index
    %387 = vector.load %arg2[%c0_158, %c51, %c0_159, %c0_160] : memref<1x64x4x1xf32, #tpu.memory_space<vmem>>, vector<1x1x4x1xf32>
    %388 = vector.shape_cast %387 : vector<1x1x4x1xf32> to vector<4x1xf32>
    %389 = vector.shape_cast %388 : vector<4x1xf32> to vector<1x4x1xf32>
    %390 = vector.broadcast %389 : vector<1x4x1xf32> to vector<2x4x256xf32>
    %391 = arith.mulf %390, %380 : vector<2x4x256xf32>
    %392 = arith.addf %377, %391 : vector<2x4x256xf32>
    %c230_i32 = arith.constant 230 : i32
    %393 = tpu.dynamic_rotate %1 by %c230_i32 dim 2 : vector<2x4x256xf32>, i32 -> vector<2x4x256xf32>
    %c219_i32 = arith.constant 219 : i32
    %394 = tpu.dynamic_rotate %1 by %c219_i32 dim 2 : vector<2x4x256xf32>, i32 -> vector<2x4x256xf32>
    %395 = arith.addf %393, %394 : vector<2x4x256xf32>
    %c0_161 = arith.constant 0 : index
    %c52 = arith.constant 52 : index
    %c0_162 = arith.constant 0 : index
    %c0_163 = arith.constant 0 : index
    %396 = vector.load %arg2[%c0_161, %c52, %c0_162, %c0_163] : memref<1x64x4x1xf32, #tpu.memory_space<vmem>>, vector<1x1x4x1xf32>
    %397 = vector.shape_cast %396 : vector<1x1x4x1xf32> to vector<4x1xf32>
    %398 = vector.shape_cast %397 : vector<4x1xf32> to vector<1x4x1xf32>
    %399 = vector.broadcast %398 : vector<1x4x1xf32> to vector<2x4x256xf32>
    %400 = arith.mulf %399, %395 : vector<2x4x256xf32>
    %401 = arith.addf %386, %400 : vector<2x4x256xf32>
    %c0_164 = arith.constant 0 : index
    %c53 = arith.constant 53 : index
    %c0_165 = arith.constant 0 : index
    %c0_166 = arith.constant 0 : index
    %402 = vector.load %arg2[%c0_164, %c53, %c0_165, %c0_166] : memref<1x64x4x1xf32, #tpu.memory_space<vmem>>, vector<1x1x4x1xf32>
    %403 = vector.shape_cast %402 : vector<1x1x4x1xf32> to vector<4x1xf32>
    %404 = vector.shape_cast %403 : vector<4x1xf32> to vector<1x4x1xf32>
    %405 = vector.broadcast %404 : vector<1x4x1xf32> to vector<2x4x256xf32>
    %406 = arith.mulf %405, %395 : vector<2x4x256xf32>
    %407 = arith.addf %392, %406 : vector<2x4x256xf32>
    %c229_i32 = arith.constant 229 : i32
    %408 = tpu.dynamic_rotate %1 by %c229_i32 dim 2 : vector<2x4x256xf32>, i32 -> vector<2x4x256xf32>
    %c220_i32 = arith.constant 220 : i32
    %409 = tpu.dynamic_rotate %1 by %c220_i32 dim 2 : vector<2x4x256xf32>, i32 -> vector<2x4x256xf32>
    %410 = arith.addf %408, %409 : vector<2x4x256xf32>
    %c0_167 = arith.constant 0 : index
    %c54 = arith.constant 54 : index
    %c0_168 = arith.constant 0 : index
    %c0_169 = arith.constant 0 : index
    %411 = vector.load %arg2[%c0_167, %c54, %c0_168, %c0_169] : memref<1x64x4x1xf32, #tpu.memory_space<vmem>>, vector<1x1x4x1xf32>
    %412 = vector.shape_cast %411 : vector<1x1x4x1xf32> to vector<4x1xf32>
    %413 = vector.shape_cast %412 : vector<4x1xf32> to vector<1x4x1xf32>
    %414 = vector.broadcast %413 : vector<1x4x1xf32> to vector<2x4x256xf32>
    %415 = arith.mulf %414, %410 : vector<2x4x256xf32>
    %416 = arith.addf %401, %415 : vector<2x4x256xf32>
    %c0_170 = arith.constant 0 : index
    %c55 = arith.constant 55 : index
    %c0_171 = arith.constant 0 : index
    %c0_172 = arith.constant 0 : index
    %417 = vector.load %arg2[%c0_170, %c55, %c0_171, %c0_172] : memref<1x64x4x1xf32, #tpu.memory_space<vmem>>, vector<1x1x4x1xf32>
    %418 = vector.shape_cast %417 : vector<1x1x4x1xf32> to vector<4x1xf32>
    %419 = vector.shape_cast %418 : vector<4x1xf32> to vector<1x4x1xf32>
    %420 = vector.broadcast %419 : vector<1x4x1xf32> to vector<2x4x256xf32>
    %421 = arith.mulf %420, %410 : vector<2x4x256xf32>
    %422 = arith.addf %407, %421 : vector<2x4x256xf32>
    %c228_i32 = arith.constant 228 : i32
    %423 = tpu.dynamic_rotate %1 by %c228_i32 dim 2 : vector<2x4x256xf32>, i32 -> vector<2x4x256xf32>
    %c221_i32 = arith.constant 221 : i32
    %424 = tpu.dynamic_rotate %1 by %c221_i32 dim 2 : vector<2x4x256xf32>, i32 -> vector<2x4x256xf32>
    %425 = arith.addf %423, %424 : vector<2x4x256xf32>
    %c0_173 = arith.constant 0 : index
    %c56 = arith.constant 56 : index
    %c0_174 = arith.constant 0 : index
    %c0_175 = arith.constant 0 : index
    %426 = vector.load %arg2[%c0_173, %c56, %c0_174, %c0_175] : memref<1x64x4x1xf32, #tpu.memory_space<vmem>>, vector<1x1x4x1xf32>
    %427 = vector.shape_cast %426 : vector<1x1x4x1xf32> to vector<4x1xf32>
    %428 = vector.shape_cast %427 : vector<4x1xf32> to vector<1x4x1xf32>
    %429 = vector.broadcast %428 : vector<1x4x1xf32> to vector<2x4x256xf32>
    %430 = arith.mulf %429, %425 : vector<2x4x256xf32>
    %431 = arith.addf %416, %430 : vector<2x4x256xf32>
    %c0_176 = arith.constant 0 : index
    %c57 = arith.constant 57 : index
    %c0_177 = arith.constant 0 : index
    %c0_178 = arith.constant 0 : index
    %432 = vector.load %arg2[%c0_176, %c57, %c0_177, %c0_178] : memref<1x64x4x1xf32, #tpu.memory_space<vmem>>, vector<1x1x4x1xf32>
    %433 = vector.shape_cast %432 : vector<1x1x4x1xf32> to vector<4x1xf32>
    %434 = vector.shape_cast %433 : vector<4x1xf32> to vector<1x4x1xf32>
    %435 = vector.broadcast %434 : vector<1x4x1xf32> to vector<2x4x256xf32>
    %436 = arith.mulf %435, %425 : vector<2x4x256xf32>
    %437 = arith.addf %422, %436 : vector<2x4x256xf32>
    %c227_i32 = arith.constant 227 : i32
    %438 = tpu.dynamic_rotate %1 by %c227_i32 dim 2 : vector<2x4x256xf32>, i32 -> vector<2x4x256xf32>
    %c222_i32 = arith.constant 222 : i32
    %439 = tpu.dynamic_rotate %1 by %c222_i32 dim 2 : vector<2x4x256xf32>, i32 -> vector<2x4x256xf32>
    %440 = arith.addf %438, %439 : vector<2x4x256xf32>
    %c0_179 = arith.constant 0 : index
    %c58 = arith.constant 58 : index
    %c0_180 = arith.constant 0 : index
    %c0_181 = arith.constant 0 : index
    %441 = vector.load %arg2[%c0_179, %c58, %c0_180, %c0_181] : memref<1x64x4x1xf32, #tpu.memory_space<vmem>>, vector<1x1x4x1xf32>
    %442 = vector.shape_cast %441 : vector<1x1x4x1xf32> to vector<4x1xf32>
    %443 = vector.shape_cast %442 : vector<4x1xf32> to vector<1x4x1xf32>
    %444 = vector.broadcast %443 : vector<1x4x1xf32> to vector<2x4x256xf32>
    %445 = arith.mulf %444, %440 : vector<2x4x256xf32>
    %446 = arith.addf %431, %445 : vector<2x4x256xf32>
    %c0_182 = arith.constant 0 : index
    %c59 = arith.constant 59 : index
    %c0_183 = arith.constant 0 : index
    %c0_184 = arith.constant 0 : index
    %447 = vector.load %arg2[%c0_182, %c59, %c0_183, %c0_184] : memref<1x64x4x1xf32, #tpu.memory_space<vmem>>, vector<1x1x4x1xf32>
    %448 = vector.shape_cast %447 : vector<1x1x4x1xf32> to vector<4x1xf32>
    %449 = vector.shape_cast %448 : vector<4x1xf32> to vector<1x4x1xf32>
    %450 = vector.broadcast %449 : vector<1x4x1xf32> to vector<2x4x256xf32>
    %451 = arith.mulf %450, %440 : vector<2x4x256xf32>
    %452 = arith.addf %437, %451 : vector<2x4x256xf32>
    %c226_i32 = arith.constant 226 : i32
    %453 = tpu.dynamic_rotate %1 by %c226_i32 dim 2 : vector<2x4x256xf32>, i32 -> vector<2x4x256xf32>
    %c223_i32 = arith.constant 223 : i32
    %454 = tpu.dynamic_rotate %1 by %c223_i32 dim 2 : vector<2x4x256xf32>, i32 -> vector<2x4x256xf32>
    %455 = arith.addf %453, %454 : vector<2x4x256xf32>
    %c0_185 = arith.constant 0 : index
    %c60 = arith.constant 60 : index
    %c0_186 = arith.constant 0 : index
    %c0_187 = arith.constant 0 : index
    %456 = vector.load %arg2[%c0_185, %c60, %c0_186, %c0_187] : memref<1x64x4x1xf32, #tpu.memory_space<vmem>>, vector<1x1x4x1xf32>
    %457 = vector.shape_cast %456 : vector<1x1x4x1xf32> to vector<4x1xf32>
    %458 = vector.shape_cast %457 : vector<4x1xf32> to vector<1x4x1xf32>
    %459 = vector.broadcast %458 : vector<1x4x1xf32> to vector<2x4x256xf32>
    %460 = arith.mulf %459, %455 : vector<2x4x256xf32>
    %461 = arith.addf %446, %460 : vector<2x4x256xf32>
    %c0_188 = arith.constant 0 : index
    %c61 = arith.constant 61 : index
    %c0_189 = arith.constant 0 : index
    %c0_190 = arith.constant 0 : index
    %462 = vector.load %arg2[%c0_188, %c61, %c0_189, %c0_190] : memref<1x64x4x1xf32, #tpu.memory_space<vmem>>, vector<1x1x4x1xf32>
    %463 = vector.shape_cast %462 : vector<1x1x4x1xf32> to vector<4x1xf32>
    %464 = vector.shape_cast %463 : vector<4x1xf32> to vector<1x4x1xf32>
    %465 = vector.broadcast %464 : vector<1x4x1xf32> to vector<2x4x256xf32>
    %466 = arith.mulf %465, %455 : vector<2x4x256xf32>
    %467 = arith.addf %452, %466 : vector<2x4x256xf32>
    %c225_i32 = arith.constant 225 : i32
    %468 = tpu.dynamic_rotate %1 by %c225_i32 dim 2 : vector<2x4x256xf32>, i32 -> vector<2x4x256xf32>
    %c224_i32 = arith.constant 224 : i32
    %469 = tpu.dynamic_rotate %1 by %c224_i32 dim 2 : vector<2x4x256xf32>, i32 -> vector<2x4x256xf32>
    %470 = arith.addf %468, %469 : vector<2x4x256xf32>
    %c0_191 = arith.constant 0 : index
    %c62 = arith.constant 62 : index
    %c0_192 = arith.constant 0 : index
    %c0_193 = arith.constant 0 : index
    %471 = vector.load %arg2[%c0_191, %c62, %c0_192, %c0_193] : memref<1x64x4x1xf32, #tpu.memory_space<vmem>>, vector<1x1x4x1xf32>
    %472 = vector.shape_cast %471 : vector<1x1x4x1xf32> to vector<4x1xf32>
    %473 = vector.shape_cast %472 : vector<4x1xf32> to vector<1x4x1xf32>
    %474 = vector.broadcast %473 : vector<1x4x1xf32> to vector<2x4x256xf32>
    %475 = arith.mulf %474, %470 : vector<2x4x256xf32>
    %476 = arith.addf %461, %475 : vector<2x4x256xf32>
    %c0_194 = arith.constant 0 : index
    %c63 = arith.constant 63 : index
    %c0_195 = arith.constant 0 : index
    %c0_196 = arith.constant 0 : index
    %477 = vector.load %arg2[%c0_194, %c63, %c0_195, %c0_196] : memref<1x64x4x1xf32, #tpu.memory_space<vmem>>, vector<1x1x4x1xf32>
    %478 = vector.shape_cast %477 : vector<1x1x4x1xf32> to vector<4x1xf32>
    %479 = vector.shape_cast %478 : vector<4x1xf32> to vector<1x4x1xf32>
    %480 = vector.broadcast %479 : vector<1x4x1xf32> to vector<2x4x256xf32>
    %481 = arith.mulf %480, %470 : vector<2x4x256xf32>
    %482 = arith.addf %467, %481 : vector<2x4x256xf32>
    %483 = tpu.iota {dimensions = array<i32: 2>} : vector<1x1x256xi32>
    %c193_i32_197 = arith.constant 193 : i32
    %484 = vector.broadcast %c193_i32_197 : i32 to vector<1x1x256xi32>
    %485 = arith.cmpi slt, %483, %484 : vector<1x1x256xi32>
    %cst_198 = arith.constant 0.000000e+00 : f32
    %486 = vector.shape_cast %485 : vector<1x1x256xi1> to vector<1x1x256xi1>
    %487 = vector.broadcast %486 : vector<1x1x256xi1> to vector<2x4x256xi1>
    %488 = vector.broadcast %cst_198 : f32 to vector<2x4x256xf32>
    %489 = arith.select %487, %476, %488 : vector<2x4x256xi1>, vector<2x4x256xf32>
    %cst_199 = arith.constant dense<0.000000e+00> : vector<2x4xf32>
    %490 = vector.multi_reduction <add>, %489, %cst_199 [2] : vector<2x4x256xf32> to vector<2x4xf32>
    %491 = vector.shape_cast %490 : vector<2x4xf32> to vector<2x4x1xf32>
    %cst_200 = arith.constant dense<0.000000e+00> : vector<4x1xf32>
    %492 = vector.multi_reduction <add>, %491, %cst_200 [0] : vector<2x4x1xf32> to vector<4x1xf32>
    %493 = vector.shape_cast %492 : vector<4x1xf32> to vector<1x4x1xf32>
    %cst_201 = arith.constant 0.00259067351 : f32
    %494 = vector.broadcast %cst_201 : f32 to vector<1x4x1xf32>
    %495 = arith.mulf %493, %494 : vector<1x4x1xf32>
    %496 = vector.broadcast %495 : vector<1x4x1xf32> to vector<2x4x256xf32>
    %497 = arith.subf %476, %496 : vector<2x4x256xf32>
    %498 = arith.mulf %497, %497 : vector<2x4x256xf32>
    %cst_202 = arith.constant 0.000000e+00 : f32
    %499 = vector.shape_cast %485 : vector<1x1x256xi1> to vector<1x1x256xi1>
    %500 = vector.broadcast %499 : vector<1x1x256xi1> to vector<2x4x256xi1>
    %501 = vector.broadcast %cst_202 : f32 to vector<2x4x256xf32>
    %502 = arith.select %500, %498, %501 : vector<2x4x256xi1>, vector<2x4x256xf32>
    %cst_203 = arith.constant dense<0.000000e+00> : vector<2x4xf32>
    %503 = vector.multi_reduction <add>, %502, %cst_203 [2] : vector<2x4x256xf32> to vector<2x4xf32>
    %504 = vector.shape_cast %503 : vector<2x4xf32> to vector<2x4x1xf32>
    %cst_204 = arith.constant dense<0.000000e+00> : vector<4x1xf32>
    %505 = vector.multi_reduction <add>, %504, %cst_204 [0] : vector<2x4x1xf32> to vector<4x1xf32>
    %506 = vector.shape_cast %505 : vector<4x1xf32> to vector<1x4x1xf32>
    %cst_205 = arith.constant 0.00259067351 : f32
    %507 = vector.broadcast %cst_205 : f32 to vector<1x4x1xf32>
    %508 = arith.mulf %506, %507 : vector<1x4x1xf32>
    %509 = math.absf %497 : vector<2x4x256xf32>
    %cst_206 = arith.constant 9.99999974E-6 : f32
    %510 = vector.broadcast %cst_206 : f32 to vector<1x4x1xf32>
    %511 = arith.addf %508, %510 : vector<1x4x1xf32>
    %512 = math.rsqrt %511 : vector<1x4x1xf32>
    %513 = vector.broadcast %512 : vector<1x4x1xf32> to vector<2x4x256xf32>
    %514 = arith.mulf %509, %513 : vector<2x4x256xf32>
    %c255_i32_207 = arith.constant 255 : i32
    %515 = tpu.dynamic_rotate %514 by %c255_i32_207 dim 2 : vector<2x4x256xf32>, i32 -> vector<2x4x256xf32>
    %516 = arith.addf %514, %515 : vector<2x4x256xf32>
    %c254_i32_208 = arith.constant 254 : i32
    %517 = tpu.dynamic_rotate %516 by %c254_i32_208 dim 2 : vector<2x4x256xf32>, i32 -> vector<2x4x256xf32>
    %518 = arith.addf %516, %517 : vector<2x4x256xf32>
    %c252_i32_209 = arith.constant 252 : i32
    %519 = tpu.dynamic_rotate %518 by %c252_i32_209 dim 2 : vector<2x4x256xf32>, i32 -> vector<2x4x256xf32>
    %520 = arith.addf %518, %519 : vector<2x4x256xf32>
    %c248_i32_210 = arith.constant 248 : i32
    %521 = tpu.dynamic_rotate %520 by %c248_i32_210 dim 2 : vector<2x4x256xf32>, i32 -> vector<2x4x256xf32>
    %522 = arith.addf %520, %521 : vector<2x4x256xf32>
    %c240_i32_211 = arith.constant 240 : i32
    %523 = tpu.dynamic_rotate %522 by %c240_i32_211 dim 2 : vector<2x4x256xf32>, i32 -> vector<2x4x256xf32>
    %524 = arith.addf %522, %523 : vector<2x4x256xf32>
    %c224_i32_212 = arith.constant 224 : i32
    %525 = tpu.dynamic_rotate %524 by %c224_i32_212 dim 2 : vector<2x4x256xf32>, i32 -> vector<2x4x256xf32>
    %526 = arith.addf %524, %525 : vector<2x4x256xf32>
    %cst_213 = arith.constant 1.562500e-02 : f32
    %527 = vector.broadcast %cst_213 : f32 to vector<2x4x256xf32>
    %528 = arith.mulf %526, %527 : vector<2x4x256xf32>
    %c0_214 = arith.constant 0 : index
    %c0_215 = arith.constant 0 : index
    %c0_216 = arith.constant 0 : index
    %c0_217 = arith.constant 0 : index
    %529 = vector.load %arg3[%c0_214, %c0_215, %c0_216, %c0_217] : memref<1x2x4x1xf32, #tpu.memory_space<vmem>>, vector<1x1x4x1xf32>
    %530 = vector.shape_cast %529 : vector<1x1x4x1xf32> to vector<4x1xf32>
    %531 = vector.shape_cast %530 : vector<4x1xf32> to vector<1x4x1xf32>
    %532 = vector.broadcast %531 : vector<1x4x1xf32> to vector<2x4x256xf32>
    %533 = arith.addf %528, %532 : vector<2x4x256xf32>
    %c0_218 = arith.constant 0 : index
    %c0_219 = arith.constant 0 : index
    %c0_220 = arith.constant 0 : index
    %c0_221 = arith.constant 0 : index
    %534 = vector.load %arg4[%c0_218, %c0_219, %c0_220, %c0_221] : memref<2x1x4x512xf32, #tpu.memory_space<vmem>>, vector<2x1x4x256xf32>
    %535 = vector.shape_cast %534 : vector<2x1x4x256xf32> to vector<2x4x256xf32>
    %536 = vector.shape_cast %533 : vector<2x4x256xf32> to vector<2x1x4x256xf32>
    tpu.vector_store %arg4[%c0_218, %c0_219, %c0_220, %c0_221], %536 {strides = array<i32>} : memref<2x1x4x512xf32, #tpu.memory_space<vmem>>, vector<2x1x4x256xf32>,
    %cst_222 = arith.constant 0.000000e+00 : f32
    %537 = vector.shape_cast %485 : vector<1x1x256xi1> to vector<1x1x256xi1>
    %538 = vector.broadcast %537 : vector<1x1x256xi1> to vector<2x4x256xi1>
    %539 = vector.broadcast %cst_222 : f32 to vector<2x4x256xf32>
    %540 = arith.select %538, %482, %539 : vector<2x4x256xi1>, vector<2x4x256xf32>
    %cst_223 = arith.constant dense<0.000000e+00> : vector<2x4xf32>
    %541 = vector.multi_reduction <add>, %540, %cst_223 [2] : vector<2x4x256xf32> to vector<2x4xf32>
    %542 = vector.shape_cast %541 : vector<2x4xf32> to vector<2x4x1xf32>
    %cst_224 = arith.constant dense<0.000000e+00> : vector<4x1xf32>
    %543 = vector.multi_reduction <add>, %542, %cst_224 [0] : vector<2x4x1xf32> to vector<4x1xf32>
    %544 = vector.shape_cast %543 : vector<4x1xf32> to vector<1x4x1xf32>
    %cst_225 = arith.constant 0.00259067351 : f32
    %545 = vector.broadcast %cst_225 : f32 to vector<1x4x1xf32>
    %546 = arith.mulf %544, %545 : vector<1x4x1xf32>
    %547 = vector.broadcast %546 : vector<1x4x1xf32> to vector<2x4x256xf32>
    %548 = arith.subf %482, %547 : vector<2x4x256xf32>
    %549 = arith.mulf %548, %548 : vector<2x4x256xf32>
    %cst_226 = arith.constant 0.000000e+00 : f32
    %550 = vector.shape_cast %485 : vector<1x1x256xi1> to vector<1x1x256xi1>
    %551 = vector.broadcast %550 : vector<1x1x256xi1> to vector<2x4x256xi1>
    %552 = vector.broadcast %cst_226 : f32 to vector<2x4x256xf32>
    %553 = arith.select %551, %549, %552 : vector<2x4x256xi1>, vector<2x4x256xf32>
    %cst_227 = arith.constant dense<0.000000e+00> : vector<2x4xf32>
    %554 = vector.multi_reduction <add>, %553, %cst_227 [2] : vector<2x4x256xf32> to vector<2x4xf32>
    %555 = vector.shape_cast %554 : vector<2x4xf32> to vector<2x4x1xf32>
    %cst_228 = arith.constant dense<0.000000e+00> : vector<4x1xf32>
    %556 = vector.multi_reduction <add>, %555, %cst_228 [0] : vector<2x4x1xf32> to vector<4x1xf32>
    %557 = vector.shape_cast %556 : vector<4x1xf32> to vector<1x4x1xf32>
    %cst_229 = arith.constant 0.00259067351 : f32
    %558 = vector.broadcast %cst_229 : f32 to vector<1x4x1xf32>
    %559 = arith.mulf %557, %558 : vector<1x4x1xf32>
    %560 = math.absf %548 : vector<2x4x256xf32>
    %cst_230 = arith.constant 9.99999974E-6 : f32
    %561 = vector.broadcast %cst_230 : f32 to vector<1x4x1xf32>
    %562 = arith.addf %559, %561 : vector<1x4x1xf32>
    %563 = math.rsqrt %562 : vector<1x4x1xf32>
    %564 = vector.broadcast %563 : vector<1x4x1xf32> to vector<2x4x256xf32>
    %565 = arith.mulf %560, %564 : vector<2x4x256xf32>
    %c255_i32_231 = arith.constant 255 : i32
    %566 = tpu.dynamic_rotate %565 by %c255_i32_231 dim 2 : vector<2x4x256xf32>, i32 -> vector<2x4x256xf32>
    %567 = arith.addf %565, %566 : vector<2x4x256xf32>
    %c254_i32_232 = arith.constant 254 : i32
    %568 = tpu.dynamic_rotate %567 by %c254_i32_232 dim 2 : vector<2x4x256xf32>, i32 -> vector<2x4x256xf32>
    %569 = arith.addf %567, %568 : vector<2x4x256xf32>
    %c252_i32_233 = arith.constant 252 : i32
    %570 = tpu.dynamic_rotate %569 by %c252_i32_233 dim 2 : vector<2x4x256xf32>, i32 -> vector<2x4x256xf32>
    %571 = arith.addf %569, %570 : vector<2x4x256xf32>
    %c248_i32_234 = arith.constant 248 : i32
    %572 = tpu.dynamic_rotate %571 by %c248_i32_234 dim 2 : vector<2x4x256xf32>, i32 -> vector<2x4x256xf32>
    %573 = arith.addf %571, %572 : vector<2x4x256xf32>
    %c240_i32_235 = arith.constant 240 : i32
    %574 = tpu.dynamic_rotate %573 by %c240_i32_235 dim 2 : vector<2x4x256xf32>, i32 -> vector<2x4x256xf32>
    %575 = arith.addf %573, %574 : vector<2x4x256xf32>
    %c224_i32_236 = arith.constant 224 : i32
    %576 = tpu.dynamic_rotate %575 by %c224_i32_236 dim 2 : vector<2x4x256xf32>, i32 -> vector<2x4x256xf32>
    %577 = arith.addf %575, %576 : vector<2x4x256xf32>
    %cst_237 = arith.constant 1.562500e-02 : f32
    %578 = vector.broadcast %cst_237 : f32 to vector<2x4x256xf32>
    %579 = arith.mulf %577, %578 : vector<2x4x256xf32>
    %c0_238 = arith.constant 0 : index
    %c1_239 = arith.constant 1 : index
    %c0_240 = arith.constant 0 : index
    %c0_241 = arith.constant 0 : index
    %580 = vector.load %arg3[%c0_238, %c1_239, %c0_240, %c0_241] : memref<1x2x4x1xf32, #tpu.memory_space<vmem>>, vector<1x1x4x1xf32>
    %581 = vector.shape_cast %580 : vector<1x1x4x1xf32> to vector<4x1xf32>
    %582 = vector.shape_cast %581 : vector<4x1xf32> to vector<1x4x1xf32>
    %583 = vector.broadcast %582 : vector<1x4x1xf32> to vector<2x4x256xf32>
    %584 = arith.addf %579, %583 : vector<2x4x256xf32>
    %c0_242 = arith.constant 0 : index
    %c0_243 = arith.constant 0 : index
    %c0_244 = arith.constant 0 : index
    %c256 = arith.constant 256 : index
    %585 = vector.load %arg4[%c0_242, %c0_243, %c0_244, %c256] : memref<2x1x4x512xf32, #tpu.memory_space<vmem>>, vector<2x1x4x256xf32>
    %586 = vector.shape_cast %585 : vector<2x1x4x256xf32> to vector<2x4x256xf32>
    %587 = vector.shape_cast %584 : vector<2x4x256xf32> to vector<2x1x4x256xf32>
    tpu.vector_store %arg4[%c0_242, %c0_243, %c0_244, %c256], %587 {strides = array<i32>} : memref<2x1x4x512xf32, #tpu.memory_space<vmem>>, vector<2x1x4x256xf32>,
    return
  }
  func.func @transform_0(%arg0: i32) -> (i32, i32, i32, i32) {
    %c0_i32 = arith.constant 0 : i32
    %c0_i32_0 = arith.constant 0 : i32
    %c0_i32_1 = arith.constant 0 : i32
    %c0_i32_2 = arith.constant 0 : i32
    return %c0_i32, %arg0, %c0_i32_0, %c0_i32_1 : i32, i32, i32, i32
  }
  func.func @transform_1(%arg0: i32) -> (i32, i32, i32, i32) {
    %c0_i32 = arith.constant 0 : i32
    %c0_i32_0 = arith.constant 0 : i32
    %c0_i32_1 = arith.constant 0 : i32
    %c0_i32_2 = arith.constant 0 : i32
    return %arg0, %c0_i32, %c0_i32_0, %c0_i32_1 : i32, i32, i32, i32
  }
  func.func @transform_2(%arg0: i32) -> (i32, i32, i32, i32) {
    %c0_i32 = arith.constant 0 : i32
    %c0_i32_0 = arith.constant 0 : i32
    %c0_i32_1 = arith.constant 0 : i32
    %c0_i32_2 = arith.constant 0 : i32
    return %arg0, %c0_i32, %c0_i32_0, %c0_i32_1 : i32, i32, i32, i32
  }
  func.func @transform_3(%arg0: i32) -> (i32, i32, i32, i32) {
    %c0_i32 = arith.constant 0 : i32
    %c0_i32_0 = arith.constant 0 : i32
    %c0_i32_1 = arith.constant 0 : i32
    %c0_i32_2 = arith.constant 0 : i32
    return %c0_i32, %arg0, %c0_i32_0, %c0_i32_1 : i32, i32, i32, i32
  }
}

</mosaic_0001>

<llo_original>
// kernel: tpu_custom_call.1
$region0: #{tpu_custom_call.1}
  #allocation0 [shape = 'u32[]', space=smem, size = 0x4, offset = 0x4, fixed_abs, tag = 'smem constant byte address 0x4 - core index']
  #allocation1 [shape = 'u32[144,128]{1,0:T(1,128)}', space=vmem, size = 0x12000, scoped, tag = 'internal scratch']
  %s0 = inlined_call_operand.vmem [shape: f32[2,1,4,256], index: 0, kind: input, shape index: {}]
  %s1 = inlined_call_operand.vmem [shape: f32[1,64,4,1], index: 1, kind: input, shape index: {}]
  %s2 = inlined_call_operand.vmem [shape: f32[1,2,4,1], index: 2, kind: input, shape index: {}]
  %s3 = inlined_call_operand.hbm [shape: f32[2,1,4,512], index: 3, kind: output, shape index: {}]
  %s4 = sld [smem:[#allocation0]]
  $region22: #{tpu_custom_call.1} parent=0
    _
  %s6 = ssub.s32 1, %s4
  %s7 = scalar_select 0, %s6, %s4
  $region1: #{tpu_custom_call.1} parent=0
    #allocation2 [shape = 'u8[16384]{0}', space=vmem, size = 0x4000, scoped, tag = 'output window, operand 0, single buffered']
    #allocation3 [shape = 's32[1]{0}', space=sflag, size = 0x4, scoped, tag = 'scoped memory for tpu_custom_call.1']
    %8 = vsyncpa [#allocation3], 0
    // Predicated region
    $region2: #{tpu_custom_call.1} parent=1 // pred_check
      _
    $region3: #{tpu_custom_call.1} parent=1 // pred_check_branch
      %10 = sbr.rel (0) target = $region5
    $region4: #{tpu_custom_call.1} parent=1 // pred_region
      _
    $region5: #{tpu_custom_call.1} parent=1 // pred_fallthru
      _
    // Predicated region
    $region6: #{tpu_custom_call.1} parent=1 // pred_check
      _
    $region7: #{tpu_custom_call.1} parent=1 // pred_check_branch
      %12 = sbr.rel (0) target = $region9
    $region8: #{tpu_custom_call.1} parent=1 // pred_region
      _
    $region9: #{tpu_custom_call.1} parent=1 // pred_fallthru
      _
    // Predicated region
    $region10: #{tpu_custom_call.1} parent=1 // pred_check
      _
    $region11: #{tpu_custom_call.1} parent=1 // pred_check_branch
      %14 = sbr.rel (0) target = $region13
    $region12: #{tpu_custom_call.1} parent=1 // pred_region
      _
    $region13: #{tpu_custom_call.1} parent=1 // pred_fallthru
      _
    %v15 = vld [vmem:[%s0] sm:$0xff]
    %v16 = vld [vmem:[%s0 + $0x8] sm:$0xff]
    %v19 = vcombine.high %v15, %v15
    %v20 = vcombine.high %v16, %v16
    %23 = vrot.lane.b32.xlu0 %v15, 65
    %v24 = vpop.permute.xlu0 %23
    %25 = vrot.lane.b32.xlu0 %v16, 65
    %v26 = vpop.permute.xlu0 %25
    %27 = vrot.lane.b32.xlu0 %v19, 65
    %v28 = vpop.permute.xlu0 %27
    %29 = vrot.lane.b32.xlu0 %v20, 65
    %v30 = vpop.permute.xlu0 %29
    %v31 = vlaneseq
    %v32 = vand.u32 %v31, 127
    %vm33 = vcmp.lt.s32.totalorder %v32, 65
    %v34 = vsel %vm33, %v24, %v28
    %v35 = vsel %vm33, %v26, %v30
    %v36 = vsel %vm33, %v28, %v24
    %v37 = vsel %vm33, %v30, %v26
    %v42 = vcombine.low %v34, %v36
    %v43 = vcombine.low %v35, %v37
    %v46 = vadd.f32 %v15, %v42
    %v47 = vadd.f32 %v16, %v43
    %v48 = vld [vmem:[%s1] sm:$0xf]
    %50 = vset.pattern.permute.xlu0 0
    %51 = vperm.xlu0 %50, %v48
    %v52 = vpop.permute.xlu0 %51
    %v56 = vcombine.high %v46, %v46
    %v57 = vcombine.high %v47, %v47
    %v60 = vmul.f32 %v52, %v46
    %v61 = vmul.f32 %v52, %v56
    %v62 = vmul.f32 %v52, %v47
    %v63 = vmul.f32 %v52, %v57
    %v64 = vadd.f32 %v60, 0.0
    %v65 = vadd.f32 %v61, 0.0
    %v66 = vadd.f32 %v62, 0.0
    %v67 = vadd.f32 %v63, 0.0
    %s68 = scalar_lea.vmem %s1, 4
    %v69 = vld [vmem:[%s68] sm:$0xf]
    %71 = vset.pattern.permute.xlu0 0
    %72 = vperm.xlu0 %71, %v69
    %v73 = vpop.permute.xlu0 %72
    %v75 = vmul.f32 %v73, %v46
    %v76 = vmul.f32 %v73, %v56
    %v77 = vmul.f32 %v73, %v47
    %v78 = vmul.f32 %v73, %v57
    %v79 = vadd.f32 %v75, 0.0
    %v80 = vadd.f32 %v76, 0.0
    %v81 = vadd.f32 %v77, 0.0
    %v82 = vadd.f32 %v78, 0.0
    %83 = vrot.lane.b32.xlu0 %v15, 127
    %v84 = vpop.permute.xlu0 %83
    %85 = vrot.lane.b32.xlu0 %v16, 127
    %v86 = vpop.permute.xlu0 %85
    %87 = vrot.lane.b32.xlu0 %v19, 127
    %v88 = vpop.permute.xlu0 %87
    %89 = vrot.lane.b32.xlu0 %v20, 127
    %v90 = vpop.permute.xlu0 %89
    %vm91 = vcmp.lt.s32.totalorder %v32, 127
    %v92 = vsel %vm91, %v84, %v88
    %v93 = vsel %vm91, %v86, %v90
    %v94 = vsel %vm91, %v88, %v84
    %v95 = vsel %vm91, %v90, %v86
    %96 = vrot.lane.b32.xlu0 %v15, 66
    %v97 = vpop.permute.xlu0 %96
    %98 = vrot.lane.b32.xlu0 %v16, 66
    %v99 = vpop.permute.xlu0 %98
    %100 = vrot.lane.b32.xlu0 %v19, 66
    %v101 = vpop.permute.xlu0 %100
    %102 = vrot.lane.b32.xlu0 %v20, 66
    %v103 = vpop.permute.xlu0 %102
    %vm104 = vcmp.lt.s32.totalorder %v32, 66
    %v105 = vsel %vm104, %v97, %v101
    %v106 = vsel %vm104, %v99, %v103
    %v107 = vsel %vm104, %v101, %v97
    %v108 = vsel %vm104, %v103, %v99
    %v109 = vadd.f32 %v92, %v105
    %v110 = vadd.f32 %v94, %v107
    %v111 = vadd.f32 %v93, %v106
    %v112 = vadd.f32 %v95, %v108
    %s113 = scalar_lea.vmem %s1, 8
    %v114 = vld [vmem:[%s113] sm:$0xf]
    %116 = vset.pattern.permute.xlu0 0
    %117 = vperm.xlu0 %116, %v114
    %v118 = vpop.permute.xlu0 %117
    %v120 = vmul.f32 %v118, %v109
    %v121 = vmul.f32 %v118, %v110
    %v122 = vmul.f32 %v118, %v111
    %v123 = vmul.f32 %v118, %v112
    %v124 = vadd.f32 %v64, %v120
    %v125 = vadd.f32 %v65, %v121
    %v126 = vadd.f32 %v66, %v122
    %v127 = vadd.f32 %v67, %v123
    %s128 = scalar_lea.vmem %s1, 12
    %v129 = vld [vmem:[%s128] sm:$0xf]
    %131 = vset.pattern.permute.xlu0 0
    %132 = vperm.xlu0 %131, %v129
    %v133 = vpop.permute.xlu0 %132
    %v135 = vmul.f32 %v133, %v109
    %v136 = vmul.f32 %v133, %v110
    %v137 = vmul.f32 %v133, %v111
    %v138 = vmul.f32 %v133, %v112
    %v139 = vadd.f32 %v79, %v135
    %v140 = vadd.f32 %v80, %v136
    %v141 = vadd.f32 %v81, %v137
    %v142 = vadd.f32 %v82, %v138
    %143 = vrot.lane.b32.xlu0 %v15, 126
    %v144 = vpop.permute.xlu0 %143
    %145 = vrot.lane.b32.xlu0 %v16, 126
    %v146 = vpop.permute.xlu0 %145
    %147 = vrot.lane.b32.xlu0 %v19, 126
    %v148 = vpop.permute.xlu0 %147
    %149 = vrot.lane.b32.xlu0 %v20, 126
    %v150 = vpop.permute.xlu0 %149
    %vm151 = vcmp.lt.s32.totalorder %v32, 126
    %v152 = vsel %vm151, %v144, %v148
    %v153 = vsel %vm151, %v146, %v150
    %v154 = vsel %vm151, %v148, %v144
    %v155 = vsel %vm151, %v150, %v146
    %156 = vrot.lane.b32.xlu0 %v15, 67
    %v157 = vpop.permute.xlu0 %156
    %158 = vrot.lane.b32.xlu0 %v16, 67
    %v159 = vpop.permute.xlu0 %158
    %160 = vrot.lane.b32.xlu0 %v19, 67
    %v161 = vpop.permute.xlu0 %160
    %162 = vrot.lane.b32.xlu0 %v20, 67
    %v163 = vpop.permute.xlu0 %162
    %vm164 = vcmp.lt.s32.totalorder %v32, 67
    %v165 = vsel %vm164, %v157, %v161
    %v166 = vsel %vm164, %v159, %v163
    %v167 = vsel %vm164, %v161, %v157
    %v168 = vsel %vm164, %v163, %v159
    %v169 = vadd.f32 %v152, %v165
    %v170 = vadd.f32 %v154, %v167
    %v171 = vadd.f32 %v153, %v166
    %v172 = vadd.f32 %v155, %v168
    %s173 = scalar_lea.vmem %s1, 16
    %v174 = vld [vmem:[%s173] sm:$0xf]
    %176 = vset.pattern.permute.xlu0 0
    %177 = vperm.xlu0 %176, %v174
    %v178 = vpop.permute.xlu0 %177
    %v180 = vmul.f32 %v178, %v169
    %v181 = vmul.f32 %v178, %v170
    %v182 = vmul.f32 %v178, %v171
    %v183 = vmul.f32 %v178, %v172
    %v184 = vadd.f32 %v124, %v180
    %v185 = vadd.f32 %v125, %v181
    %v186 = vadd.f32 %v126, %v182
    %v187 = vadd.f32 %v127, %v183
    %s188 = scalar_lea.vmem %s1, 20
    %v189 = vld [vmem:[%s188] sm:$0xf]
    %191 = vset.pattern.permute.xlu0 0
    %192 = vperm.xlu0 %191, %v189
    %v193 = vpop.permute.xlu0 %192
    %v195 = vmul.f32 %v193, %v169
    %v196 = vmul.f32 %v193, %v170
    %v197 = vmul.f32 %v193, %v171
    %v198 = vmul.f32 %v193, %v172
    %v199 = vadd.f32 %v139, %v195
    %v200 = vadd.f32 %v140, %v196
    %v201 = vadd.f32 %v141, %v197
    %v202 = vadd.f32 %v142, %v198
    %203 = vrot.lane.b32.xlu0 %v15, 125
    %v204 = vpop.permute.xlu0 %203
    %205 = vrot.lane.b32.xlu0 %v16, 125
    %v206 = vpop.permute.xlu0 %205
    %207 = vrot.lane.b32.xlu0 %v19, 125
    %v208 = vpop.permute.xlu0 %207
    %209 = vrot.lane.b32.xlu0 %v20, 125
    %v210 = vpop.permute.xlu0 %209
    %vm211 = vcmp.lt.s32.totalorder %v32, 125
    %v212 = vsel %vm211, %v204, %v208
    %v213 = vsel %vm211, %v206, %v210
    %v214 = vsel %vm211, %v208, %v204
    %v215 = vsel %vm211, %v210, %v206
    %216 = vrot.lane.b32.xlu0 %v15, 68
    %v217 = vpop.permute.xlu0 %216
    %218 = vrot.lane.b32.xlu0 %v16, 68
    %v219 = vpop.permute.xlu0 %218
    %220 = vrot.lane.b32.xlu0 %v19, 68
    %v221 = vpop.permute.xlu0 %220
    %222 = vrot.lane.b32.xlu0 %v20, 68
    %v223 = vpop.permute.xlu0 %222
    %vm224 = vcmp.lt.s32.totalorder %v32, 68
    %v225 = vsel %vm224, %v217, %v221
    %v226 = vsel %vm224, %v219, %v223
    %v227 = vsel %vm224, %v221, %v217
    %v228 = vsel %vm224, %v223, %v219
    %v229 = vadd.f32 %v212, %v225
    %v230 = vadd.f32 %v214, %v227
    %v231 = vadd.f32 %v213, %v226
    %v232 = vadd.f32 %v215, %v228
    %s233 = scalar_lea.vmem %s1, 24
    %v234 = vld [vmem:[%s233] sm:$0xf]
    %236 = vset.pattern.permute.xlu0 0
    %237 = vperm.xlu0 %236, %v234
    %v238 = vpop.permute.xlu0 %237
    %v240 = vmul.f32 %v238, %v229
    %v241 = vmul.f32 %v238, %v230
    %v242 = vmul.f32 %v238, %v231
    %v243 = vmul.f32 %v238, %v232
    %v244 = vadd.f32 %v184, %v240
    %v245 = vadd.f32 %v185, %v241
    %v246 = vadd.f32 %v186, %v242
    %v247 = vadd.f32 %v187, %v243
    %s248 = scalar_lea.vmem %s1, 28
    %v249 = vld [vmem:[%s248] sm:$0xf]
    %251 = vset.pattern.permute.xlu0 0
    %252 = vperm.xlu0 %251, %v249
    %v253 = vpop.permute.xlu0 %252
    %v255 = vmul.f32 %v253, %v229
    %v256 = vmul.f32 %v253, %v230
    %v257 = vmul.f32 %v253, %v231
    %v258 = vmul.f32 %v253, %v232
    %v259 = vadd.f32 %v199, %v255
    %v260 = vadd.f32 %v200, %v256
    %v261 = vadd.f32 %v201, %v257
    %v262 = vadd.f32 %v202, %v258
    %263 = vrot.lane.b32.xlu0 %v15, 124
    %v264 = vpop.permute.xlu0 %263
    %265 = vrot.lane.b32.xlu0 %v16, 124
    %v266 = vpop.permute.xlu0 %265
    %267 = vrot.lane.b32.xlu0 %v19, 124
    %v268 = vpop.permute.xlu0 %267
    %269 = vrot.lane.b32.xlu0 %v20, 124
    %v270 = vpop.permute.xlu0 %269
    %vm271 = vcmp.lt.s32.totalorder %v32, 124
    %v272 = vsel %vm271, %v264, %v268
    %v273 = vsel %vm271, %v266, %v270
    %v274 = vsel %vm271, %v268, %v264
    %v275 = vsel %vm271, %v270, %v266
    %276 = vrot.lane.b32.xlu0 %v15, 69
    %v277 = vpop.permute.xlu0 %276
    %278 = vrot.lane.b32.xlu0 %v16, 69
    %v279 = vpop.permute.xlu0 %278
    %280 = vrot.lane.b32.xlu0 %v19, 69
    %v281 = vpop.permute.xlu0 %280
    %282 = vrot.lane.b32.xlu0 %v20, 69
    %v283 = vpop.permute.xlu0 %282
    %vm284 = vcmp.lt.s32.totalorder %v32, 69
    %v285 = vsel %vm284, %v277, %v281
    %v286 = vsel %vm284, %v279, %v283
    %v287 = vsel %vm284, %v281, %v277
    %v288 = vsel %vm284, %v283, %v279
    %v289 = vadd.f32 %v272, %v285
    %v290 = vadd.f32 %v274, %v287
    %v291 = vadd.f32 %v273, %v286
    %v292 = vadd.f32 %v275, %v288
    %s293 = scalar_lea.vmem %s1, 32
    %v294 = vld [vmem:[%s293] sm:$0xf]
    %296 = vset.pattern.permute.xlu0 0
    %297 = vperm.xlu0 %296, %v294
    %v298 = vpop.permute.xlu0 %297
    %v300 = vmul.f32 %v298, %v289
    %v301 = vmul.f32 %v298, %v290
    %v302 = vmul.f32 %v298, %v291
    %v303 = vmul.f32 %v298, %v292
    %v304 = vadd.f32 %v244, %v300
    %v305 = vadd.f32 %v245, %v301
    %v306 = vadd.f32 %v246, %v302
    %v307 = vadd.f32 %v247, %v303
    %s308 = scalar_lea.vmem %s1, 36
    %v309 = vld [vmem:[%s308] sm:$0xf]
    %311 = vset.pattern.permute.xlu0 0
    %312 = vperm.xlu0 %311, %v309
    %v313 = vpop.permute.xlu0 %312
    %v315 = vmul.f32 %v313, %v289
    %v316 = vmul.f32 %v313, %v290
    %v317 = vmul.f32 %v313, %v291
    %v318 = vmul.f32 %v313, %v292
    %v319 = vadd.f32 %v259, %v315
    %v320 = vadd.f32 %v260, %v316
    %v321 = vadd.f32 %v261, %v317
    %v322 = vadd.f32 %v262, %v318
    %323 = vrot.lane.b32.xlu0 %v15, 123
    %v324 = vpop.permute.xlu0 %323
    %325 = vrot.lane.b32.xlu0 %v16, 123
    %v326 = vpop.permute.xlu0 %325
    %327 = vrot.lane.b32.xlu0 %v19, 123
    %v328 = vpop.permute.xlu0 %327
    %329 = vrot.lane.b32.xlu0 %v20, 123
    %v330 = vpop.permute.xlu0 %329
    %vm331 = vcmp.lt.s32.totalorder %v32, 123
    %v332 = vsel %vm331, %v324, %v328
    %v333 = vsel %vm331, %v326, %v330
    %v334 = vsel %vm331, %v328, %v324
    %v335 = vsel %vm331, %v330, %v326
    %336 = vrot.lane.b32.xlu0 %v15, 70
    %v337 = vpop.permute.xlu0 %336
    %338 = vrot.lane.b32.xlu0 %v16, 70
    %v339 = vpop.permute.xlu0 %338
    %340 = vrot.lane.b32.xlu0 %v19, 70
    %v341 = vpop.permute.xlu0 %340
    %342 = vrot.lane.b32.xlu0 %v20, 70
    %v343 = vpop.permute.xlu0 %342
    %vm344 = vcmp.lt.s32.totalorder %v32, 70
    %v345 = vsel %vm344, %v337, %v341
    %v346 = vsel %vm344, %v339, %v343
    %v347 = vsel %vm344, %v341, %v337
    %v348 = vsel %vm344, %v343, %v339
    %v349 = vadd.f32 %v332, %v345
    %v350 = vadd.f32 %v334, %v347
    %v351 = vadd.f32 %v333, %v346
    %v352 = vadd.f32 %v335, %v348
    %s353 = scalar_lea.vmem %s1, 40
    %v354 = vld [vmem:[%s353] sm:$0xf]
    %356 = vset.pattern.permute.xlu0 0
    %357 = vperm.xlu0 %356, %v354
    %v358 = vpop.permute.xlu0 %357
    %v360 = vmul.f32 %v358, %v349
    %v361 = vmul.f32 %v358, %v350
    %v362 = vmul.f32 %v358, %v351
    %v363 = vmul.f32 %v358, %v352
    %v364 = vadd.f32 %v304, %v360
    %v365 = vadd.f32 %v305, %v361
    %v366 = vadd.f32 %v306, %v362
    %v367 = vadd.f32 %v307, %v363
    %s368 = scalar_lea.vmem %s1, 44
    %v369 = vld [vmem:[%s368] sm:$0xf]
    %371 = vset.pattern.permute.xlu0 0
    %372 = vperm.xlu0 %371, %v369
    %v373 = vpop.permute.xlu0 %372
    %v375 = vmul.f32 %v373, %v349
    %v376 = vmul.f32 %v373, %v350
    %v377 = vmul.f32 %v373, %v351
    %v378 = vmul.f32 %v373, %v352
    %v379 = vadd.f32 %v319, %v375
    %v380 = vadd.f32 %v320, %v376
    %v381 = vadd.f32 %v321, %v377
    %v382 = vadd.f32 %v322, %v378
    %383 = vrot.lane.b32.xlu0 %v15, 122
    %v384 = vpop.permute.xlu0 %383
    %385 = vrot.lane.b32.xlu0 %v16, 122
    %v386 = vpop.permute.xlu0 %385
    %387 = vrot.lane.b32.xlu0 %v19, 122
    %v388 = vpop.permute.xlu0 %387
    %389 = vrot.lane.b32.xlu0 %v20, 122
    %v390 = vpop.permute.xlu0 %389
    %vm391 = vcmp.lt.s32.totalorder %v32, 122
    %v392 = vsel %vm391, %v384, %v388
    %v393 = vsel %vm391, %v386, %v390
    %v394 = vsel %vm391, %v388, %v384
    %v395 = vsel %vm391, %v390, %v386
    %396 = vrot.lane.b32.xlu0 %v15, 71
    %v397 = vpop.permute.xlu0 %396
    %398 = vrot.lane.b32.xlu0 %v16, 71
    %v399 = vpop.permute.xlu0 %398
    %400 = vrot.lane.b32.xlu0 %v19, 71
    %v401 = vpop.permute.xlu0 %400
    %402 = vrot.lane.b32.xlu0 %v20, 71
    %v403 = vpop.permute.xlu0 %402
    %vm404 = vcmp.lt.s32.totalorder %v32, 71
    %v405 = vsel %vm404, %v397, %v401
    %v406 = vsel %vm404, %v399, %v403
    %v407 = vsel %vm404, %v401, %v397
    %v408 = vsel %vm404, %v403, %v399
    %v409 = vadd.f32 %v392, %v405
    %v410 = vadd.f32 %v394, %v407
    %v411 = vadd.f32 %v393, %v406
    %v412 = vadd.f32 %v395, %v408
    %s413 = scalar_lea.vmem %s1, 48
    %v414 = vld [vmem:[%s413] sm:$0xf]
    %416 = vset.pattern.permute.xlu0 0
    %417 = vperm.xlu0 %416, %v414
    %v418 = vpop.permute.xlu0 %417
    %v420 = vmul.f32 %v418, %v409
    %v421 = vmul.f32 %v418, %v410
    %v422 = vmul.f32 %v418, %v411
    %v423 = vmul.f32 %v418, %v412
    %v424 = vadd.f32 %v364, %v420
    %v425 = vadd.f32 %v365, %v421
    %v426 = vadd.f32 %v366, %v422
    %v427 = vadd.f32 %v367, %v423
    %s428 = scalar_lea.vmem %s1, 52
    %v429 = vld [vmem:[%s428] sm:$0xf]
    %431 = vset.pattern.permute.xlu0 0
    %432 = vperm.xlu0 %431, %v429
    %v433 = vpop.permute.xlu0 %432
    %v435 = vmul.f32 %v433, %v409
    %v436 = vmul.f32 %v433, %v410
    %v437 = vmul.f32 %v433, %v411
    %v438 = vmul.f32 %v433, %v412
    %v439 = vadd.f32 %v379, %v435
    %v440 = vadd.f32 %v380, %v436
    %v441 = vadd.f32 %v381, %v437
    %v442 = vadd.f32 %v382, %v438
    %443 = vrot.lane.b32.xlu0 %v15, 121
    %v444 = vpop.permute.xlu0 %443
    %445 = vrot.lane.b32.xlu0 %v16, 121
    %v446 = vpop.permute.xlu0 %445
    %447 = vrot.lane.b32.xlu0 %v19, 121
    %v448 = vpop.permute.xlu0 %447
    %449 = vrot.lane.b32.xlu0 %v20, 121
    %v450 = vpop.permute.xlu0 %449
    %vm451 = vcmp.lt.s32.totalorder %v32, 121
    %v452 = vsel %vm451, %v444, %v448
    %v453 = vsel %vm451, %v446, %v450
    %v454 = vsel %vm451, %v448, %v444
    %v455 = vsel %vm451, %v450, %v446
    %456 = vrot.lane.b32.xlu0 %v15, 72
    %v457 = vpop.permute.xlu0 %456
    %458 = vrot.lane.b32.xlu0 %v16, 72
    %v459 = vpop.permute.xlu0 %458
    %460 = vrot.lane.b32.xlu0 %v19, 72
    %v461 = vpop.permute.xlu0 %460
    %462 = vrot.lane.b32.xlu0 %v20, 72
    %v463 = vpop.permute.xlu0 %462
    %vm464 = vcmp.lt.s32.totalorder %v32, 72
    %v465 = vsel %vm464, %v457, %v461
    %v466 = vsel %vm464, %v459, %v463
    %v467 = vsel %vm464, %v461, %v457
    %v468 = vsel %vm464, %v463, %v459
    %v469 = vadd.f32 %v452, %v465
    %v470 = vadd.f32 %v454, %v467
    %v471 = vadd.f32 %v453, %v466
    %v472 = vadd.f32 %v455, %v468
    %s473 = scalar_lea.vmem %s1, 56
    %v474 = vld [vmem:[%s473] sm:$0xf]
    %476 = vset.pattern.permute.xlu0 0
    %477 = vperm.xlu0 %476, %v474
    %v478 = vpop.permute.xlu0 %477
    %v480 = vmul.f32 %v478, %v469
    %v481 = vmul.f32 %v478, %v470
    %v482 = vmul.f32 %v478, %v471
    %v483 = vmul.f32 %v478, %v472
    %v484 = vadd.f32 %v424, %v480
    %v485 = vadd.f32 %v425, %v481
    %v486 = vadd.f32 %v426, %v482
    %v487 = vadd.f32 %v427, %v483
    %s488 = scalar_lea.vmem %s1, 60
    %v489 = vld [vmem:[%s488] sm:$0xf]
    %491 = vset.pattern.permute.xlu0 0
    %492 = vperm.xlu0 %491, %v489
    %v493 = vpop.permute.xlu0 %492
    %v495 = vmul.f32 %v493, %v469
    %v496 = vmul.f32 %v493, %v470
    %v497 = vmul.f32 %v493, %v471
    %v498 = vmul.f32 %v493, %v472
    %v499 = vadd.f32 %v439, %v495
    %v500 = vadd.f32 %v440, %v496
    %v501 = vadd.f32 %v441, %v497
    %v502 = vadd.f32 %v442, %v498
    %503 = vrot.lane.b32.xlu0 %v15, 120
    %v504 = vpop.permute.xlu0 %503
    %505 = vrot.lane.b32.xlu0 %v16, 120
    %v506 = vpop.permute.xlu0 %505
    %507 = vrot.lane.b32.xlu0 %v19, 120
    %v508 = vpop.permute.xlu0 %507
    %509 = vrot.lane.b32.xlu0 %v20, 120
    %v510 = vpop.permute.xlu0 %509
    %vm511 = vcmp.lt.s32.totalorder %v32, 120
    %v512 = vsel %vm511, %v504, %v508
    %v513 = vsel %vm511, %v506, %v510
    %v514 = vsel %vm511, %v508, %v504
    %v515 = vsel %vm511, %v510, %v506
    %516 = vrot.lane.b32.xlu0 %v15, 73
    %v517 = vpop.permute.xlu0 %516
    %518 = vrot.lane.b32.xlu0 %v16, 73
    %v519 = vpop.permute.xlu0 %518
    %520 = vrot.lane.b32.xlu0 %v19, 73
    %v521 = vpop.permute.xlu0 %520
    %522 = vrot.lane.b32.xlu0 %v20, 73
    %v523 = vpop.permute.xlu0 %522
    %vm524 = vcmp.lt.s32.totalorder %v32, 73
    %v525 = vsel %vm524, %v517, %v521
    %v526 = vsel %vm524, %v519, %v523
    %v527 = vsel %vm524, %v521, %v517
    %v528 = vsel %vm524, %v523, %v519
    %v529 = vadd.f32 %v512, %v525
    %v530 = vadd.f32 %v514, %v527
    %v531 = vadd.f32 %v513, %v526
    %v532 = vadd.f32 %v515, %v528
    %s533 = scalar_lea.vmem %s1, 64
    %v534 = vld [vmem:[%s533] sm:$0xf]
    %536 = vset.pattern.permute.xlu0 0
    %537 = vperm.xlu0 %536, %v534
    %v538 = vpop.permute.xlu0 %537
    %v540 = vmul.f32 %v538, %v529
    %v541 = vmul.f32 %v538, %v530
    %v542 = vmul.f32 %v538, %v531
    %v543 = vmul.f32 %v538, %v532
    %v544 = vadd.f32 %v484, %v540
    %v545 = vadd.f32 %v485, %v541
    %v546 = vadd.f32 %v486, %v542
    %v547 = vadd.f32 %v487, %v543
    %s548 = scalar_lea.vmem %s1, 68
    %v549 = vld [vmem:[%s548] sm:$0xf]
    %551 = vset.pattern.permute.xlu0 0
    %552 = vperm.xlu0 %551, %v549
    %v553 = vpop.permute.xlu0 %552
    %v555 = vmul.f32 %v553, %v529
    %v556 = vmul.f32 %v553, %v530
    %v557 = vmul.f32 %v553, %v531
    %v558 = vmul.f32 %v553, %v532
    %v559 = vadd.f32 %v499, %v555
    %v560 = vadd.f32 %v500, %v556
    %v561 = vadd.f32 %v501, %v557
    %v562 = vadd.f32 %v502, %v558
    %563 = vrot.lane.b32.xlu0 %v15, 119
    %v564 = vpop.permute.xlu0 %563
    %565 = vrot.lane.b32.xlu0 %v16, 119
    %v566 = vpop.permute.xlu0 %565
    %567 = vrot.lane.b32.xlu0 %v19, 119
    %v568 = vpop.permute.xlu0 %567
    %569 = vrot.lane.b32.xlu0 %v20, 119
    %v570 = vpop.permute.xlu0 %569
    %vm571 = vcmp.lt.s32.totalorder %v32, 119
    %v572 = vsel %vm571, %v564, %v568
    %v573 = vsel %vm571, %v566, %v570
    %v574 = vsel %vm571, %v568, %v564
    %v575 = vsel %vm571, %v570, %v566
    %576 = vrot.lane.b32.xlu0 %v15, 74
    %v577 = vpop.permute.xlu0 %576
    %578 = vrot.lane.b32.xlu0 %v16, 74
    %v579 = vpop.permute.xlu0 %578
    %580 = vrot.lane.b32.xlu0 %v19, 74
    %v581 = vpop.permute.xlu0 %580
    %582 = vrot.lane.b32.xlu0 %v20, 74
    %v583 = vpop.permute.xlu0 %582
    %vm584 = vcmp.lt.s32.totalorder %v32, 74
    %v585 = vsel %vm584, %v577, %v581
    %v586 = vsel %vm584, %v579, %v583
    %v587 = vsel %vm584, %v581, %v577
    %v588 = vsel %vm584, %v583, %v579
    %v589 = vadd.f32 %v572, %v585
    %v590 = vadd.f32 %v574, %v587
    %v591 = vadd.f32 %v573, %v586
    %v592 = vadd.f32 %v575, %v588
    %s593 = scalar_lea.vmem %s1, 72
    %v594 = vld [vmem:[%s593] sm:$0xf]
    %596 = vset.pattern.permute.xlu0 0
    %597 = vperm.xlu0 %596, %v594
    %v598 = vpop.permute.xlu0 %597
    %v600 = vmul.f32 %v598, %v589
    %v601 = vmul.f32 %v598, %v590
    %v602 = vmul.f32 %v598, %v591
    %v603 = vmul.f32 %v598, %v592
    %v604 = vadd.f32 %v544, %v600
    %v605 = vadd.f32 %v545, %v601
    %v606 = vadd.f32 %v546, %v602
    %v607 = vadd.f32 %v547, %v603
    %s608 = scalar_lea.vmem %s1, 76
    %v609 = vld [vmem:[%s608] sm:$0xf]
    %611 = vset.pattern.permute.xlu0 0
    %612 = vperm.xlu0 %611, %v609
    %v613 = vpop.permute.xlu0 %612
    %v615 = vmul.f32 %v613, %v589
    %v616 = vmul.f32 %v613, %v590
    %v617 = vmul.f32 %v613, %v591
    %v618 = vmul.f32 %v613, %v592
    %v619 = vadd.f32 %v559, %v615
    %v620 = vadd.f32 %v560, %v616
    %v621 = vadd.f32 %v561, %v617
    %v622 = vadd.f32 %v562, %v618
    %623 = vrot.lane.b32.xlu0 %v15, 118
    %v624 = vpop.permute.xlu0 %623
    %625 = vrot.lane.b32.xlu0 %v16, 118
    %v626 = vpop.permute.xlu0 %625
    %627 = vrot.lane.b32.xlu0 %v19, 118
    %v628 = vpop.permute.xlu0 %627
    %629 = vrot.lane.b32.xlu0 %v20, 118
    %v630 = vpop.permute.xlu0 %629
    %vm631 = vcmp.lt.s32.totalorder %v32, 118
    %v632 = vsel %vm631, %v624, %v628
    %v633 = vsel %vm631, %v626, %v630
    %v634 = vsel %vm631, %v628, %v624
    %v635 = vsel %vm631, %v630, %v626
    %636 = vrot.lane.b32.xlu0 %v15, 75
    %v637 = vpop.permute.xlu0 %636
    %638 = vrot.lane.b32.xlu0 %v16, 75
    %v639 = vpop.permute.xlu0 %638
    %640 = vrot.lane.b32.xlu0 %v19, 75
    %v641 = vpop.permute.xlu0 %640
    %642 = vrot.lane.b32.xlu0 %v20, 75
    %v643 = vpop.permute.xlu0 %642
    %vm644 = vcmp.lt.s32.totalorder %v32, 75
    %v645 = vsel %vm644, %v637, %v641
    %v646 = vsel %vm644, %v639, %v643
    %v647 = vsel %vm644, %v641, %v637
    %v648 = vsel %vm644, %v643, %v639
    %v649 = vadd.f32 %v632, %v645
    %v650 = vadd.f32 %v634, %v647
    %v651 = vadd.f32 %v633, %v646
    %v652 = vadd.f32 %v635, %v648
    %s653 = scalar_lea.vmem %s1, 80
    %v654 = vld [vmem:[%s653] sm:$0xf]
    %656 = vset.pattern.permute.xlu0 0
    %657 = vperm.xlu0 %656, %v654
    %v658 = vpop.permute.xlu0 %657
    %v660 = vmul.f32 %v658, %v649
    %v661 = vmul.f32 %v658, %v650
    %v662 = vmul.f32 %v658, %v651
    %v663 = vmul.f32 %v658, %v652
    %v664 = vadd.f32 %v604, %v660
    %v665 = vadd.f32 %v605, %v661
    %v666 = vadd.f32 %v606, %v662
    %v667 = vadd.f32 %v607, %v663
    %s668 = scalar_lea.vmem %s1, 84
    %v669 = vld [vmem:[%s668] sm:$0xf]
    %671 = vset.pattern.permute.xlu0 0
    %672 = vperm.xlu0 %671, %v669
    %v673 = vpop.permute.xlu0 %672
    %v675 = vmul.f32 %v673, %v649
    %v676 = vmul.f32 %v673, %v650
    %v677 = vmul.f32 %v673, %v651
    %v678 = vmul.f32 %v673, %v652
    %v679 = vadd.f32 %v619, %v675
    %v680 = vadd.f32 %v620, %v676
    %v681 = vadd.f32 %v621, %v677
    %v682 = vadd.f32 %v622, %v678
    %683 = vrot.lane.b32.xlu0 %v15, 117
    %v684 = vpop.permute.xlu0 %683
    %685 = vrot.lane.b32.xlu0 %v16, 117
    %v686 = vpop.permute.xlu0 %685
    %687 = vrot.lane.b32.xlu0 %v19, 117
    %v688 = vpop.permute.xlu0 %687
    %689 = vrot.lane.b32.xlu0 %v20, 117
    %v690 = vpop.permute.xlu0 %689
    %vm691 = vcmp.lt.s32.totalorder %v32, 117
    %v692 = vsel %vm691, %v684, %v688
    %v693 = vsel %vm691, %v686, %v690
    %v694 = vsel %vm691, %v688, %v684
    %v695 = vsel %vm691, %v690, %v686
    %696 = vrot.lane.b32.xlu0 %v15, 76
    %v697 = vpop.permute.xlu0 %696
    %698 = vrot.lane.b32.xlu0 %v16, 76
    %v699 = vpop.permute.xlu0 %698
    %700 = vrot.lane.b32.xlu0 %v19, 76
    %v701 = vpop.permute.xlu0 %700
    %702 = vrot.lane.b32.xlu0 %v20, 76
    %v703 = vpop.permute.xlu0 %702
    %vm704 = vcmp.lt.s32.totalorder %v32, 76
    %v705 = vsel %vm704, %v697, %v701
    %v706 = vsel %vm704, %v699, %v703
    %v707 = vsel %vm704, %v701, %v697
    %v708 = vsel %vm704, %v703, %v699
    %v709 = vadd.f32 %v692, %v705
    %v710 = vadd.f32 %v694, %v707
    %v711 = vadd.f32 %v693, %v706
    %v712 = vadd.f32 %v695, %v708
    %s713 = scalar_lea.vmem %s1, 88
    %v714 = vld [vmem:[%s713] sm:$0xf]
    %716 = vset.pattern.permute.xlu0 0
    %717 = vperm.xlu0 %716, %v714
    %v718 = vpop.permute.xlu0 %717
    %v720 = vmul.f32 %v718, %v709
    %v721 = vmul.f32 %v718, %v710
    %v722 = vmul.f32 %v718, %v711
    %v723 = vmul.f32 %v718, %v712
    %v724 = vadd.f32 %v664, %v720
    %v725 = vadd.f32 %v665, %v721
    %v726 = vadd.f32 %v666, %v722
    %v727 = vadd.f32 %v667, %v723
    %s728 = scalar_lea.vmem %s1, 92
    %v729 = vld [vmem:[%s728] sm:$0xf]
    %731 = vset.pattern.permute.xlu0 0
    %732 = vperm.xlu0 %731, %v729
    %v733 = vpop.permute.xlu0 %732
    %v735 = vmul.f32 %v733, %v709
    %v736 = vmul.f32 %v733, %v710
    %v737 = vmul.f32 %v733, %v711
    %v738 = vmul.f32 %v733, %v712
    %v739 = vadd.f32 %v679, %v735
    %v740 = vadd.f32 %v680, %v736
    %v741 = vadd.f32 %v681, %v737
    %v742 = vadd.f32 %v682, %v738
    %743 = vrot.lane.b32.xlu0 %v15, 116
    %v744 = vpop.permute.xlu0 %743
    %745 = vrot.lane.b32.xlu0 %v16, 116
    %v746 = vpop.permute.xlu0 %745
    %747 = vrot.lane.b32.xlu0 %v19, 116
    %v748 = vpop.permute.xlu0 %747
    %749 = vrot.lane.b32.xlu0 %v20, 116
    %v750 = vpop.permute.xlu0 %749
    %vm751 = vcmp.lt.s32.totalorder %v32, 116
    %v752 = vsel %vm751, %v744, %v748
    %v753 = vsel %vm751, %v746, %v750
    %v754 = vsel %vm751, %v748, %v744
    %v755 = vsel %vm751, %v750, %v746
    %756 = vrot.lane.b32.xlu0 %v15, 77
    %v757 = vpop.permute.xlu0 %756
    %758 = vrot.lane.b32.xlu0 %v16, 77
    %v759 = vpop.permute.xlu0 %758
    %760 = vrot.lane.b32.xlu0 %v19, 77
    %v761 = vpop.permute.xlu0 %760
    %762 = vrot.lane.b32.xlu0 %v20, 77
    %v763 = vpop.permute.xlu0 %762
    %vm764 = vcmp.lt.s32.totalorder %v32, 77
    %v765 = vsel %vm764, %v757, %v761
    %v766 = vsel %vm764, %v759, %v763
    %v767 = vsel %vm764, %v761, %v757
    %v768 = vsel %vm764, %v763, %v759
    %v769 = vadd.f32 %v752, %v765
    %v770 = vadd.f32 %v754, %v767
    %v771 = vadd.f32 %v753, %v766
    %v772 = vadd.f32 %v755, %v768
    %s773 = scalar_lea.vmem %s1, 96
    %v774 = vld [vmem:[%s773] sm:$0xf]
    %776 = vset.pattern.permute.xlu0 0
    %777 = vperm.xlu0 %776, %v774
    %v778 = vpop.permute.xlu0 %777
    %v780 = vmul.f32 %v778, %v769
    %v781 = vmul.f32 %v778, %v770
    %v782 = vmul.f32 %v778, %v771
    %v783 = vmul.f32 %v778, %v772
    %v784 = vadd.f32 %v724, %v780
    %v785 = vadd.f32 %v725, %v781
    %v786 = vadd.f32 %v726, %v782
    %v787 = vadd.f32 %v727, %v783
    %s788 = scalar_lea.vmem %s1, 100
    %v789 = vld [vmem:[%s788] sm:$0xf]
    %791 = vset.pattern.permute.xlu0 0
    %792 = vperm.xlu0 %791, %v789
    %v793 = vpop.permute.xlu0 %792
    %v795 = vmul.f32 %v793, %v769
    %v796 = vmul.f32 %v793, %v770
    %v797 = vmul.f32 %v793, %v771
    %v798 = vmul.f32 %v793, %v772
    %v799 = vadd.f32 %v739, %v795
    %v800 = vadd.f32 %v740, %v796
    %v801 = vadd.f32 %v741, %v797
    %v802 = vadd.f32 %v742, %v798
    %803 = vrot.lane.b32.xlu0 %v15, 115
    %v804 = vpop.permute.xlu0 %803
    %805 = vrot.lane.b32.xlu0 %v16, 115
    %v806 = vpop.permute.xlu0 %805
    %807 = vrot.lane.b32.xlu0 %v19, 115
    %v808 = vpop.permute.xlu0 %807
    %809 = vrot.lane.b32.xlu0 %v20, 115
    %v810 = vpop.permute.xlu0 %809
    %vm811 = vcmp.lt.s32.totalorder %v32, 115
    %v812 = vsel %vm811, %v804, %v808
    %v813 = vsel %vm811, %v806, %v810
    %v814 = vsel %vm811, %v808, %v804
    %v815 = vsel %vm811, %v810, %v806
    %816 = vrot.lane.b32.xlu0 %v15, 78
    %v817 = vpop.permute.xlu0 %816
    %818 = vrot.lane.b32.xlu0 %v16, 78
    %v819 = vpop.permute.xlu0 %818
    %820 = vrot.lane.b32.xlu0 %v19, 78
    %v821 = vpop.permute.xlu0 %820
    %822 = vrot.lane.b32.xlu0 %v20, 78
    %v823 = vpop.permute.xlu0 %822
    %vm824 = vcmp.lt.s32.totalorder %v32, 78
    %v825 = vsel %vm824, %v817, %v821
    %v826 = vsel %vm824, %v819, %v823
    %v827 = vsel %vm824, %v821, %v817
    %v828 = vsel %vm824, %v823, %v819
    %v829 = vadd.f32 %v812, %v825
    %v830 = vadd.f32 %v814, %v827
    %v831 = vadd.f32 %v813, %v826
    %v832 = vadd.f32 %v815, %v828
    %s833 = scalar_lea.vmem %s1, 104
    %v834 = vld [vmem:[%s833] sm:$0xf]
    %836 = vset.pattern.permute.xlu0 0
    %837 = vperm.xlu0 %836, %v834
    %v838 = vpop.permute.xlu0 %837
    %v840 = vmul.f32 %v838, %v829
    %v841 = vmul.f32 %v838, %v830
    %v842 = vmul.f32 %v838, %v831
    %v843 = vmul.f32 %v838, %v832
    %v844 = vadd.f32 %v784, %v840
    %v845 = vadd.f32 %v785, %v841
    %v846 = vadd.f32 %v786, %v842
    %v847 = vadd.f32 %v787, %v843
    %s848 = scalar_lea.vmem %s1, 108
    %v849 = vld [vmem:[%s848] sm:$0xf]
    %851 = vset.pattern.permute.xlu0 0
    %852 = vperm.xlu0 %851, %v849
    %v853 = vpop.permute.xlu0 %852
    %v855 = vmul.f32 %v853, %v829
    %v856 = vmul.f32 %v853, %v830
    %v857 = vmul.f32 %v853, %v831
    %v858 = vmul.f32 %v853, %v832
    %v859 = vadd.f32 %v799, %v855
    %v860 = vadd.f32 %v800, %v856
    %v861 = vadd.f32 %v801, %v857
    %v862 = vadd.f32 %v802, %v858
    %863 = vrot.lane.b32.xlu0 %v15, 114
    %v864 = vpop.permute.xlu0 %863
    %865 = vrot.lane.b32.xlu0 %v16, 114
    %v866 = vpop.permute.xlu0 %865
    %867 = vrot.lane.b32.xlu0 %v19, 114
    %v868 = vpop.permute.xlu0 %867
    %869 = vrot.lane.b32.xlu0 %v20, 114
    %v870 = vpop.permute.xlu0 %869
    %vm871 = vcmp.lt.s32.totalorder %v32, 114
    %v872 = vsel %vm871, %v864, %v868
    %v873 = vsel %vm871, %v866, %v870
    %v874 = vsel %vm871, %v868, %v864
    %v875 = vsel %vm871, %v870, %v866
    %876 = vrot.lane.b32.xlu0 %v15, 79
    %v877 = vpop.permute.xlu0 %876
    %878 = vrot.lane.b32.xlu0 %v16, 79
    %v879 = vpop.permute.xlu0 %878
    %880 = vrot.lane.b32.xlu0 %v19, 79
    %v881 = vpop.permute.xlu0 %880
    %882 = vrot.lane.b32.xlu0 %v20, 79
    %v883 = vpop.permute.xlu0 %882
    %vm884 = vcmp.lt.s32.totalorder %v32, 79
    %v885 = vsel %vm884, %v877, %v881
    %v886 = vsel %vm884, %v879, %v883
    %v887 = vsel %vm884, %v881, %v877
    %v888 = vsel %vm884, %v883, %v879
    %v889 = vadd.f32 %v872, %v885
    %v890 = vadd.f32 %v874, %v887
    %v891 = vadd.f32 %v873, %v886
    %v892 = vadd.f32 %v875, %v888
    %s893 = scalar_lea.vmem %s1, 112
    %v894 = vld [vmem:[%s893] sm:$0xf]
    %896 = vset.pattern.permute.xlu0 0
    %897 = vperm.xlu0 %896, %v894
    %v898 = vpop.permute.xlu0 %897
    %v900 = vmul.f32 %v898, %v889
    %v901 = vmul.f32 %v898, %v890
    %v902 = vmul.f32 %v898, %v891
    %v903 = vmul.f32 %v898, %v892
    %v904 = vadd.f32 %v844, %v900
    %v905 = vadd.f32 %v845, %v901
    %v906 = vadd.f32 %v846, %v902
    %v907 = vadd.f32 %v847, %v903
    %s908 = scalar_lea.vmem %s1, 116
    %v909 = vld [vmem:[%s908] sm:$0xf]
    %911 = vset.pattern.permute.xlu0 0
    %912 = vperm.xlu0 %911, %v909
    %v913 = vpop.permute.xlu0 %912
    %v915 = vmul.f32 %v913, %v889
    %v916 = vmul.f32 %v913, %v890
    %v917 = vmul.f32 %v913, %v891
    %v918 = vmul.f32 %v913, %v892
    %v919 = vadd.f32 %v859, %v915
    %v920 = vadd.f32 %v860, %v916
    %v921 = vadd.f32 %v861, %v917
    %v922 = vadd.f32 %v862, %v918
    %923 = vrot.lane.b32.xlu0 %v15, 113
    %v924 = vpop.permute.xlu0 %923
    %925 = vrot.lane.b32.xlu0 %v16, 113
    %v926 = vpop.permute.xlu0 %925
    %927 = vrot.lane.b32.xlu0 %v19, 113
    %v928 = vpop.permute.xlu0 %927
    %929 = vrot.lane.b32.xlu0 %v20, 113
    %v930 = vpop.permute.xlu0 %929
    %vm931 = vcmp.lt.s32.totalorder %v32, 113
    %v932 = vsel %vm931, %v924, %v928
    %v933 = vsel %vm931, %v926, %v930
    %v934 = vsel %vm931, %v928, %v924
    %v935 = vsel %vm931, %v930, %v926
    %936 = vrot.lane.b32.xlu0 %v15, 80
    %v937 = vpop.permute.xlu0 %936
    %938 = vrot.lane.b32.xlu0 %v16, 80
    %v939 = vpop.permute.xlu0 %938
    %940 = vrot.lane.b32.xlu0 %v19, 80
    %v941 = vpop.permute.xlu0 %940
    %942 = vrot.lane.b32.xlu0 %v20, 80
    %v943 = vpop.permute.xlu0 %942
    %vm944 = vcmp.lt.s32.totalorder %v32, 80
    %v945 = vsel %vm944, %v937, %v941
    %v946 = vsel %vm944, %v939, %v943
    %v947 = vsel %vm944, %v941, %v937
    %v948 = vsel %vm944, %v943, %v939
    %v949 = vadd.f32 %v932, %v945
    %v950 = vadd.f32 %v934, %v947
    %v951 = vadd.f32 %v933, %v946
    %v952 = vadd.f32 %v935, %v948
    %s953 = scalar_lea.vmem %s1, 120
    %v954 = vld [vmem:[%s953] sm:$0xf]
    %956 = vset.pattern.permute.xlu0 0
    %957 = vperm.xlu0 %956, %v954
    %v958 = vpop.permute.xlu0 %957
    %v960 = vmul.f32 %v958, %v949
    %v961 = vmul.f32 %v958, %v950
    %v962 = vmul.f32 %v958, %v951
    %v963 = vmul.f32 %v958, %v952
    %v964 = vadd.f32 %v904, %v960
    %v965 = vadd.f32 %v905, %v961
    %v966 = vadd.f32 %v906, %v962
    %v967 = vadd.f32 %v907, %v963
    %s968 = scalar_lea.vmem %s1, 124
    %v969 = vld [vmem:[%s968] sm:$0xf]
    %971 = vset.pattern.permute.xlu0 0
    %972 = vperm.xlu0 %971, %v969
    %v973 = vpop.permute.xlu0 %972
    %v975 = vmul.f32 %v973, %v949
    %v976 = vmul.f32 %v973, %v950
    %v977 = vmul.f32 %v973, %v951
    %v978 = vmul.f32 %v973, %v952
    %v979 = vadd.f32 %v919, %v975
    %v980 = vadd.f32 %v920, %v976
    %v981 = vadd.f32 %v921, %v977
    %v982 = vadd.f32 %v922, %v978
    %983 = vrot.lane.b32.xlu0 %v15, 112
    %v984 = vpop.permute.xlu0 %983
    %985 = vrot.lane.b32.xlu0 %v16, 112
    %v986 = vpop.permute.xlu0 %985
    %987 = vrot.lane.b32.xlu0 %v19, 112
    %v988 = vpop.permute.xlu0 %987
    %989 = vrot.lane.b32.xlu0 %v20, 112
    %v990 = vpop.permute.xlu0 %989
    %vm991 = vcmp.lt.s32.totalorder %v32, 112
    %v992 = vsel %vm991, %v984, %v988
    %v993 = vsel %vm991, %v986, %v990
    %v994 = vsel %vm991, %v988, %v984
    %v995 = vsel %vm991, %v990, %v986
    %996 = vrot.lane.b32.xlu0 %v15, 81
    %v997 = vpop.permute.xlu0 %996
    %998 = vrot.lane.b32.xlu0 %v16, 81
    %v999 = vpop.permute.xlu0 %998
    %1000 = vrot.lane.b32.xlu0 %v19, 81
    %v1001 = vpop.permute.xlu0 %1000
    %1002 = vrot.lane.b32.xlu0 %v20, 81
    %v1003 = vpop.permute.xlu0 %1002
    %vm1004 = vcmp.lt.s32.totalorder %v32, 81
    %v1005 = vsel %vm1004, %v997, %v1001
    %v1006 = vsel %vm1004, %v999, %v1003
    %v1007 = vsel %vm1004, %v1001, %v997
    %v1008 = vsel %vm1004, %v1003, %v999
    %v1009 = vadd.f32 %v992, %v1005
    %v1010 = vadd.f32 %v994, %v1007
    %v1011 = vadd.f32 %v993, %v1006
    %v1012 = vadd.f32 %v995, %v1008
    %s1013 = scalar_lea.vmem %s1, 128
    %v1014 = vld [vmem:[%s1013] sm:$0xf]
    %1016 = vset.pattern.permute.xlu0 0
    %1017 = vperm.xlu0 %1016, %v1014
    %v1018 = vpop.permute.xlu0 %1017
    %v1020 = vmul.f32 %v1018, %v1009
    %v1021 = vmul.f32 %v1018, %v1010
    %v1022 = vmul.f32 %v1018, %v1011
    %v1023 = vmul.f32 %v1018, %v1012
    %v1024 = vadd.f32 %v964, %v1020
    %v1025 = vadd.f32 %v965, %v1021
    %v1026 = vadd.f32 %v966, %v1022
    %v1027 = vadd.f32 %v967, %v1023
    %s1028 = scalar_lea.vmem %s1, 132
    %v1029 = vld [vmem:[%s1028] sm:$0xf]
    %1031 = vset.pattern.permute.xlu0 0
    %1032 = vperm.xlu0 %1031, %v1029
    %v1033 = vpop.permute.xlu0 %1032
    %v1035 = vmul.f32 %v1033, %v1009
    %v1036 = vmul.f32 %v1033, %v1010
    %v1037 = vmul.f32 %v1033, %v1011
    %v1038 = vmul.f32 %v1033, %v1012
    %v1039 = vadd.f32 %v979, %v1035
    %v1040 = vadd.f32 %v980, %v1036
    %v1041 = vadd.f32 %v981, %v1037
    %v1042 = vadd.f32 %v982, %v1038
    %1043 = vrot.lane.b32.xlu0 %v15, 111
    %v1044 = vpop.permute.xlu0 %1043
    %1045 = vrot.lane.b32.xlu0 %v16, 111
    %v1046 = vpop.permute.xlu0 %1045
    %1047 = vrot.lane.b32.xlu0 %v19, 111
    %v1048 = vpop.permute.xlu0 %1047
    %1049 = vrot.lane.b32.xlu0 %v20, 111
    %v1050 = vpop.permute.xlu0 %1049
    %vm1051 = vcmp.lt.s32.totalorder %v32, 111
    %v1052 = vsel %vm1051, %v1044, %v1048
    %v1053 = vsel %vm1051, %v1046, %v1050
    %v1054 = vsel %vm1051, %v1048, %v1044
    %v1055 = vsel %vm1051, %v1050, %v1046
    %1056 = vrot.lane.b32.xlu0 %v15, 82
    %v1057 = vpop.permute.xlu0 %1056
    %1058 = vrot.lane.b32.xlu0 %v16, 82
    %v1059 = vpop.permute.xlu0 %1058
    %1060 = vrot.lane.b32.xlu0 %v19, 82
    %v1061 = vpop.permute.xlu0 %1060
    %1062 = vrot.lane.b32.xlu0 %v20, 82
    %v1063 = vpop.permute.xlu0 %1062
    %vm1064 = vcmp.lt.s32.totalorder %v32, 82
    %v1065 = vsel %vm1064, %v1057, %v1061
    %v1066 = vsel %vm1064, %v1059, %v1063
    %v1067 = vsel %vm1064, %v1061, %v1057
    %v1068 = vsel %vm1064, %v1063, %v1059
    %v1069 = vadd.f32 %v1052, %v1065
    %v1070 = vadd.f32 %v1054, %v1067
    %v1071 = vadd.f32 %v1053, %v1066
    %v1072 = vadd.f32 %v1055, %v1068
    %s1073 = scalar_lea.vmem %s1, 136
    %v1074 = vld [vmem:[%s1073] sm:$0xf]
    %1076 = vset.pattern.permute.xlu0 0
    %1077 = vperm.xlu0 %1076, %v1074
    %v1078 = vpop.permute.xlu0 %1077
    %v1080 = vmul.f32 %v1078, %v1069
    %v1081 = vmul.f32 %v1078, %v1070
    %v1082 = vmul.f32 %v1078, %v1071
    %v1083 = vmul.f32 %v1078, %v1072
    %v1084 = vadd.f32 %v1024, %v1080
    %v1085 = vadd.f32 %v1025, %v1081
    %v1086 = vadd.f32 %v1026, %v1082
    %v1087 = vadd.f32 %v1027, %v1083
    %s1088 = scalar_lea.vmem %s1, 140
    %v1089 = vld [vmem:[%s1088] sm:$0xf]
    %1091 = vset.pattern.permute.xlu0 0
    %1092 = vperm.xlu0 %1091, %v1089
    %v1093 = vpop.permute.xlu0 %1092
    %v1095 = vmul.f32 %v1093, %v1069
    %v1096 = vmul.f32 %v1093, %v1070
    %v1097 = vmul.f32 %v1093, %v1071
    %v1098 = vmul.f32 %v1093, %v1072
    %v1099 = vadd.f32 %v1039, %v1095
    %v1100 = vadd.f32 %v1040, %v1096
    %v1101 = vadd.f32 %v1041, %v1097
    %v1102 = vadd.f32 %v1042, %v1098
    %1103 = vrot.lane.b32.xlu0 %v15, 110
    %v1104 = vpop.permute.xlu0 %1103
    %1105 = vrot.lane.b32.xlu0 %v16, 110
    %v1106 = vpop.permute.xlu0 %1105
    %1107 = vrot.lane.b32.xlu0 %v19, 110
    %v1108 = vpop.permute.xlu0 %1107
    %1109 = vrot.lane.b32.xlu0 %v20, 110
    %v1110 = vpop.permute.xlu0 %1109
    %vm1111 = vcmp.lt.s32.totalorder %v32, 110
    %v1112 = vsel %vm1111, %v1104, %v1108
    %v1113 = vsel %vm1111, %v1106, %v1110
    %v1114 = vsel %vm1111, %v1108, %v1104
    %v1115 = vsel %vm1111, %v1110, %v1106
    %1116 = vrot.lane.b32.xlu0 %v15, 83
    %v1117 = vpop.permute.xlu0 %1116
    %1118 = vrot.lane.b32.xlu0 %v16, 83
    %v1119 = vpop.permute.xlu0 %1118
    %1120 = vrot.lane.b32.xlu0 %v19, 83
    %v1121 = vpop.permute.xlu0 %1120
    %1122 = vrot.lane.b32.xlu0 %v20, 83
    %v1123 = vpop.permute.xlu0 %1122
    %vm1124 = vcmp.lt.s32.totalorder %v32, 83
    %v1125 = vsel %vm1124, %v1117, %v1121
    %v1126 = vsel %vm1124, %v1119, %v1123
    %v1127 = vsel %vm1124, %v1121, %v1117
    %v1128 = vsel %vm1124, %v1123, %v1119
    %v1129 = vadd.f32 %v1112, %v1125
    %v1130 = vadd.f32 %v1114, %v1127
    %v1131 = vadd.f32 %v1113, %v1126
    %v1132 = vadd.f32 %v1115, %v1128
    %s1133 = scalar_lea.vmem %s1, 144
    %v1134 = vld [vmem:[%s1133] sm:$0xf]
    %1136 = vset.pattern.permute.xlu0 0
    %1137 = vperm.xlu0 %1136, %v1134
    %v1138 = vpop.permute.xlu0 %1137
    %v1140 = vmul.f32 %v1138, %v1129
    %v1141 = vmul.f32 %v1138, %v1130
    %v1142 = vmul.f32 %v1138, %v1131
    %v1143 = vmul.f32 %v1138, %v1132
    %v1144 = vadd.f32 %v1084, %v1140
    %v1145 = vadd.f32 %v1085, %v1141
    %v1146 = vadd.f32 %v1086, %v1142
    %v1147 = vadd.f32 %v1087, %v1143
    %s1148 = scalar_lea.vmem %s1, 148
    %v1149 = vld [vmem:[%s1148] sm:$0xf]
    %1151 = vset.pattern.permute.xlu0 0
    %1152 = vperm.xlu0 %1151, %v1149
    %v1153 = vpop.permute.xlu0 %1152
    %v1155 = vmul.f32 %v1153, %v1129
    %v1156 = vmul.f32 %v1153, %v1130
    %v1157 = vmul.f32 %v1153, %v1131
    %v1158 = vmul.f32 %v1153, %v1132
    %v1159 = vadd.f32 %v1099, %v1155
    %v1160 = vadd.f32 %v1100, %v1156
    %v1161 = vadd.f32 %v1101, %v1157
    %v1162 = vadd.f32 %v1102, %v1158
    %1163 = vrot.lane.b32.xlu0 %v15, 109
    %v1164 = vpop.permute.xlu0 %1163
    %1165 = vrot.lane.b32.xlu0 %v16, 109
    %v1166 = vpop.permute.xlu0 %1165
    %1167 = vrot.lane.b32.xlu0 %v19, 109
    %v1168 = vpop.permute.xlu0 %1167
    %1169 = vrot.lane.b32.xlu0 %v20, 109
    %v1170 = vpop.permute.xlu0 %1169
    %vm1171 = vcmp.lt.s32.totalorder %v32, 109
    %v1172 = vsel %vm1171, %v1164, %v1168
    %v1173 = vsel %vm1171, %v1166, %v1170
    %v1174 = vsel %vm1171, %v1168, %v1164
    %v1175 = vsel %vm1171, %v1170, %v1166
    %1176 = vrot.lane.b32.xlu0 %v15, 84
    %v1177 = vpop.permute.xlu0 %1176
    %1178 = vrot.lane.b32.xlu0 %v16, 84
    %v1179 = vpop.permute.xlu0 %1178
    %1180 = vrot.lane.b32.xlu0 %v19, 84
    %v1181 = vpop.permute.xlu0 %1180
    %1182 = vrot.lane.b32.xlu0 %v20, 84
    %v1183 = vpop.permute.xlu0 %1182
    %vm1184 = vcmp.lt.s32.totalorder %v32, 84
    %v1185 = vsel %vm1184, %v1177, %v1181
    %v1186 = vsel %vm1184, %v1179, %v1183
    %v1187 = vsel %vm1184, %v1181, %v1177
    %v1188 = vsel %vm1184, %v1183, %v1179
    %v1189 = vadd.f32 %v1172, %v1185
    %v1190 = vadd.f32 %v1174, %v1187
    %v1191 = vadd.f32 %v1173, %v1186
    %v1192 = vadd.f32 %v1175, %v1188
    %s1193 = scalar_lea.vmem %s1, 152
    %v1194 = vld [vmem:[%s1193] sm:$0xf]
    %1196 = vset.pattern.permute.xlu0 0
    %1197 = vperm.xlu0 %1196, %v1194
    %v1198 = vpop.permute.xlu0 %1197
    %v1200 = vmul.f32 %v1198, %v1189
    %v1201 = vmul.f32 %v1198, %v1190
    %v1202 = vmul.f32 %v1198, %v1191
    %v1203 = vmul.f32 %v1198, %v1192
    %v1204 = vadd.f32 %v1144, %v1200
    %v1205 = vadd.f32 %v1145, %v1201
    %v1206 = vadd.f32 %v1146, %v1202
    %v1207 = vadd.f32 %v1147, %v1203
    %s1208 = scalar_lea.vmem %s1, 156
    %v1209 = vld [vmem:[%s1208] sm:$0xf]
    %1211 = vset.pattern.permute.xlu0 0
    %1212 = vperm.xlu0 %1211, %v1209
    %v1213 = vpop.permute.xlu0 %1212
    %v1215 = vmul.f32 %v1213, %v1189
    %v1216 = vmul.f32 %v1213, %v1190
    %v1217 = vmul.f32 %v1213, %v1191
    %v1218 = vmul.f32 %v1213, %v1192
    %v1219 = vadd.f32 %v1159, %v1215
    %v1220 = vadd.f32 %v1160, %v1216
    %v1221 = vadd.f32 %v1161, %v1217
    %v1222 = vadd.f32 %v1162, %v1218
    %1223 = vrot.lane.b32.xlu0 %v15, 108
    %v1224 = vpop.permute.xlu0 %1223
    %1225 = vrot.lane.b32.xlu0 %v16, 108
    %v1226 = vpop.permute.xlu0 %1225
    %1227 = vrot.lane.b32.xlu0 %v19, 108
    %v1228 = vpop.permute.xlu0 %1227
    %1229 = vrot.lane.b32.xlu0 %v20, 108
    %v1230 = vpop.permute.xlu0 %1229
    %vm1231 = vcmp.lt.s32.totalorder %v32, 108
    %v1232 = vsel %vm1231, %v1224, %v1228
    %v1233 = vsel %vm1231, %v1226, %v1230
    %v1234 = vsel %vm1231, %v1228, %v1224
    %v1235 = vsel %vm1231, %v1230, %v1226
    %1236 = vrot.lane.b32.xlu0 %v15, 85
    %v1237 = vpop.permute.xlu0 %1236
    %1238 = vrot.lane.b32.xlu0 %v16, 85
    %v1239 = vpop.permute.xlu0 %1238
    %1240 = vrot.lane.b32.xlu0 %v19, 85
    %v1241 = vpop.permute.xlu0 %1240
    %1242 = vrot.lane.b32.xlu0 %v20, 85
    %v1243 = vpop.permute.xlu0 %1242
    %vm1244 = vcmp.lt.s32.totalorder %v32, 85
    %v1245 = vsel %vm1244, %v1237, %v1241
    %v1246 = vsel %vm1244, %v1239, %v1243
    %v1247 = vsel %vm1244, %v1241, %v1237
    %v1248 = vsel %vm1244, %v1243, %v1239
    %v1249 = vadd.f32 %v1232, %v1245
    %v1250 = vadd.f32 %v1234, %v1247
    %v1251 = vadd.f32 %v1233, %v1246
    %v1252 = vadd.f32 %v1235, %v1248
    %s1253 = scalar_lea.vmem %s1, 160
    %v1254 = vld [vmem:[%s1253] sm:$0xf]
    %1256 = vset.pattern.permute.xlu0 0
    %1257 = vperm.xlu0 %1256, %v1254
    %v1258 = vpop.permute.xlu0 %1257
    %v1260 = vmul.f32 %v1258, %v1249
    %v1261 = vmul.f32 %v1258, %v1250
    %v1262 = vmul.f32 %v1258, %v1251
    %v1263 = vmul.f32 %v1258, %v1252
    %v1264 = vadd.f32 %v1204, %v1260
    %v1265 = vadd.f32 %v1205, %v1261
    %v1266 = vadd.f32 %v1206, %v1262
    %v1267 = vadd.f32 %v1207, %v1263
    %s1268 = scalar_lea.vmem %s1, 164
    %v1269 = vld [vmem:[%s1268] sm:$0xf]
    %1271 = vset.pattern.permute.xlu0 0
    %1272 = vperm.xlu0 %1271, %v1269
    %v1273 = vpop.permute.xlu0 %1272
    %v1275 = vmul.f32 %v1273, %v1249
    %v1276 = vmul.f32 %v1273, %v1250
    %v1277 = vmul.f32 %v1273, %v1251
    %v1278 = vmul.f32 %v1273, %v1252
    %v1279 = vadd.f32 %v1219, %v1275
    %v1280 = vadd.f32 %v1220, %v1276
    %v1281 = vadd.f32 %v1221, %v1277
    %v1282 = vadd.f32 %v1222, %v1278
    %1283 = vrot.lane.b32.xlu0 %v15, 107
    %v1284 = vpop.permute.xlu0 %1283
    %1285 = vrot.lane.b32.xlu0 %v16, 107
    %v1286 = vpop.permute.xlu0 %1285
    %1287 = vrot.lane.b32.xlu0 %v19, 107
    %v1288 = vpop.permute.xlu0 %1287
    %1289 = vrot.lane.b32.xlu0 %v20, 107
    %v1290 = vpop.permute.xlu0 %1289
    %vm1291 = vcmp.lt.s32.totalorder %v32, 107
    %v1292 = vsel %vm1291, %v1284, %v1288
    %v1293 = vsel %vm1291, %v1286, %v1290
    %v1294 = vsel %vm1291, %v1288, %v1284
    %v1295 = vsel %vm1291, %v1290, %v1286
    %1296 = vrot.lane.b32.xlu0 %v15, 86
    %v1297 = vpop.permute.xlu0 %1296
    %1298 = vrot.lane.b32.xlu0 %v16, 86
    %v1299 = vpop.permute.xlu0 %1298
    %1300 = vrot.lane.b32.xlu0 %v19, 86
    %v1301 = vpop.permute.xlu0 %1300
    %1302 = vrot.lane.b32.xlu0 %v20, 86
    %v1303 = vpop.permute.xlu0 %1302
    %vm1304 = vcmp.lt.s32.totalorder %v32, 86
    %v1305 = vsel %vm1304, %v1297, %v1301
    %v1306 = vsel %vm1304, %v1299, %v1303
    %v1307 = vsel %vm1304, %v1301, %v1297
    %v1308 = vsel %vm1304, %v1303, %v1299
    %v1309 = vadd.f32 %v1292, %v1305
    %v1310 = vadd.f32 %v1294, %v1307
    %v1311 = vadd.f32 %v1293, %v1306
    %v1312 = vadd.f32 %v1295, %v1308
    %s1313 = scalar_lea.vmem %s1, 168
    %v1314 = vld [vmem:[%s1313] sm:$0xf]
    %1316 = vset.pattern.permute.xlu0 0
    %1317 = vperm.xlu0 %1316, %v1314
    %v1318 = vpop.permute.xlu0 %1317
    %v1320 = vmul.f32 %v1318, %v1309
    %v1321 = vmul.f32 %v1318, %v1310
    %v1322 = vmul.f32 %v1318, %v1311
    %v1323 = vmul.f32 %v1318, %v1312
    %v1324 = vadd.f32 %v1264, %v1320
    %v1325 = vadd.f32 %v1265, %v1321
    %v1326 = vadd.f32 %v1266, %v1322
    %v1327 = vadd.f32 %v1267, %v1323
    %s1328 = scalar_lea.vmem %s1, 172
    %v1329 = vld [vmem:[%s1328] sm:$0xf]
    %1331 = vset.pattern.permute.xlu0 0
    %1332 = vperm.xlu0 %1331, %v1329
    %v1333 = vpop.permute.xlu0 %1332
    %v1335 = vmul.f32 %v1333, %v1309
    %v1336 = vmul.f32 %v1333, %v1310
    %v1337 = vmul.f32 %v1333, %v1311
    %v1338 = vmul.f32 %v1333, %v1312
    %v1339 = vadd.f32 %v1279, %v1335
    %v1340 = vadd.f32 %v1280, %v1336
    %v1341 = vadd.f32 %v1281, %v1337
    %v1342 = vadd.f32 %v1282, %v1338
    %1343 = vrot.lane.b32.xlu0 %v15, 106
    %v1344 = vpop.permute.xlu0 %1343
    %1345 = vrot.lane.b32.xlu0 %v16, 106
    %v1346 = vpop.permute.xlu0 %1345
    %1347 = vrot.lane.b32.xlu0 %v19, 106
    %v1348 = vpop.permute.xlu0 %1347
    %1349 = vrot.lane.b32.xlu0 %v20, 106
    %v1350 = vpop.permute.xlu0 %1349
    %vm1351 = vcmp.lt.s32.totalorder %v32, 106
    %v1352 = vsel %vm1351, %v1344, %v1348
    %v1353 = vsel %vm1351, %v1346, %v1350
    %v1354 = vsel %vm1351, %v1348, %v1344
    %v1355 = vsel %vm1351, %v1350, %v1346
    %1356 = vrot.lane.b32.xlu0 %v15, 87
    %v1357 = vpop.permute.xlu0 %1356
    %1358 = vrot.lane.b32.xlu0 %v16, 87
    %v1359 = vpop.permute.xlu0 %1358
    %1360 = vrot.lane.b32.xlu0 %v19, 87
    %v1361 = vpop.permute.xlu0 %1360
    %1362 = vrot.lane.b32.xlu0 %v20, 87
    %v1363 = vpop.permute.xlu0 %1362
    %vm1364 = vcmp.lt.s32.totalorder %v32, 87
    %v1365 = vsel %vm1364, %v1357, %v1361
    %v1366 = vsel %vm1364, %v1359, %v1363
    %v1367 = vsel %vm1364, %v1361, %v1357
    %v1368 = vsel %vm1364, %v1363, %v1359
    %v1369 = vadd.f32 %v1352, %v1365
    %v1370 = vadd.f32 %v1354, %v1367
    %v1371 = vadd.f32 %v1353, %v1366
    %v1372 = vadd.f32 %v1355, %v1368
    %s1373 = scalar_lea.vmem %s1, 176
    %v1374 = vld [vmem:[%s1373] sm:$0xf]
    %1376 = vset.pattern.permute.xlu0 0
    %1377 = vperm.xlu0 %1376, %v1374
    %v1378 = vpop.permute.xlu0 %1377
    %v1380 = vmul.f32 %v1378, %v1369
    %v1381 = vmul.f32 %v1378, %v1370
    %v1382 = vmul.f32 %v1378, %v1371
    %v1383 = vmul.f32 %v1378, %v1372
    %v1384 = vadd.f32 %v1324, %v1380
    %v1385 = vadd.f32 %v1325, %v1381
    %v1386 = vadd.f32 %v1326, %v1382
    %v1387 = vadd.f32 %v1327, %v1383
    %s1388 = scalar_lea.vmem %s1, 180
    %v1389 = vld [vmem:[%s1388] sm:$0xf]
    %1391 = vset.pattern.permute.xlu0 0
    %1392 = vperm.xlu0 %1391, %v1389
    %v1393 = vpop.permute.xlu0 %1392
    %v1395 = vmul.f32 %v1393, %v1369
    %v1396 = vmul.f32 %v1393, %v1370
    %v1397 = vmul.f32 %v1393, %v1371
    %v1398 = vmul.f32 %v1393, %v1372
    %v1399 = vadd.f32 %v1339, %v1395
    %v1400 = vadd.f32 %v1340, %v1396
    %v1401 = vadd.f32 %v1341, %v1397
    %v1402 = vadd.f32 %v1342, %v1398
    %1403 = vrot.lane.b32.xlu0 %v15, 105
    %v1404 = vpop.permute.xlu0 %1403
    %1405 = vrot.lane.b32.xlu0 %v16, 105
    %v1406 = vpop.permute.xlu0 %1405
    %1407 = vrot.lane.b32.xlu0 %v19, 105
    %v1408 = vpop.permute.xlu0 %1407
    %1409 = vrot.lane.b32.xlu0 %v20, 105
    %v1410 = vpop.permute.xlu0 %1409
    %vm1411 = vcmp.lt.s32.totalorder %v32, 105
    %v1412 = vsel %vm1411, %v1404, %v1408
    %v1413 = vsel %vm1411, %v1406, %v1410
    %v1414 = vsel %vm1411, %v1408, %v1404
    %v1415 = vsel %vm1411, %v1410, %v1406
    %1416 = vrot.lane.b32.xlu0 %v15, 88
    %v1417 = vpop.permute.xlu0 %1416
    %1418 = vrot.lane.b32.xlu0 %v16, 88
    %v1419 = vpop.permute.xlu0 %1418
    %1420 = vrot.lane.b32.xlu0 %v19, 88
    %v1421 = vpop.permute.xlu0 %1420
    %1422 = vrot.lane.b32.xlu0 %v20, 88
    %v1423 = vpop.permute.xlu0 %1422
    %vm1424 = vcmp.lt.s32.totalorder %v32, 88
    %v1425 = vsel %vm1424, %v1417, %v1421
    %v1426 = vsel %vm1424, %v1419, %v1423
    %v1427 = vsel %vm1424, %v1421, %v1417
    %v1428 = vsel %vm1424, %v1423, %v1419
    %v1429 = vadd.f32 %v1412, %v1425
    %v1430 = vadd.f32 %v1414, %v1427
    %v1431 = vadd.f32 %v1413, %v1426
    %v1432 = vadd.f32 %v1415, %v1428
    %s1433 = scalar_lea.vmem %s1, 184
    %v1434 = vld [vmem:[%s1433] sm:$0xf]
    %1436 = vset.pattern.permute.xlu0 0
    %1437 = vperm.xlu0 %1436, %v1434
    %v1438 = vpop.permute.xlu0 %1437
    %v1440 = vmul.f32 %v1438, %v1429
    %v1441 = vmul.f32 %v1438, %v1430
    %v1442 = vmul.f32 %v1438, %v1431
    %v1443 = vmul.f32 %v1438, %v1432
    %v1444 = vadd.f32 %v1384, %v1440
    %v1445 = vadd.f32 %v1385, %v1441
    %v1446 = vadd.f32 %v1386, %v1442
    %v1447 = vadd.f32 %v1387, %v1443
    %s1448 = scalar_lea.vmem %s1, 188
    %v1449 = vld [vmem:[%s1448] sm:$0xf]
    %1451 = vset.pattern.permute.xlu0 0
    %1452 = vperm.xlu0 %1451, %v1449
    %v1453 = vpop.permute.xlu0 %1452
    %v1455 = vmul.f32 %v1453, %v1429
    %v1456 = vmul.f32 %v1453, %v1430
    %v1457 = vmul.f32 %v1453, %v1431
    %v1458 = vmul.f32 %v1453, %v1432
    %v1459 = vadd.f32 %v1399, %v1455
    %v1460 = vadd.f32 %v1400, %v1456
    %v1461 = vadd.f32 %v1401, %v1457
    %v1462 = vadd.f32 %v1402, %v1458
    %1463 = vrot.lane.b32.xlu0 %v15, 104
    %v1464 = vpop.permute.xlu0 %1463
    %1465 = vrot.lane.b32.xlu0 %v16, 104
    %v1466 = vpop.permute.xlu0 %1465
    %1467 = vrot.lane.b32.xlu0 %v19, 104
    %v1468 = vpop.permute.xlu0 %1467
    %1469 = vrot.lane.b32.xlu0 %v20, 104
    %v1470 = vpop.permute.xlu0 %1469
    %vm1471 = vcmp.lt.s32.totalorder %v32, 104
    %v1472 = vsel %vm1471, %v1464, %v1468
    %v1473 = vsel %vm1471, %v1466, %v1470
    %v1474 = vsel %vm1471, %v1468, %v1464
    %v1475 = vsel %vm1471, %v1470, %v1466
    %1476 = vrot.lane.b32.xlu0 %v15, 89
    %v1477 = vpop.permute.xlu0 %1476
    %1478 = vrot.lane.b32.xlu0 %v16, 89
    %v1479 = vpop.permute.xlu0 %1478
    %1480 = vrot.lane.b32.xlu0 %v19, 89
    %v1481 = vpop.permute.xlu0 %1480
    %1482 = vrot.lane.b32.xlu0 %v20, 89
    %v1483 = vpop.permute.xlu0 %1482
    %vm1484 = vcmp.lt.s32.totalorder %v32, 89
    %v1485 = vsel %vm1484, %v1477, %v1481
    %v1486 = vsel %vm1484, %v1479, %v1483
    %v1487 = vsel %vm1484, %v1481, %v1477
    %v1488 = vsel %vm1484, %v1483, %v1479
    %v1489 = vadd.f32 %v1472, %v1485
    %v1490 = vadd.f32 %v1474, %v1487
    %v1491 = vadd.f32 %v1473, %v1486
    %v1492 = vadd.f32 %v1475, %v1488
    %s1493 = scalar_lea.vmem %s1, 192
    %v1494 = vld [vmem:[%s1493] sm:$0xf]
    %1496 = vset.pattern.permute.xlu0 0
    %1497 = vperm.xlu0 %1496, %v1494
    %v1498 = vpop.permute.xlu0 %1497
    %v1500 = vmul.f32 %v1498, %v1489
    %v1501 = vmul.f32 %v1498, %v1490
    %v1502 = vmul.f32 %v1498, %v1491
    %v1503 = vmul.f32 %v1498, %v1492
    %v1504 = vadd.f32 %v1444, %v1500
    %v1505 = vadd.f32 %v1445, %v1501
    %v1506 = vadd.f32 %v1446, %v1502
    %v1507 = vadd.f32 %v1447, %v1503
    %s1508 = scalar_lea.vmem %s1, 196
    %v1509 = vld [vmem:[%s1508] sm:$0xf]
    %1511 = vset.pattern.permute.xlu0 0
    %1512 = vperm.xlu0 %1511, %v1509
    %v1513 = vpop.permute.xlu0 %1512
    %v1515 = vmul.f32 %v1513, %v1489
    %v1516 = vmul.f32 %v1513, %v1490
    %v1517 = vmul.f32 %v1513, %v1491
    %v1518 = vmul.f32 %v1513, %v1492
    %v1519 = vadd.f32 %v1459, %v1515
    %v1520 = vadd.f32 %v1460, %v1516
    %v1521 = vadd.f32 %v1461, %v1517
    %v1522 = vadd.f32 %v1462, %v1518
    %1523 = vrot.lane.b32.xlu0 %v15, 103
    %v1524 = vpop.permute.xlu0 %1523
    %1525 = vrot.lane.b32.xlu0 %v16, 103
    %v1526 = vpop.permute.xlu0 %1525
    %1527 = vrot.lane.b32.xlu0 %v19, 103
    %v1528 = vpop.permute.xlu0 %1527
    %1529 = vrot.lane.b32.xlu0 %v20, 103
    %v1530 = vpop.permute.xlu0 %1529
    %vm1531 = vcmp.lt.s32.totalorder %v32, 103
    %v1532 = vsel %vm1531, %v1524, %v1528
    %v1533 = vsel %vm1531, %v1526, %v1530
    %v1534 = vsel %vm1531, %v1528, %v1524
    %v1535 = vsel %vm1531, %v1530, %v1526
    %1536 = vrot.lane.b32.xlu0 %v15, 90
    %v1537 = vpop.permute.xlu0 %1536
    %1538 = vrot.lane.b32.xlu0 %v16, 90
    %v1539 = vpop.permute.xlu0 %1538
    %1540 = vrot.lane.b32.xlu0 %v19, 90
    %v1541 = vpop.permute.xlu0 %1540
    %1542 = vrot.lane.b32.xlu0 %v20, 90
    %v1543 = vpop.permute.xlu0 %1542
    %vm1544 = vcmp.lt.s32.totalorder %v32, 90
    %v1545 = vsel %vm1544, %v1537, %v1541
    %v1546 = vsel %vm1544, %v1539, %v1543
    %v1547 = vsel %vm1544, %v1541, %v1537
    %v1548 = vsel %vm1544, %v1543, %v1539
    %v1549 = vadd.f32 %v1532, %v1545
    %v1550 = vadd.f32 %v1534, %v1547
    %v1551 = vadd.f32 %v1533, %v1546
    %v1552 = vadd.f32 %v1535, %v1548
    %s1553 = scalar_lea.vmem %s1, 200
    %v1554 = vld [vmem:[%s1553] sm:$0xf]
    %1556 = vset.pattern.permute.xlu0 0
    %1557 = vperm.xlu0 %1556, %v1554
    %v1558 = vpop.permute.xlu0 %1557
    %v1560 = vmul.f32 %v1558, %v1549
    %v1561 = vmul.f32 %v1558, %v1550
    %v1562 = vmul.f32 %v1558, %v1551
    %v1563 = vmul.f32 %v1558, %v1552
    %v1564 = vadd.f32 %v1504, %v1560
    %v1565 = vadd.f32 %v1505, %v1561
    %v1566 = vadd.f32 %v1506, %v1562
    %v1567 = vadd.f32 %v1507, %v1563
    %s1568 = scalar_lea.vmem %s1, 204
    %v1569 = vld [vmem:[%s1568] sm:$0xf]
    %1571 = vset.pattern.permute.xlu0 0
    %1572 = vperm.xlu0 %1571, %v1569
    %v1573 = vpop.permute.xlu0 %1572
    %v1575 = vmul.f32 %v1573, %v1549
    %v1576 = vmul.f32 %v1573, %v1550
    %v1577 = vmul.f32 %v1573, %v1551
    %v1578 = vmul.f32 %v1573, %v1552
    %v1579 = vadd.f32 %v1519, %v1575
    %v1580 = vadd.f32 %v1520, %v1576
    %v1581 = vadd.f32 %v1521, %v1577
    %v1582 = vadd.f32 %v1522, %v1578
    %1583 = vrot.lane.b32.xlu0 %v15, 102
    %v1584 = vpop.permute.xlu0 %1583
    %1585 = vrot.lane.b32.xlu0 %v16, 102
    %v1586 = vpop.permute.xlu0 %1585
    %1587 = vrot.lane.b32.xlu0 %v19, 102
    %v1588 = vpop.permute.xlu0 %1587
    %1589 = vrot.lane.b32.xlu0 %v20, 102
    %v1590 = vpop.permute.xlu0 %1589
    %vm1591 = vcmp.lt.s32.totalorder %v32, 102
    %v1592 = vsel %vm1591, %v1584, %v1588
    %v1593 = vsel %vm1591, %v1586, %v1590
    %v1594 = vsel %vm1591, %v1588, %v1584
    %v1595 = vsel %vm1591, %v1590, %v1586
    %1596 = vrot.lane.b32.xlu0 %v15, 91
    %v1597 = vpop.permute.xlu0 %1596
    %1598 = vrot.lane.b32.xlu0 %v16, 91
    %v1599 = vpop.permute.xlu0 %1598
    %1600 = vrot.lane.b32.xlu0 %v19, 91
    %v1601 = vpop.permute.xlu0 %1600
    %1602 = vrot.lane.b32.xlu0 %v20, 91
    %v1603 = vpop.permute.xlu0 %1602
    %vm1604 = vcmp.lt.s32.totalorder %v32, 91
    %v1605 = vsel %vm1604, %v1597, %v1601
    %v1606 = vsel %vm1604, %v1599, %v1603
    %v1607 = vsel %vm1604, %v1601, %v1597
    %v1608 = vsel %vm1604, %v1603, %v1599
    %v1609 = vadd.f32 %v1592, %v1605
    %v1610 = vadd.f32 %v1594, %v1607
    %v1611 = vadd.f32 %v1593, %v1606
    %v1612 = vadd.f32 %v1595, %v1608
    %s1613 = scalar_lea.vmem %s1, 208
    %v1614 = vld [vmem:[%s1613] sm:$0xf]
    %1616 = vset.pattern.permute.xlu0 0
    %1617 = vperm.xlu0 %1616, %v1614
    %v1618 = vpop.permute.xlu0 %1617
    %v1620 = vmul.f32 %v1618, %v1609
    %v1621 = vmul.f32 %v1618, %v1610
    %v1622 = vmul.f32 %v1618, %v1611
    %v1623 = vmul.f32 %v1618, %v1612
    %v1624 = vadd.f32 %v1564, %v1620
    %v1625 = vadd.f32 %v1565, %v1621
    %v1626 = vadd.f32 %v1566, %v1622
    %v1627 = vadd.f32 %v1567, %v1623
    %s1628 = scalar_lea.vmem %s1, 212
    %v1629 = vld [vmem:[%s1628] sm:$0xf]
    %1631 = vset.pattern.permute.xlu0 0
    %1632 = vperm.xlu0 %1631, %v1629
    %v1633 = vpop.permute.xlu0 %1632
    %v1635 = vmul.f32 %v1633, %v1609
    %v1636 = vmul.f32 %v1633, %v1610
    %v1637 = vmul.f32 %v1633, %v1611
    %v1638 = vmul.f32 %v1633, %v1612
    %v1639 = vadd.f32 %v1579, %v1635
    %v1640 = vadd.f32 %v1580, %v1636
    %v1641 = vadd.f32 %v1581, %v1637
    %v1642 = vadd.f32 %v1582, %v1638
    %1643 = vrot.lane.b32.xlu0 %v15, 101
    %v1644 = vpop.permute.xlu0 %1643
    %1645 = vrot.lane.b32.xlu0 %v16, 101
    %v1646 = vpop.permute.xlu0 %1645
    %1647 = vrot.lane.b32.xlu0 %v19, 101
    %v1648 = vpop.permute.xlu0 %1647
    %1649 = vrot.lane.b32.xlu0 %v20, 101
    %v1650 = vpop.permute.xlu0 %1649
    %vm1651 = vcmp.lt.s32.totalorder %v32, 101
    %v1652 = vsel %vm1651, %v1644, %v1648
    %v1653 = vsel %vm1651, %v1646, %v1650
    %v1654 = vsel %vm1651, %v1648, %v1644
    %v1655 = vsel %vm1651, %v1650, %v1646
    %1656 = vrot.lane.b32.xlu0 %v15, 92
    %v1657 = vpop.permute.xlu0 %1656
    %1658 = vrot.lane.b32.xlu0 %v16, 92
    %v1659 = vpop.permute.xlu0 %1658
    %1660 = vrot.lane.b32.xlu0 %v19, 92
    %v1661 = vpop.permute.xlu0 %1660
    %1662 = vrot.lane.b32.xlu0 %v20, 92
    %v1663 = vpop.permute.xlu0 %1662
    %vm1664 = vcmp.lt.s32.totalorder %v32, 92
    %v1665 = vsel %vm1664, %v1657, %v1661
    %v1666 = vsel %vm1664, %v1659, %v1663
    %v1667 = vsel %vm1664, %v1661, %v1657
    %v1668 = vsel %vm1664, %v1663, %v1659
    %v1669 = vadd.f32 %v1652, %v1665
    %v1670 = vadd.f32 %v1654, %v1667
    %v1671 = vadd.f32 %v1653, %v1666
    %v1672 = vadd.f32 %v1655, %v1668
    %s1673 = scalar_lea.vmem %s1, 216
    %v1674 = vld [vmem:[%s1673] sm:$0xf]
    %1676 = vset.pattern.permute.xlu0 0
    %1677 = vperm.xlu0 %1676, %v1674
    %v1678 = vpop.permute.xlu0 %1677
    %v1680 = vmul.f32 %v1678, %v1669
    %v1681 = vmul.f32 %v1678, %v1670
    %v1682 = vmul.f32 %v1678, %v1671
    %v1683 = vmul.f32 %v1678, %v1672
    %v1684 = vadd.f32 %v1624, %v1680
    %v1685 = vadd.f32 %v1625, %v1681
    %v1686 = vadd.f32 %v1626, %v1682
    %v1687 = vadd.f32 %v1627, %v1683
    %s1688 = scalar_lea.vmem %s1, 220
    %v1689 = vld [vmem:[%s1688] sm:$0xf]
    %1691 = vset.pattern.permute.xlu0 0
    %1692 = vperm.xlu0 %1691, %v1689
    %v1693 = vpop.permute.xlu0 %1692
    %v1695 = vmul.f32 %v1693, %v1669
    %v1696 = vmul.f32 %v1693, %v1670
    %v1697 = vmul.f32 %v1693, %v1671
    %v1698 = vmul.f32 %v1693, %v1672
    %v1699 = vadd.f32 %v1639, %v1695
    %v1700 = vadd.f32 %v1640, %v1696
    %v1701 = vadd.f32 %v1641, %v1697
    %v1702 = vadd.f32 %v1642, %v1698
    %1703 = vrot.lane.b32.xlu0 %v15, 100
    %v1704 = vpop.permute.xlu0 %1703
    %1705 = vrot.lane.b32.xlu0 %v16, 100
    %v1706 = vpop.permute.xlu0 %1705
    %1707 = vrot.lane.b32.xlu0 %v19, 100
    %v1708 = vpop.permute.xlu0 %1707
    %1709 = vrot.lane.b32.xlu0 %v20, 100
    %v1710 = vpop.permute.xlu0 %1709
    %vm1711 = vcmp.lt.s32.totalorder %v32, 100
    %v1712 = vsel %vm1711, %v1704, %v1708
    %v1713 = vsel %vm1711, %v1706, %v1710
    %v1714 = vsel %vm1711, %v1708, %v1704
    %v1715 = vsel %vm1711, %v1710, %v1706
    %1716 = vrot.lane.b32.xlu0 %v15, 93
    %v1717 = vpop.permute.xlu0 %1716
    %1718 = vrot.lane.b32.xlu0 %v16, 93
    %v1719 = vpop.permute.xlu0 %1718
    %1720 = vrot.lane.b32.xlu0 %v19, 93
    %v1721 = vpop.permute.xlu0 %1720
    %1722 = vrot.lane.b32.xlu0 %v20, 93
    %v1723 = vpop.permute.xlu0 %1722
    %vm1724 = vcmp.lt.s32.totalorder %v32, 93
    %v1725 = vsel %vm1724, %v1717, %v1721
    %v1726 = vsel %vm1724, %v1719, %v1723
    %v1727 = vsel %vm1724, %v1721, %v1717
    %v1728 = vsel %vm1724, %v1723, %v1719
    %v1729 = vadd.f32 %v1712, %v1725
    %v1730 = vadd.f32 %v1714, %v1727
    %v1731 = vadd.f32 %v1713, %v1726
    %v1732 = vadd.f32 %v1715, %v1728
    %s1733 = scalar_lea.vmem %s1, 224
    %v1734 = vld [vmem:[%s1733] sm:$0xf]
    %1736 = vset.pattern.permute.xlu0 0
    %1737 = vperm.xlu0 %1736, %v1734
    %v1738 = vpop.permute.xlu0 %1737
    %v1740 = vmul.f32 %v1738, %v1729
    %v1741 = vmul.f32 %v1738, %v1730
    %v1742 = vmul.f32 %v1738, %v1731
    %v1743 = vmul.f32 %v1738, %v1732
    %v1744 = vadd.f32 %v1684, %v1740
    %v1745 = vadd.f32 %v1685, %v1741
    %v1746 = vadd.f32 %v1686, %v1742
    %v1747 = vadd.f32 %v1687, %v1743
    %s1748 = scalar_lea.vmem %s1, 228
    %v1749 = vld [vmem:[%s1748] sm:$0xf]
    %1751 = vset.pattern.permute.xlu0 0
    %1752 = vperm.xlu0 %1751, %v1749
    %v1753 = vpop.permute.xlu0 %1752
    %v1755 = vmul.f32 %v1753, %v1729
    %v1756 = vmul.f32 %v1753, %v1730
    %v1757 = vmul.f32 %v1753, %v1731
    %v1758 = vmul.f32 %v1753, %v1732
    %v1759 = vadd.f32 %v1699, %v1755
    %v1760 = vadd.f32 %v1700, %v1756
    %v1761 = vadd.f32 %v1701, %v1757
    %v1762 = vadd.f32 %v1702, %v1758
    %1763 = vrot.lane.b32.xlu0 %v15, 99
    %v1764 = vpop.permute.xlu0 %1763
    %1765 = vrot.lane.b32.xlu0 %v16, 99
    %v1766 = vpop.permute.xlu0 %1765
    %1767 = vrot.lane.b32.xlu0 %v19, 99
    %v1768 = vpop.permute.xlu0 %1767
    %1769 = vrot.lane.b32.xlu0 %v20, 99
    %v1770 = vpop.permute.xlu0 %1769
    %vm1771 = vcmp.lt.s32.totalorder %v32, 99
    %v1772 = vsel %vm1771, %v1764, %v1768
    %v1773 = vsel %vm1771, %v1766, %v1770
    %v1774 = vsel %vm1771, %v1768, %v1764
    %v1775 = vsel %vm1771, %v1770, %v1766
    %1776 = vrot.lane.b32.xlu0 %v15, 94
    %v1777 = vpop.permute.xlu0 %1776
    %1778 = vrot.lane.b32.xlu0 %v16, 94
    %v1779 = vpop.permute.xlu0 %1778
    %1780 = vrot.lane.b32.xlu0 %v19, 94
    %v1781 = vpop.permute.xlu0 %1780
    %1782 = vrot.lane.b32.xlu0 %v20, 94
    %v1783 = vpop.permute.xlu0 %1782
    %vm1784 = vcmp.lt.s32.totalorder %v32, 94
    %v1785 = vsel %vm1784, %v1777, %v1781
    %v1786 = vsel %vm1784, %v1779, %v1783
    %v1787 = vsel %vm1784, %v1781, %v1777
    %v1788 = vsel %vm1784, %v1783, %v1779
    %v1789 = vadd.f32 %v1772, %v1785
    %v1790 = vadd.f32 %v1774, %v1787
    %v1791 = vadd.f32 %v1773, %v1786
    %v1792 = vadd.f32 %v1775, %v1788
    %s1793 = scalar_lea.vmem %s1, 232
    %v1794 = vld [vmem:[%s1793] sm:$0xf]
    %1796 = vset.pattern.permute.xlu0 0
    %1797 = vperm.xlu0 %1796, %v1794
    %v1798 = vpop.permute.xlu0 %1797
    %v1800 = vmul.f32 %v1798, %v1789
    %v1801 = vmul.f32 %v1798, %v1790
    %v1802 = vmul.f32 %v1798, %v1791
    %v1803 = vmul.f32 %v1798, %v1792
    %v1804 = vadd.f32 %v1744, %v1800
    %v1805 = vadd.f32 %v1745, %v1801
    %v1806 = vadd.f32 %v1746, %v1802
    %v1807 = vadd.f32 %v1747, %v1803
    %s1808 = scalar_lea.vmem %s1, 236
    %v1809 = vld [vmem:[%s1808] sm:$0xf]
    %1811 = vset.pattern.permute.xlu0 0
    %1812 = vperm.xlu0 %1811, %v1809
    %v1813 = vpop.permute.xlu0 %1812
    %v1815 = vmul.f32 %v1813, %v1789
    %v1816 = vmul.f32 %v1813, %v1790
    %v1817 = vmul.f32 %v1813, %v1791
    %v1818 = vmul.f32 %v1813, %v1792
    %v1819 = vadd.f32 %v1759, %v1815
    %v1820 = vadd.f32 %v1760, %v1816
    %v1821 = vadd.f32 %v1761, %v1817
    %v1822 = vadd.f32 %v1762, %v1818
    %1823 = vrot.lane.b32.xlu0 %v15, 98
    %v1824 = vpop.permute.xlu0 %1823
    %1825 = vrot.lane.b32.xlu0 %v16, 98
    %v1826 = vpop.permute.xlu0 %1825
    %1827 = vrot.lane.b32.xlu0 %v19, 98
    %v1828 = vpop.permute.xlu0 %1827
    %1829 = vrot.lane.b32.xlu0 %v20, 98
    %v1830 = vpop.permute.xlu0 %1829
    %vm1831 = vcmp.lt.s32.totalorder %v32, 98
    %v1832 = vsel %vm1831, %v1824, %v1828
    %v1833 = vsel %vm1831, %v1826, %v1830
    %v1834 = vsel %vm1831, %v1828, %v1824
    %v1835 = vsel %vm1831, %v1830, %v1826
    %1836 = vrot.lane.b32.xlu0 %v15, 95
    %v1837 = vpop.permute.xlu0 %1836
    %1838 = vrot.lane.b32.xlu0 %v16, 95
    %v1839 = vpop.permute.xlu0 %1838
    %1840 = vrot.lane.b32.xlu0 %v19, 95
    %v1841 = vpop.permute.xlu0 %1840
    %1842 = vrot.lane.b32.xlu0 %v20, 95
    %v1843 = vpop.permute.xlu0 %1842
    %vm1844 = vcmp.lt.s32.totalorder %v32, 95
    %v1845 = vsel %vm1844, %v1837, %v1841
    %v1846 = vsel %vm1844, %v1839, %v1843
    %v1847 = vsel %vm1844, %v1841, %v1837
    %v1848 = vsel %vm1844, %v1843, %v1839
    %v1849 = vadd.f32 %v1832, %v1845
    %v1850 = vadd.f32 %v1834, %v1847
    %v1851 = vadd.f32 %v1833, %v1846
    %v1852 = vadd.f32 %v1835, %v1848
    %s1853 = scalar_lea.vmem %s1, 240
    %v1854 = vld [vmem:[%s1853] sm:$0xf]
    %1856 = vset.pattern.permute.xlu0 0
    %1857 = vperm.xlu0 %1856, %v1854
    %v1858 = vpop.permute.xlu0 %1857
    %v1860 = vmul.f32 %v1858, %v1849
    %v1861 = vmul.f32 %v1858, %v1850
    %v1862 = vmul.f32 %v1858, %v1851
    %v1863 = vmul.f32 %v1858, %v1852
    %v1864 = vadd.f32 %v1804, %v1860
    %v1865 = vadd.f32 %v1805, %v1861
    %v1866 = vadd.f32 %v1806, %v1862
    %v1867 = vadd.f32 %v1807, %v1863
    %s1868 = scalar_lea.vmem %s1, 244
    %v1869 = vld [vmem:[%s1868] sm:$0xf]
    %1871 = vset.pattern.permute.xlu0 0
    %1872 = vperm.xlu0 %1871, %v1869
    %v1873 = vpop.permute.xlu0 %1872
    %v1875 = vmul.f32 %v1873, %v1849
    %v1876 = vmul.f32 %v1873, %v1850
    %v1877 = vmul.f32 %v1873, %v1851
    %v1878 = vmul.f32 %v1873, %v1852
    %v1879 = vadd.f32 %v1819, %v1875
    %v1880 = vadd.f32 %v1820, %v1876
    %v1881 = vadd.f32 %v1821, %v1877
    %v1882 = vadd.f32 %v1822, %v1878
    %1883 = vrot.lane.b32.xlu0 %v15, 97
    %v1884 = vpop.permute.xlu0 %1883
    %1885 = vrot.lane.b32.xlu0 %v16, 97
    %v1886 = vpop.permute.xlu0 %1885
    %1887 = vrot.lane.b32.xlu0 %v19, 97
    %v1888 = vpop.permute.xlu0 %1887
    %1889 = vrot.lane.b32.xlu0 %v20, 97
    %v1890 = vpop.permute.xlu0 %1889
    %vm1891 = vcmp.lt.s32.totalorder %v32, 97
    %v1892 = vsel %vm1891, %v1884, %v1888
    %v1893 = vsel %vm1891, %v1886, %v1890
    %v1894 = vsel %vm1891, %v1888, %v1884
    %v1895 = vsel %vm1891, %v1890, %v1886
    %1896 = vrot.lane.b32.xlu0 %v15, 96
    %v1897 = vpop.permute.xlu0 %1896
    %1898 = vrot.lane.b32.xlu0 %v16, 96
    %v1899 = vpop.permute.xlu0 %1898
    %1900 = vrot.lane.b32.xlu0 %v19, 96
    %v1901 = vpop.permute.xlu0 %1900
    %1902 = vrot.lane.b32.xlu0 %v20, 96
    %v1903 = vpop.permute.xlu0 %1902
    %vm1904 = vcmp.lt.s32.totalorder %v32, 96
    %v1905 = vsel %vm1904, %v1897, %v1901
    %v1906 = vsel %vm1904, %v1899, %v1903
    %v1907 = vsel %vm1904, %v1901, %v1897
    %v1908 = vsel %vm1904, %v1903, %v1899
    %v1909 = vadd.f32 %v1892, %v1905
    %v1910 = vadd.f32 %v1894, %v1907
    %v1911 = vadd.f32 %v1893, %v1906
    %v1912 = vadd.f32 %v1895, %v1908
    %s1913 = scalar_lea.vmem %s1, 248
    %v1914 = vld [vmem:[%s1913] sm:$0xf]
    %1916 = vset.pattern.permute.xlu0 0
    %1917 = vperm.xlu0 %1916, %v1914
    %v1918 = vpop.permute.xlu0 %1917
    %v1920 = vmul.f32 %v1918, %v1909
    %v1921 = vmul.f32 %v1918, %v1910
    %v1922 = vmul.f32 %v1918, %v1911
    %v1923 = vmul.f32 %v1918, %v1912
    %v1924 = vadd.f32 %v1864, %v1920
    %v1925 = vadd.f32 %v1865, %v1921
    %v1926 = vadd.f32 %v1866, %v1922
    %v1927 = vadd.f32 %v1867, %v1923
    %s1928 = scalar_lea.vmem %s1, 252
    %v1929 = vld [vmem:[%s1928] sm:$0xf]
    %1931 = vset.pattern.permute.xlu0 0
    %1932 = vperm.xlu0 %1931, %v1929
    %v1933 = vpop.permute.xlu0 %1932
    %v1935 = vmul.f32 %v1933, %v1909
    %v1936 = vmul.f32 %v1933, %v1910
    %v1937 = vmul.f32 %v1933, %v1911
    %v1938 = vmul.f32 %v1933, %v1912
    %v1939 = vadd.f32 %v1879, %v1935
    %v1940 = vadd.f32 %v1880, %v1936
    %v1941 = vadd.f32 %v1881, %v1937
    %v1942 = vadd.f32 %v1882, %v1938
    %v1943 = vadd.s32 %v32, 128
    %vm1944 = vcmp.lt.s32.totalorder %v32, 193
    %vm1945 = vcmp.lt.s32.totalorder %v1943, 193
    %v1946 = vsel %vm1944, 1, 0
    %v1947 = vsel %vm1945, 1, 0
    %vm1948 = vcmp.eq.s32.totalorder %v1946, 1
    %vm1949 = vcmp.eq.s32.totalorder %v1947, 1
    %v1950 = vsel %vm1948, %v1924, 0.0
    %v1951 = vsel %vm1949, %v1925, 0.0
    %v1952 = vsel %vm1948, %v1926, 0.0
    %v1953 = vsel %vm1949, %v1927, 0.0
    %vm1954 = vcmask 1043456
    %v1955 = vsel %vm1954, %v1950, 0.0
    %v1956 = vsel %vm1954, %v1951, 0.0
    %v1957 = vadd.f32 %v1955, %v1956
    %1958 = vadd.xlane.f32.xlu0 %v1957
    %v1959 = vpop.xlane.xlu0 %1958
    %v1960 = vsel %vm1954, %v1952, 0.0
    %v1961 = vsel %vm1954, %v1953, 0.0
    %v1962 = vadd.f32 %v1960, %v1961
    %1963 = vadd.xlane.f32.xlu0 %v1962
    %v1964 = vpop.xlane.xlu0 %1963
    %v1965 = vsel %vm1954, %v1959, 0.0
    %v1966 = vsel %vm1954, %v1964, 0.0
    %v1967 = vadd.f32 %v1965, %v1966
    %v1968 = vmul.f32 %v1967, 0.0025906735
    %v1969 = vsub.f32 %v1924, %v1968
    %v1970 = vsub.f32 %v1925, %v1968
    %v1971 = vsub.f32 %v1926, %v1968
    %v1972 = vsub.f32 %v1927, %v1968
    %v1973 = vmul.f32 %v1969, %v1969
    %v1974 = vmul.f32 %v1970, %v1970
    %v1975 = vmul.f32 %v1971, %v1971
    %v1976 = vmul.f32 %v1972, %v1972
    %v1977 = vsel %vm1948, %v1973, 0.0
    %v1978 = vsel %vm1949, %v1974, 0.0
    %v1979 = vsel %vm1948, %v1975, 0.0
    %v1980 = vsel %vm1949, %v1976, 0.0
    %v1981 = vsel %vm1954, %v1977, 0.0
    %v1982 = vsel %vm1954, %v1978, 0.0
    %v1983 = vadd.f32 %v1981, %v1982
    %1984 = vadd.xlane.f32.xlu0 %v1983
    %v1985 = vpop.xlane.xlu0 %1984
    %v1986 = vsel %vm1954, %v1979, 0.0
    %v1987 = vsel %vm1954, %v1980, 0.0
    %v1988 = vadd.f32 %v1986, %v1987
    %1989 = vadd.xlane.f32.xlu0 %v1988
    %v1990 = vpop.xlane.xlu0 %1989
    %v1991 = vsel %vm1954, %v1985, 0.0
    %v1992 = vsel %vm1954, %v1990, 0.0
    %v1993 = vadd.f32 %v1991, %v1992
    %v1994 = vmul.f32 %v1993, 0.0025906735
    %v1995 = vand.u32 2147483647, %v1969
    %v1996 = vand.u32 2147483647, %v1970
    %v1997 = vand.u32 2147483647, %v1971
    %v1998 = vand.u32 2147483647, %v1972
    %v1999 = vadd.f32 %v1994, 1e-05
    %v2000 = vrsqrt.pop %v1999
    %v2001 = vmul.f32 %v1995, %v2000
    %v2002 = vmul.f32 %v1996, %v2000
    %v2003 = vmul.f32 %v1997, %v2000
    %v2004 = vmul.f32 %v1998, %v2000
    %2005 = vrot.lane.b32.xlu0 %v2001, 127
    %v2006 = vpop.permute.xlu0 %2005
    %2007 = vrot.lane.b32.xlu0 %v2003, 127
    %v2008 = vpop.permute.xlu0 %2007
    %2009 = vrot.lane.b32.xlu0 %v2002, 127
    %v2010 = vpop.permute.xlu0 %2009
    %2011 = vrot.lane.b32.xlu0 %v2004, 127
    %v2012 = vpop.permute.xlu0 %2011
    %v2013 = vsel %vm91, %v2006, %v2010
    %v2014 = vsel %vm91, %v2008, %v2012
    %v2015 = vsel %vm91, %v2010, %v2006
    %v2016 = vsel %vm91, %v2012, %v2008
    %v2017 = vadd.f32 %v2001, %v2013
    %v2018 = vadd.f32 %v2002, %v2015
    %v2019 = vadd.f32 %v2003, %v2014
    %v2020 = vadd.f32 %v2004, %v2016
    %2021 = vrot.lane.b32.xlu0 %v2017, 126
    %v2022 = vpop.permute.xlu0 %2021
    %2023 = vrot.lane.b32.xlu0 %v2019, 126
    %v2024 = vpop.permute.xlu0 %2023
    %2025 = vrot.lane.b32.xlu0 %v2018, 126
    %v2026 = vpop.permute.xlu0 %2025
    %2027 = vrot.lane.b32.xlu0 %v2020, 126
    %v2028 = vpop.permute.xlu0 %2027
    %v2029 = vsel %vm151, %v2022, %v2026
    %v2030 = vsel %vm151, %v2024, %v2028
    %v2031 = vsel %vm151, %v2026, %v2022
    %v2032 = vsel %vm151, %v2028, %v2024
    %v2033 = vadd.f32 %v2017, %v2029
    %v2034 = vadd.f32 %v2018, %v2031
    %v2035 = vadd.f32 %v2019, %v2030
    %v2036 = vadd.f32 %v2020, %v2032
    %2037 = vrot.lane.b32.xlu0 %v2033, 124
    %v2038 = vpop.permute.xlu0 %2037
    %2039 = vrot.lane.b32.xlu0 %v2035, 124
    %v2040 = vpop.permute.xlu0 %2039
    %2041 = vrot.lane.b32.xlu0 %v2034, 124
    %v2042 = vpop.permute.xlu0 %2041
    %2043 = vrot.lane.b32.xlu0 %v2036, 124
    %v2044 = vpop.permute.xlu0 %2043
    %v2045 = vsel %vm271, %v2038, %v2042
    %v2046 = vsel %vm271, %v2040, %v2044
    %v2047 = vsel %vm271, %v2042, %v2038
    %v2048 = vsel %vm271, %v2044, %v2040
    %v2049 = vadd.f32 %v2033, %v2045
    %v2050 = vadd.f32 %v2034, %v2047
    %v2051 = vadd.f32 %v2035, %v2046
    %v2052 = vadd.f32 %v2036, %v2048
    %2053 = vrot.lane.b32.xlu0 %v2049, 120
    %v2054 = vpop.permute.xlu0 %2053
    %2055 = vrot.lane.b32.xlu0 %v2051, 120
    %v2056 = vpop.permute.xlu0 %2055
    %2057 = vrot.lane.b32.xlu0 %v2050, 120
    %v2058 = vpop.permute.xlu0 %2057
    %2059 = vrot.lane.b32.xlu0 %v2052, 120
    %v2060 = vpop.permute.xlu0 %2059
    %v2061 = vsel %vm511, %v2054, %v2058
    %v2062 = vsel %vm511, %v2056, %v2060
    %v2063 = vsel %vm511, %v2058, %v2054
    %v2064 = vsel %vm511, %v2060, %v2056
    %v2065 = vadd.f32 %v2049, %v2061
    %v2066 = vadd.f32 %v2050, %v2063
    %v2067 = vadd.f32 %v2051, %v2062
    %v2068 = vadd.f32 %v2052, %v2064
    %2069 = vrot.lane.b32.xlu0 %v2065, 112
    %v2070 = vpop.permute.xlu0 %2069
    %2071 = vrot.lane.b32.xlu0 %v2067, 112
    %v2072 = vpop.permute.xlu0 %2071
    %2073 = vrot.lane.b32.xlu0 %v2066, 112
    %v2074 = vpop.permute.xlu0 %2073
    %2075 = vrot.lane.b32.xlu0 %v2068, 112
    %v2076 = vpop.permute.xlu0 %2075
    %v2077 = vsel %vm991, %v2070, %v2074
    %v2078 = vsel %vm991, %v2072, %v2076
    %v2079 = vsel %vm991, %v2074, %v2070
    %v2080 = vsel %vm991, %v2076, %v2072
    %v2081 = vadd.f32 %v2065, %v2077
    %v2082 = vadd.f32 %v2066, %v2079
    %v2083 = vadd.f32 %v2067, %v2078
    %v2084 = vadd.f32 %v2068, %v2080
    %2085 = vrot.lane.b32.xlu0 %v2081, 96
    %v2086 = vpop.permute.xlu0 %2085
    %2087 = vrot.lane.b32.xlu0 %v2083, 96
    %v2088 = vpop.permute.xlu0 %2087
    %2089 = vrot.lane.b32.xlu0 %v2082, 96
    %v2090 = vpop.permute.xlu0 %2089
    %2091 = vrot.lane.b32.xlu0 %v2084, 96
    %v2092 = vpop.permute.xlu0 %2091
    %v2093 = vsel %vm1904, %v2086, %v2090
    %v2094 = vsel %vm1904, %v2088, %v2092
    %v2095 = vsel %vm1904, %v2090, %v2086
    %v2096 = vsel %vm1904, %v2092, %v2088
    %v2097 = vadd.f32 %v2081, %v2093
    %v2098 = vadd.f32 %v2082, %v2095
    %v2099 = vadd.f32 %v2083, %v2094
    %v2100 = vadd.f32 %v2084, %v2096
    %v2101 = vmul.f32 %v2097, 0.015625
    %v2102 = vmul.f32 %v2098, 0.015625
    %v2103 = vmul.f32 %v2099, 0.015625
    %v2104 = vmul.f32 %v2100, 0.015625
    %v2105 = vld [vmem:[%s2] sm:$0xf]
    %2107 = vset.pattern.permute.xlu0 0
    %2108 = vperm.xlu0 %2107, %v2105
    %v2109 = vpop.permute.xlu0 %2108
    %v2111 = vadd.f32 %v2101, %v2109
    %v2112 = vadd.f32 %v2102, %v2109
    %v2113 = vadd.f32 %v2103, %v2109
    %v2114 = vadd.f32 %v2104, %v2109
    %v2119 = vcombine.low %v2111, %v2112
    %v2120 = vcombine.low %v2113, %v2114
    %2123 = vst [vmem:[#allocation2] sm:$0xff] %v2119
    %2124 = vst [vmem:[#allocation2 + $0x10] sm:$0xff] %v2120
    %v2125 = vsel %vm1948, %v1939, 0.0
    %v2126 = vsel %vm1949, %v1940, 0.0
    %v2127 = vsel %vm1948, %v1941, 0.0
    %v2128 = vsel %vm1949, %v1942, 0.0
    %v2129 = vsel %vm1954, %v2125, 0.0
    %v2130 = vsel %vm1954, %v2126, 0.0
    %v2131 = vadd.f32 %v2129, %v2130
    %2132 = vadd.xlane.f32.xlu0 %v2131
    %v2133 = vpop.xlane.xlu0 %2132
    %v2134 = vsel %vm1954, %v2127, 0.0
    %v2135 = vsel %vm1954, %v2128, 0.0
    %v2136 = vadd.f32 %v2134, %v2135
    %2137 = vadd.xlane.f32.xlu0 %v2136
    %v2138 = vpop.xlane.xlu0 %2137
    %v2139 = vsel %vm1954, %v2133, 0.0
    %v2140 = vsel %vm1954, %v2138, 0.0
    %v2141 = vadd.f32 %v2139, %v2140
    %v2142 = vmul.f32 %v2141, 0.0025906735
    %v2143 = vsub.f32 %v1939, %v2142
    %v2144 = vsub.f32 %v1940, %v2142
    %v2145 = vsub.f32 %v1941, %v2142
    %v2146 = vsub.f32 %v1942, %v2142
    %v2147 = vmul.f32 %v2143, %v2143
    %v2148 = vmul.f32 %v2144, %v2144
    %v2149 = vmul.f32 %v2145, %v2145
    %v2150 = vmul.f32 %v2146, %v2146
    %v2151 = vsel %vm1948, %v2147, 0.0
    %v2152 = vsel %vm1949, %v2148, 0.0
    %v2153 = vsel %vm1948, %v2149, 0.0
    %v2154 = vsel %vm1949, %v2150, 0.0
    %v2155 = vsel %vm1954, %v2151, 0.0
    %v2156 = vsel %vm1954, %v2152, 0.0
    %v2157 = vadd.f32 %v2155, %v2156
    %2158 = vadd.xlane.f32.xlu0 %v2157
    %v2159 = vpop.xlane.xlu0 %2158
    %v2160 = vsel %vm1954, %v2153, 0.0
    %v2161 = vsel %vm1954, %v2154, 0.0
    %v2162 = vadd.f32 %v2160, %v2161
    %2163 = vadd.xlane.f32.xlu0 %v2162
    %v2164 = vpop.xlane.xlu0 %2163
    %v2165 = vsel %vm1954, %v2159, 0.0
    %v2166 = vsel %vm1954, %v2164, 0.0
    %v2167 = vadd.f32 %v2165, %v2166
    %v2168 = vmul.f32 %v2167, 0.0025906735
    %v2169 = vand.u32 2147483647, %v2143
    %v2170 = vand.u32 2147483647, %v2144
    %v2171 = vand.u32 2147483647, %v2145
    %v2172 = vand.u32 2147483647, %v2146
    %v2173 = vadd.f32 %v2168, 1e-05
    %v2174 = vrsqrt.pop %v2173
    %v2175 = vmul.f32 %v2169, %v2174
    %v2176 = vmul.f32 %v2170, %v2174
    %v2177 = vmul.f32 %v2171, %v2174
    %v2178 = vmul.f32 %v2172, %v2174
    %2179 = vrot.lane.b32.xlu0 %v2175, 127
    %v2180 = vpop.permute.xlu0 %2179
    %2181 = vrot.lane.b32.xlu0 %v2177, 127
    %v2182 = vpop.permute.xlu0 %2181
    %2183 = vrot.lane.b32.xlu0 %v2176, 127
    %v2184 = vpop.permute.xlu0 %2183
    %2185 = vrot.lane.b32.xlu0 %v2178, 127
    %v2186 = vpop.permute.xlu0 %2185
    %v2187 = vsel %vm91, %v2180, %v2184
    %v2188 = vsel %vm91, %v2182, %v2186
    %v2189 = vsel %vm91, %v2184, %v2180
    %v2190 = vsel %vm91, %v2186, %v2182
    %v2191 = vadd.f32 %v2175, %v2187
    %v2192 = vadd.f32 %v2176, %v2189
    %v2193 = vadd.f32 %v2177, %v2188
    %v2194 = vadd.f32 %v2178, %v2190
    %2195 = vrot.lane.b32.xlu0 %v2191, 126
    %v2196 = vpop.permute.xlu0 %2195
    %2197 = vrot.lane.b32.xlu0 %v2193, 126
    %v2198 = vpop.permute.xlu0 %2197
    %2199 = vrot.lane.b32.xlu0 %v2192, 126
    %v2200 = vpop.permute.xlu0 %2199
    %2201 = vrot.lane.b32.xlu0 %v2194, 126
    %v2202 = vpop.permute.xlu0 %2201
    %v2203 = vsel %vm151, %v2196, %v2200
    %v2204 = vsel %vm151, %v2198, %v2202
    %v2205 = vsel %vm151, %v2200, %v2196
    %v2206 = vsel %vm151, %v2202, %v2198
    %v2207 = vadd.f32 %v2191, %v2203
    %v2208 = vadd.f32 %v2192, %v2205
    %v2209 = vadd.f32 %v2193, %v2204
    %v2210 = vadd.f32 %v2194, %v2206
    %2211 = vrot.lane.b32.xlu0 %v2207, 124
    %v2212 = vpop.permute.xlu0 %2211
    %2213 = vrot.lane.b32.xlu0 %v2209, 124
    %v2214 = vpop.permute.xlu0 %2213
    %2215 = vrot.lane.b32.xlu0 %v2208, 124
    %v2216 = vpop.permute.xlu0 %2215
    %2217 = vrot.lane.b32.xlu0 %v2210, 124
    %v2218 = vpop.permute.xlu0 %2217
    %v2219 = vsel %vm271, %v2212, %v2216
    %v2220 = vsel %vm271, %v2214, %v2218
    %v2221 = vsel %vm271, %v2216, %v2212
    %v2222 = vsel %vm271, %v2218, %v2214
    %v2223 = vadd.f32 %v2207, %v2219
    %v2224 = vadd.f32 %v2208, %v2221
    %v2225 = vadd.f32 %v2209, %v2220
    %v2226 = vadd.f32 %v2210, %v2222
    %2227 = vrot.lane.b32.xlu0 %v2223, 120
    %v2228 = vpop.permute.xlu0 %2227
    %2229 = vrot.lane.b32.xlu0 %v2225, 120
    %v2230 = vpop.permute.xlu0 %2229
    %2231 = vrot.lane.b32.xlu0 %v2224, 120
    %v2232 = vpop.permute.xlu0 %2231
    %2233 = vrot.lane.b32.xlu0 %v2226, 120
    %v2234 = vpop.permute.xlu0 %2233
    %v2235 = vsel %vm511, %v2228, %v2232
    %v2236 = vsel %vm511, %v2230, %v2234
    %v2237 = vsel %vm511, %v2232, %v2228
    %v2238 = vsel %vm511, %v2234, %v2230
    %v2239 = vadd.f32 %v2223, %v2235
    %v2240 = vadd.f32 %v2224, %v2237
    %v2241 = vadd.f32 %v2225, %v2236
    %v2242 = vadd.f32 %v2226, %v2238
    %2243 = vrot.lane.b32.xlu0 %v2239, 112
    %v2244 = vpop.permute.xlu0 %2243
    %2245 = vrot.lane.b32.xlu0 %v2241, 112
    %v2246 = vpop.permute.xlu0 %2245
    %2247 = vrot.lane.b32.xlu0 %v2240, 112
    %v2248 = vpop.permute.xlu0 %2247
    %2249 = vrot.lane.b32.xlu0 %v2242, 112
    %v2250 = vpop.permute.xlu0 %2249
    %v2251 = vsel %vm991, %v2244, %v2248
    %v2252 = vsel %vm991, %v2246, %v2250
    %v2253 = vsel %vm991, %v2248, %v2244
    %v2254 = vsel %vm991, %v2250, %v2246
    %v2255 = vadd.f32 %v2239, %v2251
    %v2256 = vadd.f32 %v2240, %v2253
    %v2257 = vadd.f32 %v2241, %v2252
    %v2258 = vadd.f32 %v2242, %v2254
    %2259 = vrot.lane.b32.xlu0 %v2255, 96
    %v2260 = vpop.permute.xlu0 %2259
    %2261 = vrot.lane.b32.xlu0 %v2257, 96
    %v2262 = vpop.permute.xlu0 %2261
    %2263 = vrot.lane.b32.xlu0 %v2256, 96
    %v2264 = vpop.permute.xlu0 %2263
    %2265 = vrot.lane.b32.xlu0 %v2258, 96
    %v2266 = vpop.permute.xlu0 %2265
    %v2267 = vsel %vm1904, %v2260, %v2264
    %v2268 = vsel %vm1904, %v2262, %v2266
    %v2269 = vsel %vm1904, %v2264, %v2260
    %v2270 = vsel %vm1904, %v2266, %v2262
    %v2271 = vadd.f32 %v2255, %v2267
    %v2272 = vadd.f32 %v2256, %v2269
    %v2273 = vadd.f32 %v2257, %v2268
    %v2274 = vadd.f32 %v2258, %v2270
    %v2275 = vmul.f32 %v2271, 0.015625
    %v2276 = vmul.f32 %v2272, 0.015625
    %v2277 = vmul.f32 %v2273, 0.015625
    %v2278 = vmul.f32 %v2274, 0.015625
    %s2279 = scalar_lea.vmem %s2, 4
    %v2280 = vld [vmem:[%s2279] sm:$0xf]
    %2282 = vset.pattern.permute.xlu0 0
    %2283 = vperm.xlu0 %2282, %v2280
    %v2284 = vpop.permute.xlu0 %2283
    %v2286 = vadd.f32 %v2275, %v2284
    %v2287 = vadd.f32 %v2276, %v2284
    %v2288 = vadd.f32 %v2277, %v2284
    %v2289 = vadd.f32 %v2278, %v2284
    %v2294 = vcombine.low %v2286, %v2287
    %v2295 = vcombine.low %v2288, %v2289
    %2298 = vst [vmem:[#allocation2 + $0x8] sm:$0xff] %v2294
    %2299 = vst [vmem:[#allocation2 + $0x18] sm:$0xff] %v2295
    // Predicated region
    $region14: #{tpu_custom_call.1} parent=1 // pred_check
      _
    $region15: #{tpu_custom_call.1} parent=1 // pred_check_branch
      %2301 = sbr.rel (0) target = $region17
    $region16: #{tpu_custom_call.1} parent=1 // pred_region
      %s2303 = ssub.s32 512, 512
      %2304 = vsyncadd [#allocation3], %s2303
      %s2305 = sshll.u32 [#allocation2], 4
      %s2306 = int_to_ptr.vmem [resolvable:$true] %s2305
      %2311 = dma.vmem_to_hbm [thread:$0]  %s2306, 512, %s3, [#allocation3], 256, 256, 16
    $region17: #{tpu_custom_call.1} parent=1 // pred_fallthru
      _
    // Predicated region
    $region18: #{tpu_custom_call.1} parent=1 // pred_check
      _
    $region19: #{tpu_custom_call.1} parent=1 // pred_check_branch
      %2313 = sbr.rel (0) target = $region21
    $region20: #{tpu_custom_call.1} parent=1 // pred_region
      %2314 = dma.done [#allocation3], 512
    $region21: #{tpu_custom_call.1} parent=1 // pred_fallthru
      _
    %2315 = vsyncpa [#allocation3], 1

</llo_original>
